<compile_context>
chip_gen: v7x
topology: tpu7x:2x2x1
jax: 0.10.0
libtpu: 0.0.40
codegen_flags: <defaults>
</compile_context>

<pallas_src>
import functools

import numpy as np

import jax
import jax.numpy as jnp
from jax.experimental import pallas as pl
from jax.experimental.pallas import tpu as pltpu

SELU_ALPHA = 1.6732632423543772
SELU_SCALE = 1.0507009873554805


# --------------------------------------------------------------------------
# Fused Pallas kernel (whole forward for one batch element per grid step)
# --------------------------------------------------------------------------

def _vqvae_kernel(
    x_ref,                       # (1, Cimg, HW)  f32
    masks_ref,                   # (9, HW)        f32 tap-validity masks
    egm_ref, dgm_ref,            # (C, C)         f32 same-group indicators
    ew1_ref, eb1_ref,            # enc conv_in : (Cd, 9*Cimg) bf16, (Cd, 1) f32
    eg_ref, ebt_ref,             # enc GN gamma/beta : (Cm, 1) f32
    ew2_ref, eb2_ref,            # enc conv_out: (Z, 9*Cm) bf16, (Z, 1) f32
    pqw_ref, pqb_ref,            # pre_quant 1x1: (Z, Z) f32, (Z, 1) f32
    cb_ref, cbt_ref,             # codebook (K, Z) f32, transposed (Z, K) f32
    qw_ref, qb_ref,              # post_quant 1x1: (Z, Z) f32, (Z, 1) f32
    dw1_ref, db1_ref,            # dec conv_in : (Cd, 9*Z) bf16, (Cd, 1) f32
    dg_ref, dbt_ref,             # dec GN gamma/beta : (Cd0, 1) f32
    dw2_ref, db2_ref,            # dec conv_out: (Cimg, 9*Cd0) bf16, (Cimg, 1) f32
    out_ref,                     # (1, Cimg, HW)  f32
    z_ref,                       # (1, Z, HW)     f32
    loss_ref,                    # (1, 1, 1)      f32
    patch_ref,                   # VMEM scratch (9*Cmax, HW) bf16 -- im2col staging
    *, H, W, groups, eps):

    hw = H * W
    masks = masks_ref[...]                               # (9, HW), hoisted once
    taps = [(sy, sx) for sy in (-1, 0, 1) for sx in (-1, 0, 1)]

    def conv3x3(x, w_ref, b_ref):
        # x: (Cin, HW) f32 ; w_ref: (Cout, 9*Cin) bf16 ; b_ref: (Cout, 1) f32
        cin = x.shape[0]
        for k, (sy, sx) in enumerate(taps):
            off = sy * W + sx                            # shift in flattened HW coords
            if off == 0:
                contrib = x                              # center tap: mask is all-ones
            else:
                shifted = pltpu.roll(x, shift=(-off) % hw, axis=1)
                # mask zeros out-of-bounds taps and roll wrap-around positions
                contrib = shifted * masks[k:k + 1, :]
            patch_ref[k * cin:(k + 1) * cin, :] = contrib.astype(jnp.bfloat16)
        patches = patch_ref[0:9 * cin, :]                # (9*Cin, HW) bf16
        acc = jnp.dot(w_ref[...], patches, preferred_element_type=jnp.float32)
        return acc + b_ref[...]                          # (Cout, HW)

    def conv1x1(x, w_ref, b_ref):
        return jnp.dot(w_ref[...], x, preferred_element_type=jnp.float32) + b_ref[...]

    def group_norm(x, gm_ref, gamma_ref, beta_ref):
        # x: (C, HW); gm: (C, C) 1.0 where channels share a group (symmetric).
        n = float((x.shape[0] // groups) * hw)           # elems per group (static)
        gm = gm_ref[...]
        s = jnp.sum(x, axis=1, keepdims=True)            # (C, 1) per-channel sums
        mean = jnp.dot(gm, s, preferred_element_type=jnp.float32) / n
        xc = x - mean
        ss = jnp.sum(xc * xc, axis=1, keepdims=True)     # centered two-pass variance
        var = jnp.dot(gm, ss, preferred_element_type=jnp.float32) / n
        inv = jax.lax.rsqrt(var + eps)
        return xc * inv * gamma_ref[...] + beta_ref[...]

    def selu(y):
        yneg = jnp.minimum(y, 0.0)                       # avoid exp overflow
        return SELU_SCALE * jnp.where(y > 0.0, y, SELU_ALPHA * (jnp.exp(yneg) - 1.0))

    x = x_ref[0]                                         # (Cimg, HW) f32

    # ------------------------------ encoder ------------------------------
    # TODO(synk): DownBlock / MidBlock / UpBlock are undefined in the reference;
    # the config uses single-entry channel lists so those ModuleLists are empty.
    h = conv3x3(x, ew1_ref, eb1_ref)                     # enc_down_conv_in
    h = selu(group_norm(h, egm_ref, eg_ref, ebt_ref))    # enc_down_norm_out + SELU
    h = conv3x3(h, ew2_ref, eb2_ref)                     # enc_down_conv_out
    h = conv1x1(h, pqw_ref, pqb_ref)                     # pre_quant_conv

    # --------------------- nearest-code vector quantize -------------------
    # (reference's dist.argmax / index_select(idx.view(0)) is buggy; we implement
    #  the intended nearest-code argmin lookup)
    cb = cb_ref[...]                                     # (K, Z)
    K = cb.shape[0]
    ce = jnp.dot(cb, h, preferred_element_type=jnp.float32)       # (K, HW)
    cb2 = jnp.sum(cb * cb, axis=1, keepdims=True)                 # (K, 1)
    dist = cb2 - 2.0 * ce                                # argmin-equivalent distance
    kio = jax.lax.broadcasted_iota(jnp.int32, dist.shape, 0)
    dmin = jnp.min(dist, axis=0, keepdims=True)
    idx = jnp.min(jnp.where(dist <= dmin, kio, K), axis=0, keepdims=True)  # (1, HW)
    onehot = (kio == idx).astype(jnp.float32)            # (K, HW), one 1 per column
    quant = jnp.dot(cbt_ref[...], onehot,
                    preferred_element_type=jnp.float32)  # (Z, HW) code gather on MXU

    diff = quant - h
    loss_ref[...] = jnp.mean(diff * diff).reshape(1, 1, 1)
    z_ref[0] = quant                                     # straight-through fwd value

    # ------------------------------ decoder ------------------------------
    d = conv1x1(quant, qw_ref, qb_ref)                   # post_quant_conv
    d = conv3x3(d, dw1_ref, db1_ref)                     # dec_conv_in
    d = group_norm(d, dgm_ref, dg_ref, dbt_ref)          # dec_norm_out
    # reference discards the SiLU result (`nn.SiLU()(out)` unassigned) -> no act.
    out_ref[0] = conv3x3(d, dw2_ref, db2_ref)            # dec_conv_out


# --------------------------------------------------------------------------
# Host-side constant helpers (numpy -> baked in as constants under jit)
# --------------------------------------------------------------------------

def _tap_masks(H, W):
    """(9, H*W) validity mask per 3x3 tap for the roll-based im2col."""
    p = np.arange(H * W)
    py, px = p // W, p % W
    rows = []
    for sy in (-1, 0, 1):
        for sx in (-1, 0, 1):
            valid = (py + sy >= 0) & (py + sy < H) & (px + sx >= 0) & (px + sx < W)
            rows.append(valid.astype(np.float32))
    return jnp.asarray(np.stack(rows, axis=0))


def _group_matrix(C, groups):
    """(C, C) indicator: 1.0 where two channels belong to the same GN group."""
    g = np.arange(C) // (C // groups)
    return jnp.asarray((g[:, None] == g[None, :]).astype(np.float32))


# --------------------------------------------------------------------------
# Parameter init (weights stored directly in kernel layouts)
# --------------------------------------------------------------------------

def init_params(key, img_channels, config):
    Z = config['z_channels']
    Cd = config['down_channels'][-1]
    Cm = config['mid_channels'][-1]
    Cd0 = config['down_channels'][0]
    K = config['codebook_size']
    ks = jax.random.split(key, 8)

    def conv3x3_w(k, cin, cout):
        # natural (cout, cin, 3, 3) init -> im2col layout (cout, 9*cin), bf16 for MXU
        w = jax.random.normal(k, (cout, cin, 3, 3), jnp.float32) / jnp.sqrt(9.0 * cin)
        return jnp.transpose(w, (0, 2, 3, 1)).reshape(cout, 9 * cin).astype(jnp.bfloat16)

    def conv1x1_w(k, cin, cout):
        return jax.random.normal(k, (cout, cin), jnp.float32) / jnp.sqrt(float(cin))

    return {
        'enc_conv_in_w': conv3x3_w(ks[0], img_channels, Cd),
        'enc_conv_in_b': jnp.zeros((Cd, 1), jnp.float32),
        'enc_gn_gamma': jnp.ones((Cm, 1), jnp.float32),
        'enc_gn_beta': jnp.zeros((Cm, 1), jnp.float32),
        'enc_conv_out_w': conv3x3_w(ks[1], Cm, Z),
        'enc_conv_out_b': jnp.zeros((Z, 1), jnp.float32),
        'pre_quant_w': conv1x1_w(ks[2], Z, Z),
        'pre_quant_b': jnp.zeros((Z, 1), jnp.float32),
        'codebook': jax.random.normal(ks[3], (K, Z), jnp.float32),
        'post_quant_w': conv1x1_w(ks[4], Z, Z),
        'post_quant_b': jnp.zeros((Z, 1), jnp.float32),
        'dec_conv_in_w': conv3x3_w(ks[5], Z, Cd),
        'dec_conv_in_b': jnp.zeros((Cd, 1), jnp.float32),
        'dec_gn_gamma': jnp.ones((Cd0, 1), jnp.float32),
        'dec_gn_beta': jnp.zeros((Cd0, 1), jnp.float32),
        'dec_conv_out_w': conv3x3_w(ks[6], Cd0, img_channels),
        'dec_conv_out_b': jnp.zeros((img_channels, 1), jnp.float32),
    }


# --------------------------------------------------------------------------
# Forward wrapper (NCHW in / NCHW out, matching the PyTorch module)
# --------------------------------------------------------------------------

def vqvae_forward(params, x_nchw, config):
    B, Cimg, H, W = x_nchw.shape
    HWn = H * W
    Z = config['z_channels']
    Cd = config['down_channels'][-1]
    Cm = config['mid_channels'][-1]
    Cd0 = config['down_channels'][0]
    K = config['codebook_size']
    groups = config['norm_channels']
    Cmax = max(Cimg, Cm, Z, Cd0)

    # channels-major, lane-dense (C, H*W) layout; contiguous reshape (no copy).
    x = x_nchw.reshape(B, Cimg, HWn).astype(jnp.float32)
    tap_masks = _tap_masks(H, W)
    enc_gmat = _group_matrix(Cm, groups)
    dec_gmat = _group_matrix(Cd0, groups)
    cb = params['codebook']
    cb_t = cb.T

    def full(shape):
        # constant block index -> Pallas keeps these resident, no per-step re-DMA
        return pl.BlockSpec(shape, lambda b: (0, 0))

    kern = functools.partial(_vqvae_kernel, H=H, W=W, groups=groups, eps=1e-5)

    out, z, loss = pl.pallas_call(
        kern,
        out_shape=(jax.ShapeDtypeStruct((B, Cimg, HWn), jnp.float32),
                   jax.ShapeDtypeStruct((B, Z, HWn), jnp.float32),
                   jax.ShapeDtypeStruct((B, 1, 1), jnp.float32)),
        grid=(B,),
        in_specs=[
            pl.BlockSpec((1, Cimg, HWn), lambda b: (b, 0, 0)),   # x
            full((9, HWn)),                                      # tap masks
            full((Cm, Cm)), full((Cd0, Cd0)),                    # GN group matrices
            full((Cd, 9 * Cimg)), full((Cd, 1)),                 # enc conv_in
            full((Cm, 1)), full((Cm, 1)),                        # enc GN gamma/beta
            full((Z, 9 * Cm)), full((Z, 1)),                     # enc conv_out
            full((Z, Z)), full((Z, 1)),                          # pre_quant 1x1
            full((K, Z)), full((Z, K)),                          # codebook (+T)
            full((Z, Z)), full((Z, 1)),                          # post_quant 1x1
            full((Cd, 9 * Z)), full((Cd, 1)),                    # dec conv_in
            full((Cd0, 1)), full((Cd0, 1)),                      # dec GN gamma/beta
            full((Cimg, 9 * Cd0)), full((Cimg, 1)),              # dec conv_out
        ],
        out_specs=(
            pl.BlockSpec((1, Cimg, HWn), lambda b: (b, 0, 0)),
            pl.BlockSpec((1, Z, HWn), lambda b: (b, 0, 0)),
            pl.BlockSpec((1, 1, 1), lambda b: (b, 0, 0)),
        ),
        scratch_shapes=[pltpu.VMEM((9 * Cmax, HWn), jnp.bfloat16)],  # im2col staging
        compiler_params=pltpu.CompilerParams(
            dimension_semantics=("parallel",)),                   # one sample per TC
    )(x, tap_masks, enc_gmat, dec_gmat,
      params['enc_conv_in_w'], params['enc_conv_in_b'],
      params['enc_gn_gamma'], params['enc_gn_beta'],
      params['enc_conv_out_w'], params['enc_conv_out_b'],
      params['pre_quant_w'], params['pre_quant_b'],
      cb, cb_t,
      params['post_quant_w'], params['post_quant_b'],
      params['dec_conv_in_w'], params['dec_conv_in_b'],
      params['dec_gn_gamma'], params['dec_gn_beta'],
      params['dec_conv_out_w'], params['dec_conv_out_b'])

    qloss = jnp.mean(loss[:, 0, 0])   # mean of per-sample means == global mean
    losses = {'codebook_loss': qloss, 'commitment_loass': qloss}
    return out.reshape(B, Cimg, H, W), z.reshape(B, Z, H, W), losses


# --------------------------------------------------------------------------
# Main
# --------------------------------------------------------------------------

if __name__ == "__main__":
    config = {
        'z_channels': 4,
        'codebook_size': 16,
        'down_channels': [32],
        'mid_channels': [32],
        'down_sample': [],
        'attn_down': [],
        'norm_channels': 8,
        'num_heads': 2,
        'num_down_layers': 1,
        'num_mid_layers': 1,
        'num_up_layers': 1,
    }
    img_channels = 4   # == z_channels so enc_down_conv_in's in_channels is consistent

    key = jax.random.PRNGKey(0)
    kx, kp = jax.random.split(key)
    x = jax.random.normal(kx, (2, img_channels, 16, 16), jnp.float32)
    params = init_params(kp, img_channels, config)

    fwd = jax.jit(lambda p, xx: vqvae_forward(p, xx, config))
    out, z, losses = fwd(params, x)
    jax.block_until_ready((out, z, losses))

    assert out.shape == (2, img_channels, 16, 16)
    assert z.shape == (2, config['z_channels'], 16, 16)
    assert losses['codebook_loss'].shape == ()
    assert bool(jnp.all(jnp.isfinite(out))) and bool(jnp.isfinite(losses['codebook_loss']))
    print("KERNEL_OK")
</pallas_src>

<mosaic_0001>
module attributes {stable_mosaic.version = 11 : i64} {
  func.func @_vqvae_kernel(%arg0: i32, %arg1: memref<1x4x256xf32, #tpu.memory_space<vmem>>, %arg2: memref<9x256xf32, #tpu.memory_space<vmem>>, %arg3: memref<32x32xf32, #tpu.memory_space<vmem>>, %arg4: memref<32x32xf32, #tpu.memory_space<vmem>>, %arg5: memref<32x36xbf16, #tpu.memory_space<vmem>>, %arg6: memref<32x1xf32, #tpu.memory_space<vmem>>, %arg7: memref<32x1xf32, #tpu.memory_space<vmem>>, %arg8: memref<32x1xf32, #tpu.memory_space<vmem>>, %arg9: memref<4x288xbf16, #tpu.memory_space<vmem>>, %arg10: memref<4x1xf32, #tpu.memory_space<vmem>>, %arg11: memref<4x4xf32, #tpu.memory_space<vmem>>, %arg12: memref<4x1xf32, #tpu.memory_space<vmem>>, %arg13: memref<16x4xf32, #tpu.memory_space<vmem>>, %arg14: memref<4x16xf32, #tpu.memory_space<vmem>>, %arg15: memref<4x4xf32, #tpu.memory_space<vmem>>, %arg16: memref<4x1xf32, #tpu.memory_space<vmem>>, %arg17: memref<32x36xbf16, #tpu.memory_space<vmem>>, %arg18: memref<32x1xf32, #tpu.memory_space<vmem>>, %arg19: memref<32x1xf32, #tpu.memory_space<vmem>>, %arg20: memref<32x1xf32, #tpu.memory_space<vmem>>, %arg21: memref<4x288xbf16, #tpu.memory_space<vmem>>, %arg22: memref<4x1xf32, #tpu.memory_space<vmem>>, %arg23: memref<1x4x256xf32, #tpu.memory_space<vmem>>, %arg24: memref<1x4x256xf32, #tpu.memory_space<vmem>>, %arg25: memref<1x1x1xf32, #tpu.memory_space<vmem>>, %arg26: memref<288x256xbf16, #tpu.memory_space<vmem>>) attributes {dimension_semantics = [#tpu.dimension_semantics<parallel>], iteration_bounds = array<i64: 2>, scalar_prefetch = 0 : i64, scratch_operands = 1 : i64, tpu.core_type = #tpu.core_type<tc>, window_params = [{transform_indices = @transform_0, window_bounds = array<i64: 1, 4, 256>}, {pipeline_mode = #tpu.pipeline_mode<synchronous>, transform_indices = @transform_1, window_bounds = array<i64: 9, 256>}, {pipeline_mode = #tpu.pipeline_mode<synchronous>, transform_indices = @transform_2, window_bounds = array<i64: 32, 32>}, {pipeline_mode = #tpu.pipeline_mode<synchronous>, transform_indices = @transform_3, window_bounds = array<i64: 32, 32>}, {pipeline_mode = #tpu.pipeline_mode<synchronous>, transform_indices = @transform_4, window_bounds = array<i64: 32, 36>}, {pipeline_mode = #tpu.pipeline_mode<synchronous>, transform_indices = @transform_5, window_bounds = array<i64: 32, 1>}, {pipeline_mode = #tpu.pipeline_mode<synchronous>, transform_indices = @transform_6, window_bounds = array<i64: 32, 1>}, {pipeline_mode = #tpu.pipeline_mode<synchronous>, transform_indices = @transform_7, window_bounds = array<i64: 32, 1>}, {pipeline_mode = #tpu.pipeline_mode<synchronous>, transform_indices = @transform_8, window_bounds = array<i64: 4, 288>}, {pipeline_mode = #tpu.pipeline_mode<synchronous>, transform_indices = @transform_9, window_bounds = array<i64: 4, 1>}, {pipeline_mode = #tpu.pipeline_mode<synchronous>, transform_indices = @transform_10, window_bounds = array<i64: 4, 4>}, {pipeline_mode = #tpu.pipeline_mode<synchronous>, transform_indices = @transform_11, window_bounds = array<i64: 4, 1>}, {pipeline_mode = #tpu.pipeline_mode<synchronous>, transform_indices = @transform_12, window_bounds = array<i64: 16, 4>}, {pipeline_mode = #tpu.pipeline_mode<synchronous>, transform_indices = @transform_13, window_bounds = array<i64: 4, 16>}, {pipeline_mode = #tpu.pipeline_mode<synchronous>, transform_indices = @transform_14, window_bounds = array<i64: 4, 4>}, {pipeline_mode = #tpu.pipeline_mode<synchronous>, transform_indices = @transform_15, window_bounds = array<i64: 4, 1>}, {pipeline_mode = #tpu.pipeline_mode<synchronous>, transform_indices = @transform_16, window_bounds = array<i64: 32, 36>}, {pipeline_mode = #tpu.pipeline_mode<synchronous>, transform_indices = @transform_17, window_bounds = array<i64: 32, 1>}, {pipeline_mode = #tpu.pipeline_mode<synchronous>, transform_indices = @transform_18, window_bounds = array<i64: 32, 1>}, {pipeline_mode = #tpu.pipeline_mode<synchronous>, transform_indices = @transform_19, window_bounds = array<i64: 32, 1>}, {pipeline_mode = #tpu.pipeline_mode<synchronous>, transform_indices = @transform_20, window_bounds = array<i64: 4, 288>}, {pipeline_mode = #tpu.pipeline_mode<synchronous>, transform_indices = @transform_21, window_bounds = array<i64: 4, 1>}, {transform_indices = @transform_22, window_bounds = array<i64: 1, 4, 256>}, {transform_indices = @transform_23, window_bounds = array<i64: 1, 4, 256>}, {transform_indices = @transform_24, window_bounds = array<i64: 1, 1, 1>}]} {
    %c0 = arith.constant 0 : index
    %c0_0 = arith.constant 0 : index
    %0 = vector.load %arg2[%c0, %c0_0] : memref<9x256xf32, #tpu.memory_space<vmem>>, vector<9x256xf32>
    %c0_1 = arith.constant 0 : index
    %c0_2 = arith.constant 0 : index
    %c0_3 = arith.constant 0 : index
    %1 = vector.load %arg1[%c0_1, %c0_2, %c0_3] : memref<1x4x256xf32, #tpu.memory_space<vmem>>, vector<1x4x256xf32>
    %2 = vector.shape_cast %1 : vector<1x4x256xf32> to vector<4x256xf32>
    %c17_i32 = arith.constant 17 : i32
    %3 = tpu.dynamic_rotate %2 by %c17_i32 dim 1 : vector<4x256xf32>, i32 -> vector<4x256xf32>
    %4 = vector.extract_strided_slice %0 {offsets = [0, 0], sizes = [1, 256], strides = [1, 1]} : vector<9x256xf32> to vector<1x256xf32>
    %5 = vector.broadcast %4 : vector<1x256xf32> to vector<4x256xf32>
    %6 = arith.mulf %3, %5 : vector<4x256xf32>
    %7 = arith.truncf %6 : vector<4x256xf32> to vector<4x256xbf16>
    %c0_4 = arith.constant 0 : index
    %c0_5 = arith.constant 0 : index
    %8 = vector.load %arg26[%c0_4, %c0_5] : memref<288x256xbf16, #tpu.memory_space<vmem>>, vector<4x256xbf16>
    tpu.vector_store %arg26[%c0_4, %c0_5], %7 {strides = array<i32>} : memref<288x256xbf16, #tpu.memory_space<vmem>>, vector<4x256xbf16>,
    %c16_i32 = arith.constant 16 : i32
    %9 = tpu.dynamic_rotate %2 by %c16_i32 dim 1 : vector<4x256xf32>, i32 -> vector<4x256xf32>
    %10 = vector.extract_strided_slice %0 {offsets = [1, 0], sizes = [1, 256], strides = [1, 1]} : vector<9x256xf32> to vector<1x256xf32>
    %11 = vector.broadcast %10 : vector<1x256xf32> to vector<4x256xf32>
    %12 = arith.mulf %9, %11 : vector<4x256xf32>
    %13 = arith.truncf %12 : vector<4x256xf32> to vector<4x256xbf16>
    %c4 = arith.constant 4 : index
    %c0_6 = arith.constant 0 : index
    %14 = vector.load %arg26[%c4, %c0_6] : memref<288x256xbf16, #tpu.memory_space<vmem>>, vector<4x256xbf16>
    tpu.vector_store %arg26[%c4, %c0_6], %13 {strides = array<i32>} : memref<288x256xbf16, #tpu.memory_space<vmem>>, vector<4x256xbf16>,
    %c15_i32 = arith.constant 15 : i32
    %15 = tpu.dynamic_rotate %2 by %c15_i32 dim 1 : vector<4x256xf32>, i32 -> vector<4x256xf32>
    %16 = vector.extract_strided_slice %0 {offsets = [2, 0], sizes = [1, 256], strides = [1, 1]} : vector<9x256xf32> to vector<1x256xf32>
    %17 = vector.broadcast %16 : vector<1x256xf32> to vector<4x256xf32>
    %18 = arith.mulf %15, %17 : vector<4x256xf32>
    %19 = arith.truncf %18 : vector<4x256xf32> to vector<4x256xbf16>
    %c8 = arith.constant 8 : index
    %c0_7 = arith.constant 0 : index
    %20 = vector.load %arg26[%c8, %c0_7] : memref<288x256xbf16, #tpu.memory_space<vmem>>, vector<4x256xbf16>
    tpu.vector_store %arg26[%c8, %c0_7], %19 {strides = array<i32>} : memref<288x256xbf16, #tpu.memory_space<vmem>>, vector<4x256xbf16>,
    %c1_i32 = arith.constant 1 : i32
    %21 = tpu.dynamic_rotate %2 by %c1_i32 dim 1 : vector<4x256xf32>, i32 -> vector<4x256xf32>
    %22 = vector.extract_strided_slice %0 {offsets = [3, 0], sizes = [1, 256], strides = [1, 1]} : vector<9x256xf32> to vector<1x256xf32>
    %23 = vector.broadcast %22 : vector<1x256xf32> to vector<4x256xf32>
    %24 = arith.mulf %21, %23 : vector<4x256xf32>
    %25 = arith.truncf %24 : vector<4x256xf32> to vector<4x256xbf16>
    %c12 = arith.constant 12 : index
    %c0_8 = arith.constant 0 : index
    %26 = vector.load %arg26[%c12, %c0_8] : memref<288x256xbf16, #tpu.memory_space<vmem>>, vector<4x256xbf16>
    tpu.vector_store %arg26[%c12, %c0_8], %25 {strides = array<i32>} : memref<288x256xbf16, #tpu.memory_space<vmem>>, vector<4x256xbf16>,
    %27 = arith.truncf %2 : vector<4x256xf32> to vector<4x256xbf16>
    %c16 = arith.constant 16 : index
    %c0_9 = arith.constant 0 : index
    %28 = vector.load %arg26[%c16, %c0_9] : memref<288x256xbf16, #tpu.memory_space<vmem>>, vector<4x256xbf16>
    tpu.vector_store %arg26[%c16, %c0_9], %27 {strides = array<i32>} : memref<288x256xbf16, #tpu.memory_space<vmem>>, vector<4x256xbf16>,
    %c255_i32 = arith.constant 255 : i32
    %29 = tpu.dynamic_rotate %2 by %c255_i32 dim 1 : vector<4x256xf32>, i32 -> vector<4x256xf32>
    %30 = vector.extract_strided_slice %0 {offsets = [5, 0], sizes = [1, 256], strides = [1, 1]} : vector<9x256xf32> to vector<1x256xf32>
    %31 = vector.broadcast %30 : vector<1x256xf32> to vector<4x256xf32>
    %32 = arith.mulf %29, %31 : vector<4x256xf32>
    %33 = arith.truncf %32 : vector<4x256xf32> to vector<4x256xbf16>
    %c20 = arith.constant 20 : index
    %c0_10 = arith.constant 0 : index
    %34 = vector.load %arg26[%c20, %c0_10] : memref<288x256xbf16, #tpu.memory_space<vmem>>, vector<4x256xbf16>
    tpu.vector_store %arg26[%c20, %c0_10], %33 {strides = array<i32>} : memref<288x256xbf16, #tpu.memory_space<vmem>>, vector<4x256xbf16>,
    %c241_i32 = arith.constant 241 : i32
    %35 = tpu.dynamic_rotate %2 by %c241_i32 dim 1 : vector<4x256xf32>, i32 -> vector<4x256xf32>
    %36 = vector.extract_strided_slice %0 {offsets = [6, 0], sizes = [1, 256], strides = [1, 1]} : vector<9x256xf32> to vector<1x256xf32>
    %37 = vector.broadcast %36 : vector<1x256xf32> to vector<4x256xf32>
    %38 = arith.mulf %35, %37 : vector<4x256xf32>
    %39 = arith.truncf %38 : vector<4x256xf32> to vector<4x256xbf16>
    %c24 = arith.constant 24 : index
    %c0_11 = arith.constant 0 : index
    %40 = vector.load %arg26[%c24, %c0_11] : memref<288x256xbf16, #tpu.memory_space<vmem>>, vector<4x256xbf16>
    tpu.vector_store %arg26[%c24, %c0_11], %39 {strides = array<i32>} : memref<288x256xbf16, #tpu.memory_space<vmem>>, vector<4x256xbf16>,
    %c240_i32 = arith.constant 240 : i32
    %41 = tpu.dynamic_rotate %2 by %c240_i32 dim 1 : vector<4x256xf32>, i32 -> vector<4x256xf32>
    %42 = vector.extract_strided_slice %0 {offsets = [7, 0], sizes = [1, 256], strides = [1, 1]} : vector<9x256xf32> to vector<1x256xf32>
    %43 = vector.broadcast %42 : vector<1x256xf32> to vector<4x256xf32>
    %44 = arith.mulf %41, %43 : vector<4x256xf32>
    %45 = arith.truncf %44 : vector<4x256xf32> to vector<4x256xbf16>
    %c28 = arith.constant 28 : index
    %c0_12 = arith.constant 0 : index
    %46 = vector.load %arg26[%c28, %c0_12] : memref<288x256xbf16, #tpu.memory_space<vmem>>, vector<4x256xbf16>
    tpu.vector_store %arg26[%c28, %c0_12], %45 {strides = array<i32>} : memref<288x256xbf16, #tpu.memory_space<vmem>>, vector<4x256xbf16>,
    %c239_i32 = arith.constant 239 : i32
    %47 = tpu.dynamic_rotate %2 by %c239_i32 dim 1 : vector<4x256xf32>, i32 -> vector<4x256xf32>
    %48 = vector.extract_strided_slice %0 {offsets = [8, 0], sizes = [1, 256], strides = [1, 1]} : vector<9x256xf32> to vector<1x256xf32>
    %49 = vector.broadcast %48 : vector<1x256xf32> to vector<4x256xf32>
    %50 = arith.mulf %47, %49 : vector<4x256xf32>
    %51 = arith.truncf %50 : vector<4x256xf32> to vector<4x256xbf16>
    %c32 = arith.constant 32 : index
    %c0_13 = arith.constant 0 : index
    %52 = vector.load %arg26[%c32, %c0_13] : memref<288x256xbf16, #tpu.memory_space<vmem>>, vector<4x256xbf16>
    tpu.vector_store %arg26[%c32, %c0_13], %51 {strides = array<i32>} : memref<288x256xbf16, #tpu.memory_space<vmem>>, vector<4x256xbf16>,
    %c0_14 = arith.constant 0 : index
    %c0_15 = arith.constant 0 : index
    %53 = vector.load %arg26[%c0_14, %c0_15] : memref<288x256xbf16, #tpu.memory_space<vmem>>, vector<36x256xbf16>
    %c0_16 = arith.constant 0 : index
    %c0_17 = arith.constant 0 : index
    %54 = vector.load %arg5[%c0_16, %c0_17] : memref<32x36xbf16, #tpu.memory_space<vmem>>, vector<32x36xbf16>
    %cst = arith.constant dense<0.000000e+00> : vector<32x256xf32>
    %55 = tpu.matmul %54, %53, %cst {dimension_numbers = #tpu.dot_dimension_numbers<[1], [0], [0], [1], [0, 0, 1, 1], [], []>} : vector<32x36xbf16>, vector<36x256xbf16>, vector<32x256xf32> -> vector<32x256xf32>
    %c0_18 = arith.constant 0 : index
    %c0_19 = arith.constant 0 : index
    %56 = vector.load %arg6[%c0_18, %c0_19] : memref<32x1xf32, #tpu.memory_space<vmem>>, vector<32x1xf32>
    %57 = vector.broadcast %56 : vector<32x1xf32> to vector<32x256xf32>
    %58 = arith.addf %55, %57 : vector<32x256xf32>
    %c0_20 = arith.constant 0 : index
    %c0_21 = arith.constant 0 : index
    %59 = vector.load %arg3[%c0_20, %c0_21] : memref<32x32xf32, #tpu.memory_space<vmem>>, vector<32x32xf32>
    %cst_22 = arith.constant dense<0.000000e+00> : vector<32xf32>
    %60 = vector.multi_reduction <add>, %58, %cst_22 [1] : vector<32x256xf32> to vector<32xf32>
    %61 = vector.shape_cast %60 : vector<32xf32> to vector<32x1xf32>
    %cst_23 = arith.constant dense<0.000000e+00> : vector<32x1xf32>
    %62 = tpu.matmul %59, %61, %cst_23 {dimension_numbers = #tpu.dot_dimension_numbers<[1], [0], [0], [1], [0, 0, 1, 1], [], []>} : vector<32x32xf32>, vector<32x1xf32>, vector<32x1xf32> -> vector<32x1xf32>
    %cst_24 = arith.constant 1.024000e+03 : f32
    %63 = vector.broadcast %cst_24 : f32 to vector<32x1xf32>
    %64 = arith.divf %62, %63 : vector<32x1xf32>
    %65 = vector.broadcast %64 : vector<32x1xf32> to vector<32x256xf32>
    %66 = arith.subf %58, %65 : vector<32x256xf32>
    %67 = arith.mulf %66, %66 : vector<32x256xf32>
    %cst_25 = arith.constant dense<0.000000e+00> : vector<32xf32>
    %68 = vector.multi_reduction <add>, %67, %cst_25 [1] : vector<32x256xf32> to vector<32xf32>
    %69 = vector.shape_cast %68 : vector<32xf32> to vector<32x1xf32>
    %cst_26 = arith.constant dense<0.000000e+00> : vector<32x1xf32>
    %70 = tpu.matmul %59, %69, %cst_26 {dimension_numbers = #tpu.dot_dimension_numbers<[1], [0], [0], [1], [0, 0, 1, 1], [], []>} : vector<32x32xf32>, vector<32x1xf32>, vector<32x1xf32> -> vector<32x1xf32>
    %cst_27 = arith.constant 1.024000e+03 : f32
    %71 = vector.broadcast %cst_27 : f32 to vector<32x1xf32>
    %72 = arith.divf %70, %71 : vector<32x1xf32>
    %cst_28 = arith.constant 9.99999974E-6 : f32
    %73 = vector.broadcast %cst_28 : f32 to vector<32x1xf32>
    %74 = arith.addf %72, %73 : vector<32x1xf32>
    %75 = math.rsqrt %74 : vector<32x1xf32>
    %76 = vector.broadcast %75 : vector<32x1xf32> to vector<32x256xf32>
    %77 = arith.mulf %66, %76 : vector<32x256xf32>
    %c0_29 = arith.constant 0 : index
    %c0_30 = arith.constant 0 : index
    %78 = vector.load %arg7[%c0_29, %c0_30] : memref<32x1xf32, #tpu.memory_space<vmem>>, vector<32x1xf32>
    %79 = vector.broadcast %78 : vector<32x1xf32> to vector<32x256xf32>
    %80 = arith.mulf %77, %79 : vector<32x256xf32>
    %c0_31 = arith.constant 0 : index
    %c0_32 = arith.constant 0 : index
    %81 = vector.load %arg8[%c0_31, %c0_32] : memref<32x1xf32, #tpu.memory_space<vmem>>, vector<32x1xf32>
    %82 = vector.broadcast %81 : vector<32x1xf32> to vector<32x256xf32>
    %83 = arith.addf %80, %82 : vector<32x256xf32>
    %cst_33 = arith.constant 0.000000e+00 : f32
    %84 = vector.broadcast %cst_33 : f32 to vector<32x256xf32>
    %85 = arith.minimumf %83, %84 : vector<32x256xf32>
    %cst_34 = arith.constant 0.000000e+00 : f32
    %86 = vector.broadcast %cst_34 : f32 to vector<32x256xf32>
    %87 = arith.cmpf ogt, %83, %86 : vector<32x256xf32>
    %88 = math.exp %85 : vector<32x256xf32>
    %cst_35 = arith.constant 1.000000e+00 : f32
    %89 = vector.broadcast %cst_35 : f32 to vector<32x256xf32>
    %90 = arith.subf %88, %89 : vector<32x256xf32>
    %cst_36 = arith.constant 1.67326319 : f32
    %91 = vector.broadcast %cst_36 : f32 to vector<32x256xf32>
    %92 = arith.mulf %91, %90 : vector<32x256xf32>
    %93 = arith.select %87, %83, %92 : vector<32x256xi1>, vector<32x256xf32>
    %cst_37 = arith.constant 1.05070102 : f32
    %94 = vector.broadcast %cst_37 : f32 to vector<32x256xf32>
    %95 = arith.mulf %94, %93 : vector<32x256xf32>
    %c17_i32_38 = arith.constant 17 : i32
    %96 = tpu.dynamic_rotate %95 by %c17_i32_38 dim 1 : vector<32x256xf32>, i32 -> vector<32x256xf32>
    %97 = vector.extract_strided_slice %0 {offsets = [0, 0], sizes = [1, 256], strides = [1, 1]} : vector<9x256xf32> to vector<1x256xf32>
    %98 = vector.broadcast %97 : vector<1x256xf32> to vector<32x256xf32>
    %99 = arith.mulf %96, %98 : vector<32x256xf32>
    %100 = arith.truncf %99 : vector<32x256xf32> to vector<32x256xbf16>
    %c0_39 = arith.constant 0 : index
    %c0_40 = arith.constant 0 : index
    %101 = vector.load %arg26[%c0_39, %c0_40] : memref<288x256xbf16, #tpu.memory_space<vmem>>, vector<32x256xbf16>
    tpu.vector_store %arg26[%c0_39, %c0_40], %100 {strides = array<i32>} : memref<288x256xbf16, #tpu.memory_space<vmem>>, vector<32x256xbf16>,
    %c16_i32_41 = arith.constant 16 : i32
    %102 = tpu.dynamic_rotate %95 by %c16_i32_41 dim 1 : vector<32x256xf32>, i32 -> vector<32x256xf32>
    %103 = vector.extract_strided_slice %0 {offsets = [1, 0], sizes = [1, 256], strides = [1, 1]} : vector<9x256xf32> to vector<1x256xf32>
    %104 = vector.broadcast %103 : vector<1x256xf32> to vector<32x256xf32>
    %105 = arith.mulf %102, %104 : vector<32x256xf32>
    %106 = arith.truncf %105 : vector<32x256xf32> to vector<32x256xbf16>
    %c32_42 = arith.constant 32 : index
    %c0_43 = arith.constant 0 : index
    %107 = vector.load %arg26[%c32_42, %c0_43] : memref<288x256xbf16, #tpu.memory_space<vmem>>, vector<32x256xbf16>
    tpu.vector_store %arg26[%c32_42, %c0_43], %106 {strides = array<i32>} : memref<288x256xbf16, #tpu.memory_space<vmem>>, vector<32x256xbf16>,
    %c15_i32_44 = arith.constant 15 : i32
    %108 = tpu.dynamic_rotate %95 by %c15_i32_44 dim 1 : vector<32x256xf32>, i32 -> vector<32x256xf32>
    %109 = vector.extract_strided_slice %0 {offsets = [2, 0], sizes = [1, 256], strides = [1, 1]} : vector<9x256xf32> to vector<1x256xf32>
    %110 = vector.broadcast %109 : vector<1x256xf32> to vector<32x256xf32>
    %111 = arith.mulf %108, %110 : vector<32x256xf32>
    %112 = arith.truncf %111 : vector<32x256xf32> to vector<32x256xbf16>
    %c64 = arith.constant 64 : index
    %c0_45 = arith.constant 0 : index
    %113 = vector.load %arg26[%c64, %c0_45] : memref<288x256xbf16, #tpu.memory_space<vmem>>, vector<32x256xbf16>
    tpu.vector_store %arg26[%c64, %c0_45], %112 {strides = array<i32>} : memref<288x256xbf16, #tpu.memory_space<vmem>>, vector<32x256xbf16>,
    %c1_i32_46 = arith.constant 1 : i32
    %114 = tpu.dynamic_rotate %95 by %c1_i32_46 dim 1 : vector<32x256xf32>, i32 -> vector<32x256xf32>
    %115 = vector.extract_strided_slice %0 {offsets = [3, 0], sizes = [1, 256], strides = [1, 1]} : vector<9x256xf32> to vector<1x256xf32>
    %116 = vector.broadcast %115 : vector<1x256xf32> to vector<32x256xf32>
    %117 = arith.mulf %114, %116 : vector<32x256xf32>
    %118 = arith.truncf %117 : vector<32x256xf32> to vector<32x256xbf16>
    %c96 = arith.constant 96 : index
    %c0_47 = arith.constant 0 : index
    %119 = vector.load %arg26[%c96, %c0_47] : memref<288x256xbf16, #tpu.memory_space<vmem>>, vector<32x256xbf16>
    tpu.vector_store %arg26[%c96, %c0_47], %118 {strides = array<i32>} : memref<288x256xbf16, #tpu.memory_space<vmem>>, vector<32x256xbf16>,
    %120 = arith.truncf %95 : vector<32x256xf32> to vector<32x256xbf16>
    %c128 = arith.constant 128 : index
    %c0_48 = arith.constant 0 : index
    %121 = vector.load %arg26[%c128, %c0_48] : memref<288x256xbf16, #tpu.memory_space<vmem>>, vector<32x256xbf16>
    tpu.vector_store %arg26[%c128, %c0_48], %120 {strides = array<i32>} : memref<288x256xbf16, #tpu.memory_space<vmem>>, vector<32x256xbf16>,
    %c255_i32_49 = arith.constant 255 : i32
    %122 = tpu.dynamic_rotate %95 by %c255_i32_49 dim 1 : vector<32x256xf32>, i32 -> vector<32x256xf32>
    %123 = vector.extract_strided_slice %0 {offsets = [5, 0], sizes = [1, 256], strides = [1, 1]} : vector<9x256xf32> to vector<1x256xf32>
    %124 = vector.broadcast %123 : vector<1x256xf32> to vector<32x256xf32>
    %125 = arith.mulf %122, %124 : vector<32x256xf32>
    %126 = arith.truncf %125 : vector<32x256xf32> to vector<32x256xbf16>
    %c160 = arith.constant 160 : index
    %c0_50 = arith.constant 0 : index
    %127 = vector.load %arg26[%c160, %c0_50] : memref<288x256xbf16, #tpu.memory_space<vmem>>, vector<32x256xbf16>
    tpu.vector_store %arg26[%c160, %c0_50], %126 {strides = array<i32>} : memref<288x256xbf16, #tpu.memory_space<vmem>>, vector<32x256xbf16>,
    %c241_i32_51 = arith.constant 241 : i32
    %128 = tpu.dynamic_rotate %95 by %c241_i32_51 dim 1 : vector<32x256xf32>, i32 -> vector<32x256xf32>
    %129 = vector.extract_strided_slice %0 {offsets = [6, 0], sizes = [1, 256], strides = [1, 1]} : vector<9x256xf32> to vector<1x256xf32>
    %130 = vector.broadcast %129 : vector<1x256xf32> to vector<32x256xf32>
    %131 = arith.mulf %128, %130 : vector<32x256xf32>
    %132 = arith.truncf %131 : vector<32x256xf32> to vector<32x256xbf16>
    %c192 = arith.constant 192 : index
    %c0_52 = arith.constant 0 : index
    %133 = vector.load %arg26[%c192, %c0_52] : memref<288x256xbf16, #tpu.memory_space<vmem>>, vector<32x256xbf16>
    tpu.vector_store %arg26[%c192, %c0_52], %132 {strides = array<i32>} : memref<288x256xbf16, #tpu.memory_space<vmem>>, vector<32x256xbf16>,
    %c240_i32_53 = arith.constant 240 : i32
    %134 = tpu.dynamic_rotate %95 by %c240_i32_53 dim 1 : vector<32x256xf32>, i32 -> vector<32x256xf32>
    %135 = vector.extract_strided_slice %0 {offsets = [7, 0], sizes = [1, 256], strides = [1, 1]} : vector<9x256xf32> to vector<1x256xf32>
    %136 = vector.broadcast %135 : vector<1x256xf32> to vector<32x256xf32>
    %137 = arith.mulf %134, %136 : vector<32x256xf32>
    %138 = arith.truncf %137 : vector<32x256xf32> to vector<32x256xbf16>
    %c224 = arith.constant 224 : index
    %c0_54 = arith.constant 0 : index
    %139 = vector.load %arg26[%c224, %c0_54] : memref<288x256xbf16, #tpu.memory_space<vmem>>, vector<32x256xbf16>
    tpu.vector_store %arg26[%c224, %c0_54], %138 {strides = array<i32>} : memref<288x256xbf16, #tpu.memory_space<vmem>>, vector<32x256xbf16>,
    %c239_i32_55 = arith.constant 239 : i32
    %140 = tpu.dynamic_rotate %95 by %c239_i32_55 dim 1 : vector<32x256xf32>, i32 -> vector<32x256xf32>
    %141 = vector.extract_strided_slice %0 {offsets = [8, 0], sizes = [1, 256], strides = [1, 1]} : vector<9x256xf32> to vector<1x256xf32>
    %142 = vector.broadcast %141 : vector<1x256xf32> to vector<32x256xf32>
    %143 = arith.mulf %140, %142 : vector<32x256xf32>
    %144 = arith.truncf %143 : vector<32x256xf32> to vector<32x256xbf16>
    %c256 = arith.constant 256 : index
    %c0_56 = arith.constant 0 : index
    %145 = vector.load %arg26[%c256, %c0_56] : memref<288x256xbf16, #tpu.memory_space<vmem>>, vector<32x256xbf16>
    tpu.vector_store %arg26[%c256, %c0_56], %144 {strides = array<i32>} : memref<288x256xbf16, #tpu.memory_space<vmem>>, vector<32x256xbf16>,
    %c0_57 = arith.constant 0 : index
    %c0_58 = arith.constant 0 : index
    %146 = vector.load %arg26[%c0_57, %c0_58] : memref<288x256xbf16, #tpu.memory_space<vmem>>, vector<288x256xbf16>
    %c0_59 = arith.constant 0 : index
    %c0_60 = arith.constant 0 : index
    %147 = vector.load %arg9[%c0_59, %c0_60] : memref<4x288xbf16, #tpu.memory_space<vmem>>, vector<4x288xbf16>
    %cst_61 = arith.constant dense<0.000000e+00> : vector<4x256xf32>
    %148 = tpu.matmul %147, %146, %cst_61 {dimension_numbers = #tpu.dot_dimension_numbers<[1], [0], [0], [1], [0, 0, 1, 1], [], []>} : vector<4x288xbf16>, vector<288x256xbf16>, vector<4x256xf32> -> vector<4x256xf32>
    %c0_62 = arith.constant 0 : index
    %c0_63 = arith.constant 0 : index
    %149 = vector.load %arg10[%c0_62, %c0_63] : memref<4x1xf32, #tpu.memory_space<vmem>>, vector<4x1xf32>
    %150 = vector.broadcast %149 : vector<4x1xf32> to vector<4x256xf32>
    %151 = arith.addf %148, %150 : vector<4x256xf32>
    %c0_64 = arith.constant 0 : index
    %c0_65 = arith.constant 0 : index
    %152 = vector.load %arg11[%c0_64, %c0_65] : memref<4x4xf32, #tpu.memory_space<vmem>>, vector<4x4xf32>
    %cst_66 = arith.constant dense<0.000000e+00> : vector<4x256xf32>
    %153 = tpu.matmul %152, %151, %cst_66 {dimension_numbers = #tpu.dot_dimension_numbers<[1], [0], [0], [1], [0, 0, 1, 1], [], []>} : vector<4x4xf32>, vector<4x256xf32>, vector<4x256xf32> -> vector<4x256xf32>
    %c0_67 = arith.constant 0 : index
    %c0_68 = arith.constant 0 : index
    %154 = vector.load %arg12[%c0_67, %c0_68] : memref<4x1xf32, #tpu.memory_space<vmem>>, vector<4x1xf32>
    %155 = vector.broadcast %154 : vector<4x1xf32> to vector<4x256xf32>
    %156 = arith.addf %153, %155 : vector<4x256xf32>
    %c0_69 = arith.constant 0 : index
    %c0_70 = arith.constant 0 : index
    %157 = vector.load %arg13[%c0_69, %c0_70] : memref<16x4xf32, #tpu.memory_space<vmem>>, vector<16x4xf32>
    %cst_71 = arith.constant dense<0.000000e+00> : vector<16x256xf32>
    %158 = tpu.matmul %157, %156, %cst_71 {dimension_numbers = #tpu.dot_dimension_numbers<[1], [0], [0], [1], [0, 0, 1, 1], [], []>} : vector<16x4xf32>, vector<4x256xf32>, vector<16x256xf32> -> vector<16x256xf32>
    %159 = arith.mulf %157, %157 : vector<16x4xf32>
    %cst_72 = arith.constant dense<0.000000e+00> : vector<16xf32>
    %160 = vector.multi_reduction <add>, %159, %cst_72 [1] : vector<16x4xf32> to vector<16xf32>
    %161 = vector.shape_cast %160 : vector<16xf32> to vector<16x1xf32>
    %cst_73 = arith.constant 2.000000e+00 : f32
    %162 = vector.broadcast %cst_73 : f32 to vector<16x256xf32>
    %163 = arith.mulf %162, %158 : vector<16x256xf32>
    %164 = vector.broadcast %161 : vector<16x1xf32> to vector<16x256xf32>
    %165 = arith.subf %164, %163 : vector<16x256xf32>
    %166 = tpu.iota {dimensions = array<i32: 0>} : vector<16x256xi32>
    %cst_74 = arith.constant dense<0x7F800000> : vector<256xf32>
    %167 = vector.multi_reduction <minimumf>, %165, %cst_74 [0] : vector<16x256xf32> to vector<256xf32>
    %168 = vector.shape_cast %167 : vector<256xf32> to vector<1x256xf32>
    %169 = vector.broadcast %168 : vector<1x256xf32> to vector<16x256xf32>
    %170 = arith.cmpf ole, %165, %169 : vector<16x256xf32>
    %c16_i32_75 = arith.constant 16 : i32
    %171 = vector.broadcast %c16_i32_75 : i32 to vector<16x256xi32>
    %172 = arith.select %170, %166, %171 : vector<16x256xi1>, vector<16x256xi32>
    %cst_76 = arith.constant dense<2147483647> : vector<256xi32>
    %173 = vector.multi_reduction <minsi>, %172, %cst_76 [0] : vector<16x256xi32> to vector<256xi32>
    %174 = vector.shape_cast %173 : vector<256xi32> to vector<1x256xi32>
    %175 = vector.broadcast %174 : vector<1x256xi32> to vector<16x256xi32>
    %176 = arith.cmpi eq, %166, %175 : vector<16x256xi32>
    %177 = arith.extui %176 : vector<16x256xi1> to vector<16x256xi32>
    %178 = arith.sitofp %177 : vector<16x256xi32> to vector<16x256xf32>
    %c0_77 = arith.constant 0 : index
    %c0_78 = arith.constant 0 : index
    %179 = vector.load %arg14[%c0_77, %c0_78] : memref<4x16xf32, #tpu.memory_space<vmem>>, vector<4x16xf32>
    %cst_79 = arith.constant dense<0.000000e+00> : vector<4x256xf32>
    %180 = tpu.matmul %179, %178, %cst_79 {dimension_numbers = #tpu.dot_dimension_numbers<[1], [0], [0], [1], [0, 0, 1, 1], [], []>} : vector<4x16xf32>, vector<16x256xf32>, vector<4x256xf32> -> vector<4x256xf32>
    %181 = arith.subf %180, %156 : vector<4x256xf32>
    %182 = arith.mulf %181, %181 : vector<4x256xf32>
    %183 = vector.shape_cast %182 : vector<4x256xf32> to vector<1x4x256xf32>
    %cst_80 = arith.constant dense<0.000000e+00> : vector<1xf32>
    %184 = vector.multi_reduction <add>, %183, %cst_80 [1, 2] : vector<1x4x256xf32> to vector<1xf32>
    %185 = vector.shape_cast %184 : vector<1xf32> to vector<1x1x1xf32>
    %186 = vector.extract %185[0, 0, 0] : f32 from vector<1x1x1xf32>
    %cst_81 = arith.constant 1.024000e+03 : f32
    %187 = arith.divf %186, %cst_81 : f32
    %188 = vector.broadcast %187 : f32 to vector<1x1x1xf32>
    %c0_82 = arith.constant 0 : index
    %c0_83 = arith.constant 0 : index
    %c0_84 = arith.constant 0 : index
    %189 = vector.load %arg25[%c0_82, %c0_83, %c0_84] : memref<1x1x1xf32, #tpu.memory_space<vmem>>, vector<1x1x1xf32>
    tpu.vector_store %arg25[%c0_82, %c0_83, %c0_84], %188 {strides = array<i32>} : memref<1x1x1xf32, #tpu.memory_space<vmem>>, vector<1x1x1xf32>,
    %c0_85 = arith.constant 0 : index
    %c0_86 = arith.constant 0 : index
    %c0_87 = arith.constant 0 : index
    %190 = vector.load %arg24[%c0_85, %c0_86, %c0_87] : memref<1x4x256xf32, #tpu.memory_space<vmem>>, vector<1x4x256xf32>
    %191 = vector.shape_cast %190 : vector<1x4x256xf32> to vector<4x256xf32>
    %192 = vector.shape_cast %180 : vector<4x256xf32> to vector<1x4x256xf32>
    tpu.vector_store %arg24[%c0_85, %c0_86, %c0_87], %192 {strides = array<i32>} : memref<1x4x256xf32, #tpu.memory_space<vmem>>, vector<1x4x256xf32>,
    %c0_88 = arith.constant 0 : index
    %c0_89 = arith.constant 0 : index
    %193 = vector.load %arg15[%c0_88, %c0_89] : memref<4x4xf32, #tpu.memory_space<vmem>>, vector<4x4xf32>
    %cst_90 = arith.constant dense<0.000000e+00> : vector<4x256xf32>
    %194 = tpu.matmul %193, %180, %cst_90 {dimension_numbers = #tpu.dot_dimension_numbers<[1], [0], [0], [1], [0, 0, 1, 1], [], []>} : vector<4x4xf32>, vector<4x256xf32>, vector<4x256xf32> -> vector<4x256xf32>
    %c0_91 = arith.constant 0 : index
    %c0_92 = arith.constant 0 : index
    %195 = vector.load %arg16[%c0_91, %c0_92] : memref<4x1xf32, #tpu.memory_space<vmem>>, vector<4x1xf32>
    %196 = vector.broadcast %195 : vector<4x1xf32> to vector<4x256xf32>
    %197 = arith.addf %194, %196 : vector<4x256xf32>
    %c17_i32_93 = arith.constant 17 : i32
    %198 = tpu.dynamic_rotate %197 by %c17_i32_93 dim 1 : vector<4x256xf32>, i32 -> vector<4x256xf32>
    %199 = vector.extract_strided_slice %0 {offsets = [0, 0], sizes = [1, 256], strides = [1, 1]} : vector<9x256xf32> to vector<1x256xf32>
    %200 = vector.broadcast %199 : vector<1x256xf32> to vector<4x256xf32>
    %201 = arith.mulf %198, %200 : vector<4x256xf32>
    %202 = arith.truncf %201 : vector<4x256xf32> to vector<4x256xbf16>
    %c0_94 = arith.constant 0 : index
    %c0_95 = arith.constant 0 : index
    %203 = vector.load %arg26[%c0_94, %c0_95] : memref<288x256xbf16, #tpu.memory_space<vmem>>, vector<4x256xbf16>
    tpu.vector_store %arg26[%c0_94, %c0_95], %202 {strides = array<i32>} : memref<288x256xbf16, #tpu.memory_space<vmem>>, vector<4x256xbf16>,
    %c16_i32_96 = arith.constant 16 : i32
    %204 = tpu.dynamic_rotate %197 by %c16_i32_96 dim 1 : vector<4x256xf32>, i32 -> vector<4x256xf32>
    %205 = vector.extract_strided_slice %0 {offsets = [1, 0], sizes = [1, 256], strides = [1, 1]} : vector<9x256xf32> to vector<1x256xf32>
    %206 = vector.broadcast %205 : vector<1x256xf32> to vector<4x256xf32>
    %207 = arith.mulf %204, %206 : vector<4x256xf32>
    %208 = arith.truncf %207 : vector<4x256xf32> to vector<4x256xbf16>
    %c4_97 = arith.constant 4 : index
    %c0_98 = arith.constant 0 : index
    %209 = vector.load %arg26[%c4_97, %c0_98] : memref<288x256xbf16, #tpu.memory_space<vmem>>, vector<4x256xbf16>
    tpu.vector_store %arg26[%c4_97, %c0_98], %208 {strides = array<i32>} : memref<288x256xbf16, #tpu.memory_space<vmem>>, vector<4x256xbf16>,
    %c15_i32_99 = arith.constant 15 : i32
    %210 = tpu.dynamic_rotate %197 by %c15_i32_99 dim 1 : vector<4x256xf32>, i32 -> vector<4x256xf32>
    %211 = vector.extract_strided_slice %0 {offsets = [2, 0], sizes = [1, 256], strides = [1, 1]} : vector<9x256xf32> to vector<1x256xf32>
    %212 = vector.broadcast %211 : vector<1x256xf32> to vector<4x256xf32>
    %213 = arith.mulf %210, %212 : vector<4x256xf32>
    %214 = arith.truncf %213 : vector<4x256xf32> to vector<4x256xbf16>
    %c8_100 = arith.constant 8 : index
    %c0_101 = arith.constant 0 : index
    %215 = vector.load %arg26[%c8_100, %c0_101] : memref<288x256xbf16, #tpu.memory_space<vmem>>, vector<4x256xbf16>
    tpu.vector_store %arg26[%c8_100, %c0_101], %214 {strides = array<i32>} : memref<288x256xbf16, #tpu.memory_space<vmem>>, vector<4x256xbf16>,
    %c1_i32_102 = arith.constant 1 : i32
    %216 = tpu.dynamic_rotate %197 by %c1_i32_102 dim 1 : vector<4x256xf32>, i32 -> vector<4x256xf32>
    %217 = vector.extract_strided_slice %0 {offsets = [3, 0], sizes = [1, 256], strides = [1, 1]} : vector<9x256xf32> to vector<1x256xf32>
    %218 = vector.broadcast %217 : vector<1x256xf32> to vector<4x256xf32>
    %219 = arith.mulf %216, %218 : vector<4x256xf32>
    %220 = arith.truncf %219 : vector<4x256xf32> to vector<4x256xbf16>
    %c12_103 = arith.constant 12 : index
    %c0_104 = arith.constant 0 : index
    %221 = vector.load %arg26[%c12_103, %c0_104] : memref<288x256xbf16, #tpu.memory_space<vmem>>, vector<4x256xbf16>
    tpu.vector_store %arg26[%c12_103, %c0_104], %220 {strides = array<i32>} : memref<288x256xbf16, #tpu.memory_space<vmem>>, vector<4x256xbf16>,
    %222 = arith.truncf %197 : vector<4x256xf32> to vector<4x256xbf16>
    %c16_105 = arith.constant 16 : index
    %c0_106 = arith.constant 0 : index
    %223 = vector.load %arg26[%c16_105, %c0_106] : memref<288x256xbf16, #tpu.memory_space<vmem>>, vector<4x256xbf16>
    tpu.vector_store %arg26[%c16_105, %c0_106], %222 {strides = array<i32>} : memref<288x256xbf16, #tpu.memory_space<vmem>>, vector<4x256xbf16>,
    %c255_i32_107 = arith.constant 255 : i32
    %224 = tpu.dynamic_rotate %197 by %c255_i32_107 dim 1 : vector<4x256xf32>, i32 -> vector<4x256xf32>
    %225 = vector.extract_strided_slice %0 {offsets = [5, 0], sizes = [1, 256], strides = [1, 1]} : vector<9x256xf32> to vector<1x256xf32>
    %226 = vector.broadcast %225 : vector<1x256xf32> to vector<4x256xf32>
    %227 = arith.mulf %224, %226 : vector<4x256xf32>
    %228 = arith.truncf %227 : vector<4x256xf32> to vector<4x256xbf16>
    %c20_108 = arith.constant 20 : index
    %c0_109 = arith.constant 0 : index
    %229 = vector.load %arg26[%c20_108, %c0_109] : memref<288x256xbf16, #tpu.memory_space<vmem>>, vector<4x256xbf16>
    tpu.vector_store %arg26[%c20_108, %c0_109], %228 {strides = array<i32>} : memref<288x256xbf16, #tpu.memory_space<vmem>>, vector<4x256xbf16>,
    %c241_i32_110 = arith.constant 241 : i32
    %230 = tpu.dynamic_rotate %197 by %c241_i32_110 dim 1 : vector<4x256xf32>, i32 -> vector<4x256xf32>
    %231 = vector.extract_strided_slice %0 {offsets = [6, 0], sizes = [1, 256], strides = [1, 1]} : vector<9x256xf32> to vector<1x256xf32>
    %232 = vector.broadcast %231 : vector<1x256xf32> to vector<4x256xf32>
    %233 = arith.mulf %230, %232 : vector<4x256xf32>
    %234 = arith.truncf %233 : vector<4x256xf32> to vector<4x256xbf16>
    %c24_111 = arith.constant 24 : index
    %c0_112 = arith.constant 0 : index
    %235 = vector.load %arg26[%c24_111, %c0_112] : memref<288x256xbf16, #tpu.memory_space<vmem>>, vector<4x256xbf16>
    tpu.vector_store %arg26[%c24_111, %c0_112], %234 {strides = array<i32>} : memref<288x256xbf16, #tpu.memory_space<vmem>>, vector<4x256xbf16>,
    %c240_i32_113 = arith.constant 240 : i32
    %236 = tpu.dynamic_rotate %197 by %c240_i32_113 dim 1 : vector<4x256xf32>, i32 -> vector<4x256xf32>
    %237 = vector.extract_strided_slice %0 {offsets = [7, 0], sizes = [1, 256], strides = [1, 1]} : vector<9x256xf32> to vector<1x256xf32>
    %238 = vector.broadcast %237 : vector<1x256xf32> to vector<4x256xf32>
    %239 = arith.mulf %236, %238 : vector<4x256xf32>
    %240 = arith.truncf %239 : vector<4x256xf32> to vector<4x256xbf16>
    %c28_114 = arith.constant 28 : index
    %c0_115 = arith.constant 0 : index
    %241 = vector.load %arg26[%c28_114, %c0_115] : memref<288x256xbf16, #tpu.memory_space<vmem>>, vector<4x256xbf16>
    tpu.vector_store %arg26[%c28_114, %c0_115], %240 {strides = array<i32>} : memref<288x256xbf16, #tpu.memory_space<vmem>>, vector<4x256xbf16>,
    %c239_i32_116 = arith.constant 239 : i32
    %242 = tpu.dynamic_rotate %197 by %c239_i32_116 dim 1 : vector<4x256xf32>, i32 -> vector<4x256xf32>
    %243 = vector.extract_strided_slice %0 {offsets = [8, 0], sizes = [1, 256], strides = [1, 1]} : vector<9x256xf32> to vector<1x256xf32>
    %244 = vector.broadcast %243 : vector<1x256xf32> to vector<4x256xf32>
    %245 = arith.mulf %242, %244 : vector<4x256xf32>
    %246 = arith.truncf %245 : vector<4x256xf32> to vector<4x256xbf16>
    %c32_117 = arith.constant 32 : index
    %c0_118 = arith.constant 0 : index
    %247 = vector.load %arg26[%c32_117, %c0_118] : memref<288x256xbf16, #tpu.memory_space<vmem>>, vector<4x256xbf16>
    tpu.vector_store %arg26[%c32_117, %c0_118], %246 {strides = array<i32>} : memref<288x256xbf16, #tpu.memory_space<vmem>>, vector<4x256xbf16>,
    %c0_119 = arith.constant 0 : index
    %c0_120 = arith.constant 0 : index
    %248 = vector.load %arg26[%c0_119, %c0_120] : memref<288x256xbf16, #tpu.memory_space<vmem>>, vector<36x256xbf16>
    %c0_121 = arith.constant 0 : index
    %c0_122 = arith.constant 0 : index
    %249 = vector.load %arg17[%c0_121, %c0_122] : memref<32x36xbf16, #tpu.memory_space<vmem>>, vector<32x36xbf16>
    %cst_123 = arith.constant dense<0.000000e+00> : vector<32x256xf32>
    %250 = tpu.matmul %249, %248, %cst_123 {dimension_numbers = #tpu.dot_dimension_numbers<[1], [0], [0], [1], [0, 0, 1, 1], [], []>} : vector<32x36xbf16>, vector<36x256xbf16>, vector<32x256xf32> -> vector<32x256xf32>
    %c0_124 = arith.constant 0 : index
    %c0_125 = arith.constant 0 : index
    %251 = vector.load %arg18[%c0_124, %c0_125] : memref<32x1xf32, #tpu.memory_space<vmem>>, vector<32x1xf32>
    %252 = vector.broadcast %251 : vector<32x1xf32> to vector<32x256xf32>
    %253 = arith.addf %250, %252 : vector<32x256xf32>
    %c0_126 = arith.constant 0 : index
    %c0_127 = arith.constant 0 : index
    %254 = vector.load %arg4[%c0_126, %c0_127] : memref<32x32xf32, #tpu.memory_space<vmem>>, vector<32x32xf32>
    %cst_128 = arith.constant dense<0.000000e+00> : vector<32xf32>
    %255 = vector.multi_reduction <add>, %253, %cst_128 [1] : vector<32x256xf32> to vector<32xf32>
    %256 = vector.shape_cast %255 : vector<32xf32> to vector<32x1xf32>
    %cst_129 = arith.constant dense<0.000000e+00> : vector<32x1xf32>
    %257 = tpu.matmul %254, %256, %cst_129 {dimension_numbers = #tpu.dot_dimension_numbers<[1], [0], [0], [1], [0, 0, 1, 1], [], []>} : vector<32x32xf32>, vector<32x1xf32>, vector<32x1xf32> -> vector<32x1xf32>
    %cst_130 = arith.constant 1.024000e+03 : f32
    %258 = vector.broadcast %cst_130 : f32 to vector<32x1xf32>
    %259 = arith.divf %257, %258 : vector<32x1xf32>
    %260 = vector.broadcast %259 : vector<32x1xf32> to vector<32x256xf32>
    %261 = arith.subf %253, %260 : vector<32x256xf32>
    %262 = arith.mulf %261, %261 : vector<32x256xf32>
    %cst_131 = arith.constant dense<0.000000e+00> : vector<32xf32>
    %263 = vector.multi_reduction <add>, %262, %cst_131 [1] : vector<32x256xf32> to vector<32xf32>
    %264 = vector.shape_cast %263 : vector<32xf32> to vector<32x1xf32>
    %cst_132 = arith.constant dense<0.000000e+00> : vector<32x1xf32>
    %265 = tpu.matmul %254, %264, %cst_132 {dimension_numbers = #tpu.dot_dimension_numbers<[1], [0], [0], [1], [0, 0, 1, 1], [], []>} : vector<32x32xf32>, vector<32x1xf32>, vector<32x1xf32> -> vector<32x1xf32>
    %cst_133 = arith.constant 1.024000e+03 : f32
    %266 = vector.broadcast %cst_133 : f32 to vector<32x1xf32>
    %267 = arith.divf %265, %266 : vector<32x1xf32>
    %cst_134 = arith.constant 9.99999974E-6 : f32
    %268 = vector.broadcast %cst_134 : f32 to vector<32x1xf32>
    %269 = arith.addf %267, %268 : vector<32x1xf32>
    %270 = math.rsqrt %269 : vector<32x1xf32>
    %271 = vector.broadcast %270 : vector<32x1xf32> to vector<32x256xf32>
    %272 = arith.mulf %261, %271 : vector<32x256xf32>
    %c0_135 = arith.constant 0 : index
    %c0_136 = arith.constant 0 : index
    %273 = vector.load %arg19[%c0_135, %c0_136] : memref<32x1xf32, #tpu.memory_space<vmem>>, vector<32x1xf32>
    %274 = vector.broadcast %273 : vector<32x1xf32> to vector<32x256xf32>
    %275 = arith.mulf %272, %274 : vector<32x256xf32>
    %c0_137 = arith.constant 0 : index
    %c0_138 = arith.constant 0 : index
    %276 = vector.load %arg20[%c0_137, %c0_138] : memref<32x1xf32, #tpu.memory_space<vmem>>, vector<32x1xf32>
    %277 = vector.broadcast %276 : vector<32x1xf32> to vector<32x256xf32>
    %278 = arith.addf %275, %277 : vector<32x256xf32>
    %c17_i32_139 = arith.constant 17 : i32
    %279 = tpu.dynamic_rotate %278 by %c17_i32_139 dim 1 : vector<32x256xf32>, i32 -> vector<32x256xf32>
    %280 = vector.extract_strided_slice %0 {offsets = [0, 0], sizes = [1, 256], strides = [1, 1]} : vector<9x256xf32> to vector<1x256xf32>
    %281 = vector.broadcast %280 : vector<1x256xf32> to vector<32x256xf32>
    %282 = arith.mulf %279, %281 : vector<32x256xf32>
    %283 = arith.truncf %282 : vector<32x256xf32> to vector<32x256xbf16>
    %c0_140 = arith.constant 0 : index
    %c0_141 = arith.constant 0 : index
    %284 = vector.load %arg26[%c0_140, %c0_141] : memref<288x256xbf16, #tpu.memory_space<vmem>>, vector<32x256xbf16>
    tpu.vector_store %arg26[%c0_140, %c0_141], %283 {strides = array<i32>} : memref<288x256xbf16, #tpu.memory_space<vmem>>, vector<32x256xbf16>,
    %c16_i32_142 = arith.constant 16 : i32
    %285 = tpu.dynamic_rotate %278 by %c16_i32_142 dim 1 : vector<32x256xf32>, i32 -> vector<32x256xf32>
    %286 = vector.extract_strided_slice %0 {offsets = [1, 0], sizes = [1, 256], strides = [1, 1]} : vector<9x256xf32> to vector<1x256xf32>
    %287 = vector.broadcast %286 : vector<1x256xf32> to vector<32x256xf32>
    %288 = arith.mulf %285, %287 : vector<32x256xf32>
    %289 = arith.truncf %288 : vector<32x256xf32> to vector<32x256xbf16>
    %c32_143 = arith.constant 32 : index
    %c0_144 = arith.constant 0 : index
    %290 = vector.load %arg26[%c32_143, %c0_144] : memref<288x256xbf16, #tpu.memory_space<vmem>>, vector<32x256xbf16>
    tpu.vector_store %arg26[%c32_143, %c0_144], %289 {strides = array<i32>} : memref<288x256xbf16, #tpu.memory_space<vmem>>, vector<32x256xbf16>,
    %c15_i32_145 = arith.constant 15 : i32
    %291 = tpu.dynamic_rotate %278 by %c15_i32_145 dim 1 : vector<32x256xf32>, i32 -> vector<32x256xf32>
    %292 = vector.extract_strided_slice %0 {offsets = [2, 0], sizes = [1, 256], strides = [1, 1]} : vector<9x256xf32> to vector<1x256xf32>
    %293 = vector.broadcast %292 : vector<1x256xf32> to vector<32x256xf32>
    %294 = arith.mulf %291, %293 : vector<32x256xf32>
    %295 = arith.truncf %294 : vector<32x256xf32> to vector<32x256xbf16>
    %c64_146 = arith.constant 64 : index
    %c0_147 = arith.constant 0 : index
    %296 = vector.load %arg26[%c64_146, %c0_147] : memref<288x256xbf16, #tpu.memory_space<vmem>>, vector<32x256xbf16>
    tpu.vector_store %arg26[%c64_146, %c0_147], %295 {strides = array<i32>} : memref<288x256xbf16, #tpu.memory_space<vmem>>, vector<32x256xbf16>,
    %c1_i32_148 = arith.constant 1 : i32
    %297 = tpu.dynamic_rotate %278 by %c1_i32_148 dim 1 : vector<32x256xf32>, i32 -> vector<32x256xf32>
    %298 = vector.extract_strided_slice %0 {offsets = [3, 0], sizes = [1, 256], strides = [1, 1]} : vector<9x256xf32> to vector<1x256xf32>
    %299 = vector.broadcast %298 : vector<1x256xf32> to vector<32x256xf32>
    %300 = arith.mulf %297, %299 : vector<32x256xf32>
    %301 = arith.truncf %300 : vector<32x256xf32> to vector<32x256xbf16>
    %c96_149 = arith.constant 96 : index
    %c0_150 = arith.constant 0 : index
    %302 = vector.load %arg26[%c96_149, %c0_150] : memref<288x256xbf16, #tpu.memory_space<vmem>>, vector<32x256xbf16>
    tpu.vector_store %arg26[%c96_149, %c0_150], %301 {strides = array<i32>} : memref<288x256xbf16, #tpu.memory_space<vmem>>, vector<32x256xbf16>,
    %303 = arith.truncf %278 : vector<32x256xf32> to vector<32x256xbf16>
    %c128_151 = arith.constant 128 : index
    %c0_152 = arith.constant 0 : index
    %304 = vector.load %arg26[%c128_151, %c0_152] : memref<288x256xbf16, #tpu.memory_space<vmem>>, vector<32x256xbf16>
    tpu.vector_store %arg26[%c128_151, %c0_152], %303 {strides = array<i32>} : memref<288x256xbf16, #tpu.memory_space<vmem>>, vector<32x256xbf16>,
    %c255_i32_153 = arith.constant 255 : i32
    %305 = tpu.dynamic_rotate %278 by %c255_i32_153 dim 1 : vector<32x256xf32>, i32 -> vector<32x256xf32>
    %306 = vector.extract_strided_slice %0 {offsets = [5, 0], sizes = [1, 256], strides = [1, 1]} : vector<9x256xf32> to vector<1x256xf32>
    %307 = vector.broadcast %306 : vector<1x256xf32> to vector<32x256xf32>
    %308 = arith.mulf %305, %307 : vector<32x256xf32>
    %309 = arith.truncf %308 : vector<32x256xf32> to vector<32x256xbf16>
    %c160_154 = arith.constant 160 : index
    %c0_155 = arith.constant 0 : index
    %310 = vector.load %arg26[%c160_154, %c0_155] : memref<288x256xbf16, #tpu.memory_space<vmem>>, vector<32x256xbf16>
    tpu.vector_store %arg26[%c160_154, %c0_155], %309 {strides = array<i32>} : memref<288x256xbf16, #tpu.memory_space<vmem>>, vector<32x256xbf16>,
    %c241_i32_156 = arith.constant 241 : i32
    %311 = tpu.dynamic_rotate %278 by %c241_i32_156 dim 1 : vector<32x256xf32>, i32 -> vector<32x256xf32>
    %312 = vector.extract_strided_slice %0 {offsets = [6, 0], sizes = [1, 256], strides = [1, 1]} : vector<9x256xf32> to vector<1x256xf32>
    %313 = vector.broadcast %312 : vector<1x256xf32> to vector<32x256xf32>
    %314 = arith.mulf %311, %313 : vector<32x256xf32>
    %315 = arith.truncf %314 : vector<32x256xf32> to vector<32x256xbf16>
    %c192_157 = arith.constant 192 : index
    %c0_158 = arith.constant 0 : index
    %316 = vector.load %arg26[%c192_157, %c0_158] : memref<288x256xbf16, #tpu.memory_space<vmem>>, vector<32x256xbf16>
    tpu.vector_store %arg26[%c192_157, %c0_158], %315 {strides = array<i32>} : memref<288x256xbf16, #tpu.memory_space<vmem>>, vector<32x256xbf16>,
    %c240_i32_159 = arith.constant 240 : i32
    %317 = tpu.dynamic_rotate %278 by %c240_i32_159 dim 1 : vector<32x256xf32>, i32 -> vector<32x256xf32>
    %318 = vector.extract_strided_slice %0 {offsets = [7, 0], sizes = [1, 256], strides = [1, 1]} : vector<9x256xf32> to vector<1x256xf32>
    %319 = vector.broadcast %318 : vector<1x256xf32> to vector<32x256xf32>
    %320 = arith.mulf %317, %319 : vector<32x256xf32>
    %321 = arith.truncf %320 : vector<32x256xf32> to vector<32x256xbf16>
    %c224_160 = arith.constant 224 : index
    %c0_161 = arith.constant 0 : index
    %322 = vector.load %arg26[%c224_160, %c0_161] : memref<288x256xbf16, #tpu.memory_space<vmem>>, vector<32x256xbf16>
    tpu.vector_store %arg26[%c224_160, %c0_161], %321 {strides = array<i32>} : memref<288x256xbf16, #tpu.memory_space<vmem>>, vector<32x256xbf16>,
    %c239_i32_162 = arith.constant 239 : i32
    %323 = tpu.dynamic_rotate %278 by %c239_i32_162 dim 1 : vector<32x256xf32>, i32 -> vector<32x256xf32>
    %324 = vector.extract_strided_slice %0 {offsets = [8, 0], sizes = [1, 256], strides = [1, 1]} : vector<9x256xf32> to vector<1x256xf32>
    %325 = vector.broadcast %324 : vector<1x256xf32> to vector<32x256xf32>
    %326 = arith.mulf %323, %325 : vector<32x256xf32>
    %327 = arith.truncf %326 : vector<32x256xf32> to vector<32x256xbf16>
    %c256_163 = arith.constant 256 : index
    %c0_164 = arith.constant 0 : index
    %328 = vector.load %arg26[%c256_163, %c0_164] : memref<288x256xbf16, #tpu.memory_space<vmem>>, vector<32x256xbf16>
    tpu.vector_store %arg26[%c256_163, %c0_164], %327 {strides = array<i32>} : memref<288x256xbf16, #tpu.memory_space<vmem>>, vector<32x256xbf16>,
    %c0_165 = arith.constant 0 : index
    %c0_166 = arith.constant 0 : index
    %329 = vector.load %arg26[%c0_165, %c0_166] : memref<288x256xbf16, #tpu.memory_space<vmem>>, vector<288x256xbf16>
    %c0_167 = arith.constant 0 : index
    %c0_168 = arith.constant 0 : index
    %330 = vector.load %arg21[%c0_167, %c0_168] : memref<4x288xbf16, #tpu.memory_space<vmem>>, vector<4x288xbf16>
    %cst_169 = arith.constant dense<0.000000e+00> : vector<4x256xf32>
    %331 = tpu.matmul %330, %329, %cst_169 {dimension_numbers = #tpu.dot_dimension_numbers<[1], [0], [0], [1], [0, 0, 1, 1], [], []>} : vector<4x288xbf16>, vector<288x256xbf16>, vector<4x256xf32> -> vector<4x256xf32>
    %c0_170 = arith.constant 0 : index
    %c0_171 = arith.constant 0 : index
    %332 = vector.load %arg22[%c0_170, %c0_171] : memref<4x1xf32, #tpu.memory_space<vmem>>, vector<4x1xf32>
    %333 = vector.broadcast %332 : vector<4x1xf32> to vector<4x256xf32>
    %334 = arith.addf %331, %333 : vector<4x256xf32>
    %c0_172 = arith.constant 0 : index
    %c0_173 = arith.constant 0 : index
    %c0_174 = arith.constant 0 : index
    %335 = vector.load %arg23[%c0_172, %c0_173, %c0_174] : memref<1x4x256xf32, #tpu.memory_space<vmem>>, vector<1x4x256xf32>
    %336 = vector.shape_cast %335 : vector<1x4x256xf32> to vector<4x256xf32>
    %337 = vector.shape_cast %334 : vector<4x256xf32> to vector<1x4x256xf32>
    tpu.vector_store %arg23[%c0_172, %c0_173, %c0_174], %337 {strides = array<i32>} : memref<1x4x256xf32, #tpu.memory_space<vmem>>, vector<1x4x256xf32>,
    return
  }
  func.func @transform_0(%arg0: i32) -> (i32, i32, i32) {
    %c0_i32 = arith.constant 0 : i32
    %c0_i32_0 = arith.constant 0 : i32
    %c0_i32_1 = arith.constant 0 : i32
    return %arg0, %c0_i32, %c0_i32_0 : i32, i32, i32
  }
  func.func @transform_1(%arg0: i32) -> (i32, i32) {
    %c0_i32 = arith.constant 0 : i32
    %c0_i32_0 = arith.constant 0 : i32
    %c0_i32_1 = arith.constant 0 : i32
    return %c0_i32, %c0_i32_0 : i32, i32
  }
  func.func @transform_2(%arg0: i32) -> (i32, i32) {
    %c0_i32 = arith.constant 0 : i32
    %c0_i32_0 = arith.constant 0 : i32
    %c0_i32_1 = arith.constant 0 : i32
    return %c0_i32, %c0_i32_0 : i32, i32
  }
  func.func @transform_3(%arg0: i32) -> (i32, i32) {
    %c0_i32 = arith.constant 0 : i32
    %c0_i32_0 = arith.constant 0 : i32
    %c0_i32_1 = arith.constant 0 : i32
    return %c0_i32, %c0_i32_0 : i32, i32
  }
  func.func @transform_4(%arg0: i32) -> (i32, i32) {
    %c0_i32 = arith.constant 0 : i32
    %c0_i32_0 = arith.constant 0 : i32
    %c0_i32_1 = arith.constant 0 : i32
    return %c0_i32, %c0_i32_0 : i32, i32
  }
  func.func @transform_5(%arg0: i32) -> (i32, i32) {
    %c0_i32 = arith.constant 0 : i32
    %c0_i32_0 = arith.constant 0 : i32
    %c0_i32_1 = arith.constant 0 : i32
    return %c0_i32, %c0_i32_0 : i32, i32
  }
  func.func @transform_6(%arg0: i32) -> (i32, i32) {
    %c0_i32 = arith.constant 0 : i32
    %c0_i32_0 = arith.constant 0 : i32
    %c0_i32_1 = arith.constant 0 : i32
    return %c0_i32, %c0_i32_0 : i32, i32
  }
  func.func @transform_7(%arg0: i32) -> (i32, i32) {
    %c0_i32 = arith.constant 0 : i32
    %c0_i32_0 = arith.constant 0 : i32
    %c0_i32_1 = arith.constant 0 : i32
    return %c0_i32, %c0_i32_0 : i32, i32
  }
  func.func @transform_8(%arg0: i32) -> (i32, i32) {
    %c0_i32 = arith.constant 0 : i32
    %c0_i32_0 = arith.constant 0 : i32
    %c0_i32_1 = arith.constant 0 : i32
    return %c0_i32, %c0_i32_0 : i32, i32
  }
  func.func @transform_9(%arg0: i32) -> (i32, i32) {
    %c0_i32 = arith.constant 0 : i32
    %c0_i32_0 = arith.constant 0 : i32
    %c0_i32_1 = arith.constant 0 : i32
    return %c0_i32, %c0_i32_0 : i32, i32
  }
  func.func @transform_10(%arg0: i32) -> (i32, i32) {
    %c0_i32 = arith.constant 0 : i32
    %c0_i32_0 = arith.constant 0 : i32
    %c0_i32_1 = arith.constant 0 : i32
    return %c0_i32, %c0_i32_0 : i32, i32
  }
  func.func @transform_11(%arg0: i32) -> (i32, i32) {
    %c0_i32 = arith.constant 0 : i32
    %c0_i32_0 = arith.constant 0 : i32
    %c0_i32_1 = arith.constant 0 : i32
    return %c0_i32, %c0_i32_0 : i32, i32
  }
  func.func @transform_12(%arg0: i32) -> (i32, i32) {
    %c0_i32 = arith.constant 0 : i32
    %c0_i32_0 = arith.constant 0 : i32
    %c0_i32_1 = arith.constant 0 : i32
    return %c0_i32, %c0_i32_0 : i32, i32
  }
  func.func @transform_13(%arg0: i32) -> (i32, i32) {
    %c0_i32 = arith.constant 0 : i32
    %c0_i32_0 = arith.constant 0 : i32
    %c0_i32_1 = arith.constant 0 : i32
    return %c0_i32, %c0_i32_0 : i32, i32
  }
  func.func @transform_14(%arg0: i32) -> (i32, i32) {
    %c0_i32 = arith.constant 0 : i32
    %c0_i32_0 = arith.constant 0 : i32
    %c0_i32_1 = arith.constant 0 : i32
    return %c0_i32, %c0_i32_0 : i32, i32
  }
  func.func @transform_15(%arg0: i32) -> (i32, i32) {
    %c0_i32 = arith.constant 0 : i32
    %c0_i32_0 = arith.constant 0 : i32
    %c0_i32_1 = arith.constant 0 : i32
    return %c0_i32, %c0_i32_0 : i32, i32
  }
  func.func @transform_16(%arg0: i32) -> (i32, i32) {
    %c0_i32 = arith.constant 0 : i32
    %c0_i32_0 = arith.constant 0 : i32
    %c0_i32_1 = arith.constant 0 : i32
    return %c0_i32, %c0_i32_0 : i32, i32
  }
  func.func @transform_17(%arg0: i32) -> (i32, i32) {
    %c0_i32 = arith.constant 0 : i32
    %c0_i32_0 = arith.constant 0 : i32
    %c0_i32_1 = arith.constant 0 : i32
    return %c0_i32, %c0_i32_0 : i32, i32
  }
  func.func @transform_18(%arg0: i32) -> (i32, i32) {
    %c0_i32 = arith.constant 0 : i32
    %c0_i32_0 = arith.constant 0 : i32
    %c0_i32_1 = arith.constant 0 : i32
    return %c0_i32, %c0_i32_0 : i32, i32
  }
  func.func @transform_19(%arg0: i32) -> (i32, i32) {
    %c0_i32 = arith.constant 0 : i32
    %c0_i32_0 = arith.constant 0 : i32
    %c0_i32_1 = arith.constant 0 : i32
    return %c0_i32, %c0_i32_0 : i32, i32
  }
  func.func @transform_20(%arg0: i32) -> (i32, i32) {
    %c0_i32 = arith.constant 0 : i32
    %c0_i32_0 = arith.constant 0 : i32
    %c0_i32_1 = arith.constant 0 : i32
    return %c0_i32, %c0_i32_0 : i32, i32
  }
  func.func @transform_21(%arg0: i32) -> (i32, i32) {
    %c0_i32 = arith.constant 0 : i32
    %c0_i32_0 = arith.constant 0 : i32
    %c0_i32_1 = arith.constant 0 : i32
    return %c0_i32, %c0_i32_0 : i32, i32
  }
  func.func @transform_22(%arg0: i32) -> (i32, i32, i32) {
    %c0_i32 = arith.constant 0 : i32
    %c0_i32_0 = arith.constant 0 : i32
    %c0_i32_1 = arith.constant 0 : i32
    return %arg0, %c0_i32, %c0_i32_0 : i32, i32, i32
  }
  func.func @transform_23(%arg0: i32) -> (i32, i32, i32) {
    %c0_i32 = arith.constant 0 : i32
    %c0_i32_0 = arith.constant 0 : i32
    %c0_i32_1 = arith.constant 0 : i32
    return %arg0, %c0_i32, %c0_i32_0 : i32, i32, i32
  }
  func.func @transform_24(%arg0: i32) -> (i32, i32, i32) {
    %c0_i32 = arith.constant 0 : i32
    %c0_i32_0 = arith.constant 0 : i32
    %c0_i32_1 = arith.constant 0 : i32
    return %arg0, %c0_i32, %c0_i32_0 : i32, i32, i32
  }
}

</mosaic_0001>

<llo_original>
// kernel: _lambda_.1
$region0: #{_lambda_.1}
  #allocation0 [shape = 'u32[]', space=smem, size = 0x4, offset = 0x4, fixed_abs, tag = 'smem constant byte address 0x4 - core index']
  #allocation1 [shape = 'u32[144,128]{1,0:T(1,128)}', space=vmem, size = 0x12000, scoped, tag = 'internal scratch']
  #allocation2 [shape = 'bf16[288,256]{1,0:T(16,128)(2,1)}', space=vmem, size = 0x24000, scoped, tag = 'scratch operand']
  %s0 = inlined_call_operand.vmem [shape: f32[2,4,256], index: 0, kind: input, shape index: {}]
  %s1 = inlined_call_operand.vmem [shape: f32[9,256], index: 1, kind: input, shape index: {}]
  %s2 = inlined_call_operand.vmem [shape: f32[32,32], index: 2, kind: input, shape index: {}, may-alias: {2,3}]
  %s3 = inlined_call_operand.vmem [shape: f32[32,32], index: 3, kind: input, shape index: {}, may-alias: {2,3}]
  %s4 = inlined_call_operand.vmem [shape: bf16[32,36], index: 4, kind: input, shape index: {}]
  %s5 = inlined_call_operand.vmem [shape: f32[32,1], index: 5, kind: input, shape index: {}]
  %s6 = inlined_call_operand.vmem [shape: f32[32,1], index: 6, kind: input, shape index: {}]
  %s7 = inlined_call_operand.vmem [shape: f32[32,1], index: 7, kind: input, shape index: {}]
  %s8 = inlined_call_operand.vmem [shape: bf16[4,288], index: 8, kind: input, shape index: {}]
  %s9 = inlined_call_operand.vmem [shape: f32[4,1], index: 9, kind: input, shape index: {}]
  %s10 = inlined_call_operand.vmem [shape: f32[4,4], index: 10, kind: input, shape index: {}]
  %s11 = inlined_call_operand.vmem [shape: f32[4,1], index: 11, kind: input, shape index: {}]
  %s12 = inlined_call_operand.vmem [shape: f32[16,4], index: 12, kind: input, shape index: {}]
  %s13 = inlined_call_operand.vmem [shape: f32[4,16], index: 13, kind: input, shape index: {}]
  %s14 = inlined_call_operand.vmem [shape: f32[4,4], index: 14, kind: input, shape index: {}]
  %s15 = inlined_call_operand.vmem [shape: f32[4,1], index: 15, kind: input, shape index: {}]
  %s16 = inlined_call_operand.vmem [shape: bf16[32,36], index: 16, kind: input, shape index: {}]
  %s17 = inlined_call_operand.vmem [shape: f32[32,1], index: 17, kind: input, shape index: {}]
  %s18 = inlined_call_operand.vmem [shape: f32[32,1], index: 18, kind: input, shape index: {}]
  %s19 = inlined_call_operand.vmem [shape: f32[32,1], index: 19, kind: input, shape index: {}]
  %s20 = inlined_call_operand.vmem [shape: bf16[4,288], index: 20, kind: input, shape index: {}]
  %s21 = inlined_call_operand.vmem [shape: f32[4,1], index: 21, kind: input, shape index: {}]
  %s22 = inlined_call_operand.vmem [shape: f32[2,4,256], index: 22, kind: output, shape index: {0}]
  %s23 = inlined_call_operand.vmem [shape: f32[2,4,256], index: 23, kind: output, shape index: {1}]
  %s24 = inlined_call_operand.vmem [shape: f32[2,1,1], index: 24, kind: output, shape index: {2}]
  %25 = xla_tuple %s22, %s23, %s24
  %s26 = sld [smem:[#allocation0]]
  $region137: #{_lambda_.1} parent=0
    _
  %s28 = ssub.s32 1, %s26
  %s29 = scalar_select 0, %s28, %s26
  loop: start=0, step=1, limit=4
  $region2: #{_lambda_.1} parent=0 // loop_pre_header
    _
  $region3: #{_lambda_.1} parent=0 // loop_header
    %s31 = sphi 0, %s35
    %p32 = scmp.ge.s32.totalorder %s31, 4
    %s41 = sphi 0, %s43
    %s44 = sphi 0, %s41
    %s45 = sphi 0, %s44
    %s61 = sphi 0, %s45
    %s65 = sphi 0, %s65
    %s67 = sphi 0, %s65
    %s68 = sphi 0, %s67
    %s82 = sphi 0, %s68
    %s86 = sphi 0, %s86
    %s88 = sphi 0, %s86
    %s89 = sphi 0, %s88
    %s103 = sphi 0, %s89
    %s107 = sphi 0, %s107
    %s109 = sphi 0, %s107
    %s110 = sphi 0, %s109
    %s124 = sphi 0, %s110
    %s128 = sphi 0, %s128
    %s130 = sphi 0, %s128
    %s131 = sphi 0, %s130
    %s145 = sphi 0, %s131
    %s149 = sphi 0, %s149
    %s151 = sphi 0, %s149
    %s152 = sphi 0, %s151
    %s166 = sphi 0, %s152
    %s170 = sphi 0, %s170
    %s172 = sphi 0, %s170
    %s173 = sphi 0, %s172
    %s187 = sphi 0, %s173
    %s191 = sphi 0, %s191
    %s193 = sphi 0, %s191
    %s194 = sphi 0, %s193
    %s208 = sphi 0, %s194
    %s212 = sphi 0, %s212
    %s214 = sphi 0, %s212
    %s215 = sphi 0, %s214
    %s229 = sphi 0, %s215
    %s233 = sphi 0, %s233
    %s235 = sphi 0, %s233
    %s236 = sphi 0, %s235
    %s250 = sphi 0, %s236
    %s254 = sphi 0, %s254
    %s256 = sphi 0, %s254
    %s257 = sphi 0, %s256
    %s271 = sphi 0, %s257
    %s275 = sphi 0, %s275
    %s277 = sphi 0, %s275
    %s278 = sphi 0, %s277
    %s292 = sphi 0, %s278
    %s296 = sphi 0, %s296
    %s298 = sphi 0, %s296
    %s299 = sphi 0, %s298
    %s313 = sphi 0, %s299
    %s317 = sphi 0, %s317
    %s319 = sphi 0, %s317
    %s320 = sphi 0, %s319
    %s334 = sphi 0, %s320
    %s338 = sphi 0, %s338
    %s340 = sphi 0, %s338
    %s341 = sphi 0, %s340
    %s355 = sphi 0, %s341
    %s359 = sphi 0, %s359
    %s361 = sphi 0, %s359
    %s362 = sphi 0, %s361
    %s376 = sphi 0, %s362
    %s380 = sphi 0, %s380
    %s382 = sphi 0, %s380
    %s383 = sphi 0, %s382
    %s397 = sphi 0, %s383
    %s401 = sphi 0, %s401
    %s403 = sphi 0, %s401
    %s404 = sphi 0, %s403
    %s418 = sphi 0, %s404
    %s422 = sphi 0, %s422
    %s424 = sphi 0, %s422
    %s425 = sphi 0, %s424
    %s439 = sphi 0, %s425
    %s443 = sphi 0, %s443
    %s445 = sphi 0, %s443
    %s446 = sphi 0, %s445
    %s460 = sphi 0, %s446
    %s464 = sphi 0, %s464
    %s466 = sphi 0, %s464
    %s467 = sphi 0, %s466
    %s481 = sphi 0, %s467
    %s485 = sphi 0, %s485
    %s487 = sphi 0, %s485
    %s488 = sphi 0, %s487
    %s502 = sphi 0, %s488
    %s508 = sphi 0, %s510
    %s511 = sphi 0, %s508
    %s512 = sphi 0, %s511
    %s528 = sphi 0, %s512
    %s534 = sphi 0, %s536
    %s537 = sphi 0, %s534
    %s538 = sphi 0, %s537
    %s554 = sphi 0, %s538
    %s560 = sphi 0, %s562
    %s563 = sphi 0, %s560
    %s564 = sphi 0, %s563
    %s580 = sphi 0, %s564
  $region4: #{_lambda_.1} parent=0 // loop_header_branch
    %34 = sbr.rel (%p32) target = $region8
  $region5: #{_lambda_.1} parent=0 // loop_body
    %s36 = ssub.s32 %s31, 1
    %s37 = ssub.s32 %s31, 2
    %s38 = sadd.s32 %s31, 1
    %s39 = ssub.s32 %s31, %s38
    %p40 = scmp.eq.s32.totalorder %s39, 0
    %s42 = sadd.s32 %s41, 1
    %s43 = scalar_select %p40, %s41, %s42
    %p46 = pneg %p40
    %p47 = scmp.eq.s32.totalorder %s31, 1
    %p48 = por %p46, %p47
    %p49 = scmp.ne.s32.totalorder %s41, %s44
    %p50 = scmp.eq.s32.totalorder %s31, 0
    %p51 = por %p49, %p50
    %p52 = scmp.ne.s32.totalorder %s41, %s44
    %p53 = scmp.eq.s32.totalorder %s36, 1
    %p54 = por %p52, %p53
    %p55 = scmp.ne.s32.totalorder %s44, %s45
    %p56 = scmp.eq.s32.totalorder %s36, 0
    %p57 = por %p55, %p56
    %p58 = scmp.ne.s32.totalorder %s44, %s45
    %p59 = scmp.eq.s32.totalorder %s37, 1
    %p60 = por %p58, %p59
    %p62 = scmp.ne.s32.totalorder %s45, %s61
    %p63 = scmp.eq.s32.totalorder %s37, 0
    %p64 = por %p62, %p63
    %s66 = sadd.s32 %s65, 1
    %p69 = scmp.eq.s32.totalorder %s31, 1
    %p70 = scmp.ne.s32.totalorder %s65, %s67
    %p71 = scmp.eq.s32.totalorder %s31, 0
    %p72 = por %p70, %p71
    %p73 = scmp.ne.s32.totalorder %s65, %s67
    %p74 = scmp.eq.s32.totalorder %s36, 1
    %p75 = por %p73, %p74
    %p76 = scmp.ne.s32.totalorder %s67, %s68
    %p77 = scmp.eq.s32.totalorder %s36, 0
    %p78 = por %p76, %p77
    %p79 = scmp.ne.s32.totalorder %s67, %s68
    %p80 = scmp.eq.s32.totalorder %s37, 1
    %p81 = por %p79, %p80
    %p83 = scmp.ne.s32.totalorder %s68, %s82
    %p84 = scmp.eq.s32.totalorder %s37, 0
    %p85 = por %p83, %p84
    %s87 = sadd.s32 %s86, 1
    %p90 = scmp.eq.s32.totalorder %s31, 1
    %p91 = scmp.ne.s32.totalorder %s86, %s88
    %p92 = scmp.eq.s32.totalorder %s31, 0
    %p93 = por %p91, %p92
    %p94 = scmp.ne.s32.totalorder %s86, %s88
    %p95 = scmp.eq.s32.totalorder %s36, 1
    %p96 = por %p94, %p95
    %p97 = scmp.ne.s32.totalorder %s88, %s89
    %p98 = scmp.eq.s32.totalorder %s36, 0
    %p99 = por %p97, %p98
    %p100 = scmp.ne.s32.totalorder %s88, %s89
    %p101 = scmp.eq.s32.totalorder %s37, 1
    %p102 = por %p100, %p101
    %p104 = scmp.ne.s32.totalorder %s89, %s103
    %p105 = scmp.eq.s32.totalorder %s37, 0
    %p106 = por %p104, %p105
    %s108 = sadd.s32 %s107, 1
    %p111 = scmp.eq.s32.totalorder %s31, 1
    %p112 = scmp.ne.s32.totalorder %s107, %s109
    %p113 = scmp.eq.s32.totalorder %s31, 0
    %p114 = por %p112, %p113
    %p115 = scmp.ne.s32.totalorder %s107, %s109
    %p116 = scmp.eq.s32.totalorder %s36, 1
    %p117 = por %p115, %p116
    %p118 = scmp.ne.s32.totalorder %s109, %s110
    %p119 = scmp.eq.s32.totalorder %s36, 0
    %p120 = por %p118, %p119
    %p121 = scmp.ne.s32.totalorder %s109, %s110
    %p122 = scmp.eq.s32.totalorder %s37, 1
    %p123 = por %p121, %p122
    %p125 = scmp.ne.s32.totalorder %s110, %s124
    %p126 = scmp.eq.s32.totalorder %s37, 0
    %p127 = por %p125, %p126
    %s129 = sadd.s32 %s128, 1
    %p132 = scmp.eq.s32.totalorder %s31, 1
    %p133 = scmp.ne.s32.totalorder %s128, %s130
    %p134 = scmp.eq.s32.totalorder %s31, 0
    %p135 = por %p133, %p134
    %p136 = scmp.ne.s32.totalorder %s128, %s130
    %p137 = scmp.eq.s32.totalorder %s36, 1
    %p138 = por %p136, %p137
    %p139 = scmp.ne.s32.totalorder %s130, %s131
    %p140 = scmp.eq.s32.totalorder %s36, 0
    %p141 = por %p139, %p140
    %p142 = scmp.ne.s32.totalorder %s130, %s131
    %p143 = scmp.eq.s32.totalorder %s37, 1
    %p144 = por %p142, %p143
    %p146 = scmp.ne.s32.totalorder %s131, %s145
    %p147 = scmp.eq.s32.totalorder %s37, 0
    %p148 = por %p146, %p147
    %s150 = sadd.s32 %s149, 1
    %p153 = scmp.eq.s32.totalorder %s31, 1
    %p154 = scmp.ne.s32.totalorder %s149, %s151
    %p155 = scmp.eq.s32.totalorder %s31, 0
    %p156 = por %p154, %p155
    %p157 = scmp.ne.s32.totalorder %s149, %s151
    %p158 = scmp.eq.s32.totalorder %s36, 1
    %p159 = por %p157, %p158
    %p160 = scmp.ne.s32.totalorder %s151, %s152
    %p161 = scmp.eq.s32.totalorder %s36, 0
    %p162 = por %p160, %p161
    %p163 = scmp.ne.s32.totalorder %s151, %s152
    %p164 = scmp.eq.s32.totalorder %s37, 1
    %p165 = por %p163, %p164
    %p167 = scmp.ne.s32.totalorder %s152, %s166
    %p168 = scmp.eq.s32.totalorder %s37, 0
    %p169 = por %p167, %p168
    %s171 = sadd.s32 %s170, 1
    %p174 = scmp.eq.s32.totalorder %s31, 1
    %p175 = scmp.ne.s32.totalorder %s170, %s172
    %p176 = scmp.eq.s32.totalorder %s31, 0
    %p177 = por %p175, %p176
    %p178 = scmp.ne.s32.totalorder %s170, %s172
    %p179 = scmp.eq.s32.totalorder %s36, 1
    %p180 = por %p178, %p179
    %p181 = scmp.ne.s32.totalorder %s172, %s173
    %p182 = scmp.eq.s32.totalorder %s36, 0
    %p183 = por %p181, %p182
    %p184 = scmp.ne.s32.totalorder %s172, %s173
    %p185 = scmp.eq.s32.totalorder %s37, 1
    %p186 = por %p184, %p185
    %p188 = scmp.ne.s32.totalorder %s173, %s187
    %p189 = scmp.eq.s32.totalorder %s37, 0
    %p190 = por %p188, %p189
    %s192 = sadd.s32 %s191, 1
    %p195 = scmp.eq.s32.totalorder %s31, 1
    %p196 = scmp.ne.s32.totalorder %s191, %s193
    %p197 = scmp.eq.s32.totalorder %s31, 0
    %p198 = por %p196, %p197
    %p199 = scmp.ne.s32.totalorder %s191, %s193
    %p200 = scmp.eq.s32.totalorder %s36, 1
    %p201 = por %p199, %p200
    %p202 = scmp.ne.s32.totalorder %s193, %s194
    %p203 = scmp.eq.s32.totalorder %s36, 0
    %p204 = por %p202, %p203
    %p205 = scmp.ne.s32.totalorder %s193, %s194
    %p206 = scmp.eq.s32.totalorder %s37, 1
    %p207 = por %p205, %p206
    %p209 = scmp.ne.s32.totalorder %s194, %s208
    %p210 = scmp.eq.s32.totalorder %s37, 0
    %p211 = por %p209, %p210
    %s213 = sadd.s32 %s212, 1
    %p216 = scmp.eq.s32.totalorder %s31, 1
    %p217 = scmp.ne.s32.totalorder %s212, %s214
    %p218 = scmp.eq.s32.totalorder %s31, 0
    %p219 = por %p217, %p218
    %p220 = scmp.ne.s32.totalorder %s212, %s214
    %p221 = scmp.eq.s32.totalorder %s36, 1
    %p222 = por %p220, %p221
    %p223 = scmp.ne.s32.totalorder %s214, %s215
    %p224 = scmp.eq.s32.totalorder %s36, 0
    %p225 = por %p223, %p224
    %p226 = scmp.ne.s32.totalorder %s214, %s215
    %p227 = scmp.eq.s32.totalorder %s37, 1
    %p228 = por %p226, %p227
    %p230 = scmp.ne.s32.totalorder %s215, %s229
    %p231 = scmp.eq.s32.totalorder %s37, 0
    %p232 = por %p230, %p231
    %s234 = sadd.s32 %s233, 1
    %p237 = scmp.eq.s32.totalorder %s31, 1
    %p238 = scmp.ne.s32.totalorder %s233, %s235
    %p239 = scmp.eq.s32.totalorder %s31, 0
    %p240 = por %p238, %p239
    %p241 = scmp.ne.s32.totalorder %s233, %s235
    %p242 = scmp.eq.s32.totalorder %s36, 1
    %p243 = por %p241, %p242
    %p244 = scmp.ne.s32.totalorder %s235, %s236
    %p245 = scmp.eq.s32.totalorder %s36, 0
    %p246 = por %p244, %p245
    %p247 = scmp.ne.s32.totalorder %s235, %s236
    %p248 = scmp.eq.s32.totalorder %s37, 1
    %p249 = por %p247, %p248
    %p251 = scmp.ne.s32.totalorder %s236, %s250
    %p252 = scmp.eq.s32.totalorder %s37, 0
    %p253 = por %p251, %p252
    %s255 = sadd.s32 %s254, 1
    %p258 = scmp.eq.s32.totalorder %s31, 1
    %p259 = scmp.ne.s32.totalorder %s254, %s256
    %p260 = scmp.eq.s32.totalorder %s31, 0
    %p261 = por %p259, %p260
    %p262 = scmp.ne.s32.totalorder %s254, %s256
    %p263 = scmp.eq.s32.totalorder %s36, 1
    %p264 = por %p262, %p263
    %p265 = scmp.ne.s32.totalorder %s256, %s257
    %p266 = scmp.eq.s32.totalorder %s36, 0
    %p267 = por %p265, %p266
    %p268 = scmp.ne.s32.totalorder %s256, %s257
    %p269 = scmp.eq.s32.totalorder %s37, 1
    %p270 = por %p268, %p269
    %p272 = scmp.ne.s32.totalorder %s257, %s271
    %p273 = scmp.eq.s32.totalorder %s37, 0
    %p274 = por %p272, %p273
    %s276 = sadd.s32 %s275, 1
    %p279 = scmp.eq.s32.totalorder %s31, 1
    %p280 = scmp.ne.s32.totalorder %s275, %s277
    %p281 = scmp.eq.s32.totalorder %s31, 0
    %p282 = por %p280, %p281
    %p283 = scmp.ne.s32.totalorder %s275, %s277
    %p284 = scmp.eq.s32.totalorder %s36, 1
    %p285 = por %p283, %p284
    %p286 = scmp.ne.s32.totalorder %s277, %s278
    %p287 = scmp.eq.s32.totalorder %s36, 0
    %p288 = por %p286, %p287
    %p289 = scmp.ne.s32.totalorder %s277, %s278
    %p290 = scmp.eq.s32.totalorder %s37, 1
    %p291 = por %p289, %p290
    %p293 = scmp.ne.s32.totalorder %s278, %s292
    %p294 = scmp.eq.s32.totalorder %s37, 0
    %p295 = por %p293, %p294
    %s297 = sadd.s32 %s296, 1
    %p300 = scmp.eq.s32.totalorder %s31, 1
    %p301 = scmp.ne.s32.totalorder %s296, %s298
    %p302 = scmp.eq.s32.totalorder %s31, 0
    %p303 = por %p301, %p302
    %p304 = scmp.ne.s32.totalorder %s296, %s298
    %p305 = scmp.eq.s32.totalorder %s36, 1
    %p306 = por %p304, %p305
    %p307 = scmp.ne.s32.totalorder %s298, %s299
    %p308 = scmp.eq.s32.totalorder %s36, 0
    %p309 = por %p307, %p308
    %p310 = scmp.ne.s32.totalorder %s298, %s299
    %p311 = scmp.eq.s32.totalorder %s37, 1
    %p312 = por %p310, %p311
    %p314 = scmp.ne.s32.totalorder %s299, %s313
    %p315 = scmp.eq.s32.totalorder %s37, 0
    %p316 = por %p314, %p315
    %s318 = sadd.s32 %s317, 1
    %p321 = scmp.eq.s32.totalorder %s31, 1
    %p322 = scmp.ne.s32.totalorder %s317, %s319
    %p323 = scmp.eq.s32.totalorder %s31, 0
    %p324 = por %p322, %p323
    %p325 = scmp.ne.s32.totalorder %s317, %s319
    %p326 = scmp.eq.s32.totalorder %s36, 1
    %p327 = por %p325, %p326
    %p328 = scmp.ne.s32.totalorder %s319, %s320
    %p329 = scmp.eq.s32.totalorder %s36, 0
    %p330 = por %p328, %p329
    %p331 = scmp.ne.s32.totalorder %s319, %s320
    %p332 = scmp.eq.s32.totalorder %s37, 1
    %p333 = por %p331, %p332
    %p335 = scmp.ne.s32.totalorder %s320, %s334
    %p336 = scmp.eq.s32.totalorder %s37, 0
    %p337 = por %p335, %p336
    %s339 = sadd.s32 %s338, 1
    %p342 = scmp.eq.s32.totalorder %s31, 1
    %p343 = scmp.ne.s32.totalorder %s338, %s340
    %p344 = scmp.eq.s32.totalorder %s31, 0
    %p345 = por %p343, %p344
    %p346 = scmp.ne.s32.totalorder %s338, %s340
    %p347 = scmp.eq.s32.totalorder %s36, 1
    %p348 = por %p346, %p347
    %p349 = scmp.ne.s32.totalorder %s340, %s341
    %p350 = scmp.eq.s32.totalorder %s36, 0
    %p351 = por %p349, %p350
    %p352 = scmp.ne.s32.totalorder %s340, %s341
    %p353 = scmp.eq.s32.totalorder %s37, 1
    %p354 = por %p352, %p353
    %p356 = scmp.ne.s32.totalorder %s341, %s355
    %p357 = scmp.eq.s32.totalorder %s37, 0
    %p358 = por %p356, %p357
    %s360 = sadd.s32 %s359, 1
    %p363 = scmp.eq.s32.totalorder %s31, 1
    %p364 = scmp.ne.s32.totalorder %s359, %s361
    %p365 = scmp.eq.s32.totalorder %s31, 0
    %p366 = por %p364, %p365
    %p367 = scmp.ne.s32.totalorder %s359, %s361
    %p368 = scmp.eq.s32.totalorder %s36, 1
    %p369 = por %p367, %p368
    %p370 = scmp.ne.s32.totalorder %s361, %s362
    %p371 = scmp.eq.s32.totalorder %s36, 0
    %p372 = por %p370, %p371
    %p373 = scmp.ne.s32.totalorder %s361, %s362
    %p374 = scmp.eq.s32.totalorder %s37, 1
    %p375 = por %p373, %p374
    %p377 = scmp.ne.s32.totalorder %s362, %s376
    %p378 = scmp.eq.s32.totalorder %s37, 0
    %p379 = por %p377, %p378
    %s381 = sadd.s32 %s380, 1
    %p384 = scmp.eq.s32.totalorder %s31, 1
    %p385 = scmp.ne.s32.totalorder %s380, %s382
    %p386 = scmp.eq.s32.totalorder %s31, 0
    %p387 = por %p385, %p386
    %p388 = scmp.ne.s32.totalorder %s380, %s382
    %p389 = scmp.eq.s32.totalorder %s36, 1
    %p390 = por %p388, %p389
    %p391 = scmp.ne.s32.totalorder %s382, %s383
    %p392 = scmp.eq.s32.totalorder %s36, 0
    %p393 = por %p391, %p392
    %p394 = scmp.ne.s32.totalorder %s382, %s383
    %p395 = scmp.eq.s32.totalorder %s37, 1
    %p396 = por %p394, %p395
    %p398 = scmp.ne.s32.totalorder %s383, %s397
    %p399 = scmp.eq.s32.totalorder %s37, 0
    %p400 = por %p398, %p399
    %s402 = sadd.s32 %s401, 1
    %p405 = scmp.eq.s32.totalorder %s31, 1
    %p406 = scmp.ne.s32.totalorder %s401, %s403
    %p407 = scmp.eq.s32.totalorder %s31, 0
    %p408 = por %p406, %p407
    %p409 = scmp.ne.s32.totalorder %s401, %s403
    %p410 = scmp.eq.s32.totalorder %s36, 1
    %p411 = por %p409, %p410
    %p412 = scmp.ne.s32.totalorder %s403, %s404
    %p413 = scmp.eq.s32.totalorder %s36, 0
    %p414 = por %p412, %p413
    %p415 = scmp.ne.s32.totalorder %s403, %s404
    %p416 = scmp.eq.s32.totalorder %s37, 1
    %p417 = por %p415, %p416
    %p419 = scmp.ne.s32.totalorder %s404, %s418
    %p420 = scmp.eq.s32.totalorder %s37, 0
    %p421 = por %p419, %p420
    %s423 = sadd.s32 %s422, 1
    %p426 = scmp.eq.s32.totalorder %s31, 1
    %p427 = scmp.ne.s32.totalorder %s422, %s424
    %p428 = scmp.eq.s32.totalorder %s31, 0
    %p429 = por %p427, %p428
    %p430 = scmp.ne.s32.totalorder %s422, %s424
    %p431 = scmp.eq.s32.totalorder %s36, 1
    %p432 = por %p430, %p431
    %p433 = scmp.ne.s32.totalorder %s424, %s425
    %p434 = scmp.eq.s32.totalorder %s36, 0
    %p435 = por %p433, %p434
    %p436 = scmp.ne.s32.totalorder %s424, %s425
    %p437 = scmp.eq.s32.totalorder %s37, 1
    %p438 = por %p436, %p437
    %p440 = scmp.ne.s32.totalorder %s425, %s439
    %p441 = scmp.eq.s32.totalorder %s37, 0
    %p442 = por %p440, %p441
    %s444 = sadd.s32 %s443, 1
    %p447 = scmp.eq.s32.totalorder %s31, 1
    %p448 = scmp.ne.s32.totalorder %s443, %s445
    %p449 = scmp.eq.s32.totalorder %s31, 0
    %p450 = por %p448, %p449
    %p451 = scmp.ne.s32.totalorder %s443, %s445
    %p452 = scmp.eq.s32.totalorder %s36, 1
    %p453 = por %p451, %p452
    %p454 = scmp.ne.s32.totalorder %s445, %s446
    %p455 = scmp.eq.s32.totalorder %s36, 0
    %p456 = por %p454, %p455
    %p457 = scmp.ne.s32.totalorder %s445, %s446
    %p458 = scmp.eq.s32.totalorder %s37, 1
    %p459 = por %p457, %p458
    %p461 = scmp.ne.s32.totalorder %s446, %s460
    %p462 = scmp.eq.s32.totalorder %s37, 0
    %p463 = por %p461, %p462
    %s465 = sadd.s32 %s464, 1
    %p468 = scmp.eq.s32.totalorder %s31, 1
    %p469 = scmp.ne.s32.totalorder %s464, %s466
    %p470 = scmp.eq.s32.totalorder %s31, 0
    %p471 = por %p469, %p470
    %p472 = scmp.ne.s32.totalorder %s464, %s466
    %p473 = scmp.eq.s32.totalorder %s36, 1
    %p474 = por %p472, %p473
    %p475 = scmp.ne.s32.totalorder %s466, %s467
    %p476 = scmp.eq.s32.totalorder %s36, 0
    %p477 = por %p475, %p476
    %p478 = scmp.ne.s32.totalorder %s466, %s467
    %p479 = scmp.eq.s32.totalorder %s37, 1
    %p480 = por %p478, %p479
    %p482 = scmp.ne.s32.totalorder %s467, %s481
    %p483 = scmp.eq.s32.totalorder %s37, 0
    %p484 = por %p482, %p483
    %s486 = sadd.s32 %s485, 1
    %p489 = scmp.eq.s32.totalorder %s31, 1
    %p490 = scmp.ne.s32.totalorder %s485, %s487
    %p491 = scmp.eq.s32.totalorder %s31, 0
    %p492 = por %p490, %p491
    %p493 = scmp.ne.s32.totalorder %s485, %s487
    %p494 = scmp.eq.s32.totalorder %s36, 1
    %p495 = por %p493, %p494
    %p496 = scmp.ne.s32.totalorder %s487, %s488
    %p497 = scmp.eq.s32.totalorder %s36, 0
    %p498 = por %p496, %p497
    %p499 = scmp.ne.s32.totalorder %s487, %s488
    %p500 = scmp.eq.s32.totalorder %s37, 1
    %p501 = por %p499, %p500
    %p503 = scmp.ne.s32.totalorder %s488, %s502
    %p504 = scmp.eq.s32.totalorder %s37, 0
    %p505 = por %p503, %p504
    %s506 = ssub.s32 %s31, %s38
    %p507 = scmp.eq.s32.totalorder %s506, 0
    %s509 = sadd.s32 %s508, 1
    %s510 = scalar_select %p507, %s508, %s509
    %p513 = pneg %p507
    %p514 = scmp.eq.s32.totalorder %s31, 1
    %p515 = por %p513, %p514
    %p516 = scmp.ne.s32.totalorder %s508, %s511
    %p517 = scmp.eq.s32.totalorder %s31, 0
    %p518 = por %p516, %p517
    %p519 = scmp.ne.s32.totalorder %s508, %s511
    %p520 = scmp.eq.s32.totalorder %s36, 1
    %p521 = por %p519, %p520
    %p522 = scmp.ne.s32.totalorder %s511, %s512
    %p523 = scmp.eq.s32.totalorder %s36, 0
    %p524 = por %p522, %p523
    %p525 = scmp.ne.s32.totalorder %s511, %s512
    %p526 = scmp.eq.s32.totalorder %s37, 1
    %p527 = por %p525, %p526
    %p529 = scmp.ne.s32.totalorder %s512, %s528
    %p530 = scmp.eq.s32.totalorder %s37, 0
    %p531 = por %p529, %p530
    %s532 = ssub.s32 %s31, %s38
    %p533 = scmp.eq.s32.totalorder %s532, 0
    %s535 = sadd.s32 %s534, 1
    %s536 = scalar_select %p533, %s534, %s535
    %p539 = pneg %p533
    %p540 = scmp.eq.s32.totalorder %s31, 1
    %p541 = por %p539, %p540
    %p542 = scmp.ne.s32.totalorder %s534, %s537
    %p543 = scmp.eq.s32.totalorder %s31, 0
    %p544 = por %p542, %p543
    %p545 = scmp.ne.s32.totalorder %s534, %s537
    %p546 = scmp.eq.s32.totalorder %s36, 1
    %p547 = por %p545, %p546
    %p548 = scmp.ne.s32.totalorder %s537, %s538
    %p549 = scmp.eq.s32.totalorder %s36, 0
    %p550 = por %p548, %p549
    %p551 = scmp.ne.s32.totalorder %s537, %s538
    %p552 = scmp.eq.s32.totalorder %s37, 1
    %p553 = por %p551, %p552
    %p555 = scmp.ne.s32.totalorder %s538, %s554
    %p556 = scmp.eq.s32.totalorder %s37, 0
    %p557 = por %p555, %p556
    %s558 = ssub.s32 %s31, %s38
    %p559 = scmp.eq.s32.totalorder %s558, 0
    %s561 = sadd.s32 %s560, 1
    %s562 = scalar_select %p559, %s560, %s561
    %p565 = pneg %p559
    %p566 = scmp.eq.s32.totalorder %s31, 1
    %p567 = por %p565, %p566
    %p568 = scmp.ne.s32.totalorder %s560, %s563
    %p569 = scmp.eq.s32.totalorder %s31, 0
    %p570 = por %p568, %p569
    %p571 = scmp.ne.s32.totalorder %s560, %s563
    %p572 = scmp.eq.s32.totalorder %s36, 1
    %p573 = por %p571, %p572
    %p574 = scmp.ne.s32.totalorder %s563, %s564
    %p575 = scmp.eq.s32.totalorder %s36, 0
    %p576 = por %p574, %p575
    %p577 = scmp.ne.s32.totalorder %s563, %s564
    %p578 = scmp.eq.s32.totalorder %s37, 1
    %p579 = por %p577, %p578
    %p581 = scmp.ne.s32.totalorder %s564, %s580
    %p582 = scmp.eq.s32.totalorder %s37, 0
    %p583 = por %p581, %p582
    %p584 = scmp.le.s32.totalorder 1, %s31
    %p585 = scmp.lt.s32.totalorder %s31, 3
    %p586 = pnand %p584, %p585
    %p587 = pneg %p586
    // Predicated region
    $region9: #{_lambda_.1} parent=5 // pred_check
      _
    $region10: #{_lambda_.1} parent=5 // pred_check_branch
      %589 = sbr.rel (%p586) target = $region12
    $region11: #{_lambda_.1} parent=5 // pred_region
      %s590 = ssub.s32 %s31, 1
      // Predicated region
      $region13: #{_lambda_.1} parent=11 // pred_check
        %p591 = pneg %p78
      $region14: #{_lambda_.1} parent=11 // pred_check_branch
        %593 = sbr.rel (%p591) target = $region16
      $region15: #{_lambda_.1} parent=11 // pred_region
        _
      $region16: #{_lambda_.1} parent=11 // pred_fallthru
        _
      // Predicated region
      $region17: #{_lambda_.1} parent=11 // pred_check
        %p594 = pneg %p99
      $region18: #{_lambda_.1} parent=11 // pred_check_branch
        %596 = sbr.rel (%p594) target = $region20
      $region19: #{_lambda_.1} parent=11 // pred_region
        _
      $region20: #{_lambda_.1} parent=11 // pred_fallthru
        _
      // Predicated region
      $region21: #{_lambda_.1} parent=11 // pred_check
        %p597 = pneg %p120
      $region22: #{_lambda_.1} parent=11 // pred_check_branch
        %599 = sbr.rel (%p597) target = $region24
      $region23: #{_lambda_.1} parent=11 // pred_region
        _
      $region24: #{_lambda_.1} parent=11 // pred_fallthru
        _
      // Predicated region
      $region25: #{_lambda_.1} parent=11 // pred_check
        %p600 = pneg %p141
      $region26: #{_lambda_.1} parent=11 // pred_check_branch
        %602 = sbr.rel (%p600) target = $region28
      $region27: #{_lambda_.1} parent=11 // pred_region
        _
      $region28: #{_lambda_.1} parent=11 // pred_fallthru
        _
      // Predicated region
      $region29: #{_lambda_.1} parent=11 // pred_check
        %p603 = pneg %p162
      $region30: #{_lambda_.1} parent=11 // pred_check_branch
        %605 = sbr.rel (%p603) target = $region32
      $region31: #{_lambda_.1} parent=11 // pred_region
        _
      $region32: #{_lambda_.1} parent=11 // pred_fallthru
        _
      // Predicated region
      $region33: #{_lambda_.1} parent=11 // pred_check
        %p606 = pneg %p183
      $region34: #{_lambda_.1} parent=11 // pred_check_branch
        %608 = sbr.rel (%p606) target = $region36
      $region35: #{_lambda_.1} parent=11 // pred_region
        _
      $region36: #{_lambda_.1} parent=11 // pred_fallthru
        _
      // Predicated region
      $region37: #{_lambda_.1} parent=11 // pred_check
        %p609 = pneg %p204
      $region38: #{_lambda_.1} parent=11 // pred_check_branch
        %611 = sbr.rel (%p609) target = $region40
      $region39: #{_lambda_.1} parent=11 // pred_region
        _
      $region40: #{_lambda_.1} parent=11 // pred_fallthru
        _
      // Predicated region
      $region41: #{_lambda_.1} parent=11 // pred_check
        %p612 = pneg %p225
      $region42: #{_lambda_.1} parent=11 // pred_check_branch
        %614 = sbr.rel (%p612) target = $region44
      $region43: #{_lambda_.1} parent=11 // pred_region
        _
      $region44: #{_lambda_.1} parent=11 // pred_fallthru
        _
      // Predicated region
      $region45: #{_lambda_.1} parent=11 // pred_check
        %p615 = pneg %p246
      $region46: #{_lambda_.1} parent=11 // pred_check_branch
        %617 = sbr.rel (%p615) target = $region48
      $region47: #{_lambda_.1} parent=11 // pred_region
        _
      $region48: #{_lambda_.1} parent=11 // pred_fallthru
        _
      // Predicated region
      $region49: #{_lambda_.1} parent=11 // pred_check
        %p618 = pneg %p267
      $region50: #{_lambda_.1} parent=11 // pred_check_branch
        %620 = sbr.rel (%p618) target = $region52
      $region51: #{_lambda_.1} parent=11 // pred_region
        _
      $region52: #{_lambda_.1} parent=11 // pred_fallthru
        _
      // Predicated region
      $region53: #{_lambda_.1} parent=11 // pred_check
        %p621 = pneg %p288
      $region54: #{_lambda_.1} parent=11 // pred_check_branch
        %623 = sbr.rel (%p621) target = $region56
      $region55: #{_lambda_.1} parent=11 // pred_region
        _
      $region56: #{_lambda_.1} parent=11 // pred_fallthru
        _
      // Predicated region
      $region57: #{_lambda_.1} parent=11 // pred_check
        %p624 = pneg %p309
      $region58: #{_lambda_.1} parent=11 // pred_check_branch
        %626 = sbr.rel (%p624) target = $region60
      $region59: #{_lambda_.1} parent=11 // pred_region
        _
      $region60: #{_lambda_.1} parent=11 // pred_fallthru
        _
      // Predicated region
      $region61: #{_lambda_.1} parent=11 // pred_check
        %p627 = pneg %p330
      $region62: #{_lambda_.1} parent=11 // pred_check_branch
        %629 = sbr.rel (%p627) target = $region64
      $region63: #{_lambda_.1} parent=11 // pred_region
        _
      $region64: #{_lambda_.1} parent=11 // pred_fallthru
        _
      // Predicated region
      $region65: #{_lambda_.1} parent=11 // pred_check
        %p630 = pneg %p351
      $region66: #{_lambda_.1} parent=11 // pred_check_branch
        %632 = sbr.rel (%p630) target = $region68
      $region67: #{_lambda_.1} parent=11 // pred_region
        _
      $region68: #{_lambda_.1} parent=11 // pred_fallthru
        _
      // Predicated region
      $region69: #{_lambda_.1} parent=11 // pred_check
        %p633 = pneg %p372
      $region70: #{_lambda_.1} parent=11 // pred_check_branch
        %635 = sbr.rel (%p633) target = $region72
      $region71: #{_lambda_.1} parent=11 // pred_region
        _
      $region72: #{_lambda_.1} parent=11 // pred_fallthru
        _
      // Predicated region
      $region73: #{_lambda_.1} parent=11 // pred_check
        %p636 = pneg %p393
      $region74: #{_lambda_.1} parent=11 // pred_check_branch
        %638 = sbr.rel (%p636) target = $region76
      $region75: #{_lambda_.1} parent=11 // pred_region
        _
      $region76: #{_lambda_.1} parent=11 // pred_fallthru
        _
      // Predicated region
      $region77: #{_lambda_.1} parent=11 // pred_check
        %p639 = pneg %p414
      $region78: #{_lambda_.1} parent=11 // pred_check_branch
        %641 = sbr.rel (%p639) target = $region80
      $region79: #{_lambda_.1} parent=11 // pred_region
        _
      $region80: #{_lambda_.1} parent=11 // pred_fallthru
        _
      // Predicated region
      $region81: #{_lambda_.1} parent=11 // pred_check
        %p642 = pneg %p435
      $region82: #{_lambda_.1} parent=11 // pred_check_branch
        %644 = sbr.rel (%p642) target = $region84
      $region83: #{_lambda_.1} parent=11 // pred_region
        _
      $region84: #{_lambda_.1} parent=11 // pred_fallthru
        _
      // Predicated region
      $region85: #{_lambda_.1} parent=11 // pred_check
        %p645 = pneg %p456
      $region86: #{_lambda_.1} parent=11 // pred_check_branch
        %647 = sbr.rel (%p645) target = $region88
      $region87: #{_lambda_.1} parent=11 // pred_region
        _
      $region88: #{_lambda_.1} parent=11 // pred_fallthru
        _
      // Predicated region
      $region89: #{_lambda_.1} parent=11 // pred_check
        %p648 = pneg %p477
      $region90: #{_lambda_.1} parent=11 // pred_check_branch
        %650 = sbr.rel (%p648) target = $region92
      $region91: #{_lambda_.1} parent=11 // pred_region
        _
      $region92: #{_lambda_.1} parent=11 // pred_fallthru
        _
      // Predicated region
      $region93: #{_lambda_.1} parent=11 // pred_check
        %p651 = pneg %p498
      $region94: #{_lambda_.1} parent=11 // pred_check_branch
        %653 = sbr.rel (%p651) target = $region96
      $region95: #{_lambda_.1} parent=11 // pred_region
        _
      $region96: #{_lambda_.1} parent=11 // pred_fallthru
        _
    $region12: #{_lambda_.1} parent=5 // pred_fallthru
      _
    %p654 = scmp.lt.s32.totalorder %s31, 2
    // Predicated region
    $region97: #{_lambda_.1} parent=5 // pred_check
      %p655 = pneg %p654
    $region98: #{_lambda_.1} parent=5 // pred_check_branch
      %657 = sbr.rel (%p655) target = $region100
    $region99: #{_lambda_.1} parent=5 // pred_region
      // Predicated region
      $region101: #{_lambda_.1} parent=99 // pred_check
        %p658 = pneg %p51
      $region102: #{_lambda_.1} parent=99 // pred_check_branch
        %660 = sbr.rel (%p658) target = $region104
      $region103: #{_lambda_.1} parent=99 // pred_region
        %p661 = scmp.lt.s32.totalorder %s31, 1
        %s662 = scalar_select %p661, %s31, 1
        %s663 = smul.addr %s662, 2
        %s664 = smul.addr %s663, 4
        %s665 = scalar_lea.vmem %s0, %s664
      $region104: #{_lambda_.1} parent=99 // pred_fallthru
        _
    $region100: #{_lambda_.1} parent=5 // pred_fallthru
      _
    %p666 = scmp.le.s32.totalorder 1, %s31
    %p667 = scmp.lt.s32.totalorder %s31, 3
    %p668 = pnand %p666, %p667
    %p669 = pneg %p668
    // Predicated region
    $region105: #{_lambda_.1} parent=5 // pred_check
      _
    $region106: #{_lambda_.1} parent=5 // pred_check_branch
      %671 = sbr.rel (%p668) target = $region108
    $region107: #{_lambda_.1} parent=5 // pred_region
      %s672 = ssub.s32 %s31, 1
      %p673 = scmp.lt.s32.totalorder %s36, 1
      %s674 = scalar_select %p673, %s36, 1
      %s675 = smul.addr %s674, 2
      %s676 = smul.addr %s675, 4
      %s677 = scalar_lea.vmem %s0, %s676
      %p678 = pneg %p57
      %p679 = pneg %p54
      %p680 = pneg %p78
      %p681 = pneg %p75
      %p682 = pneg %p99
      %p683 = pneg %p96
      %p684 = pneg %p120
      %p685 = pneg %p117
      %p686 = pneg %p141
      %p687 = pneg %p138
      %p688 = pneg %p162
      %p689 = pneg %p159
      %p690 = pneg %p183
      %p691 = pneg %p180
      %p692 = pneg %p204
      %p693 = pneg %p201
      %p694 = pneg %p225
      %p695 = pneg %p222
      %p696 = pneg %p246
      %p697 = pneg %p243
      %p698 = pneg %p267
      %p699 = pneg %p264
      %p700 = pneg %p288
      %p701 = pneg %p285
      %p702 = pneg %p309
      %p703 = pneg %p306
      %p704 = pneg %p330
      %p705 = pneg %p327
      %p706 = pneg %p351
      %p707 = pneg %p348
      %p708 = pneg %p372
      %p709 = pneg %p369
      %p710 = pneg %p393
      %p711 = pneg %p390
      %p712 = pneg %p414
      %p713 = pneg %p411
      %p714 = pneg %p435
      %p715 = pneg %p432
      %p716 = pneg %p456
      %p717 = pneg %p453
      %p718 = pneg %p477
      %p719 = pneg %p474
      %p720 = pneg %p498
      %p721 = pneg %p495
      %p722 = pneg %p524
      %p723 = pneg %p521
      %p724 = scmp.lt.s32.totalorder %s36, 1
      %s725 = scalar_select %p724, %s36, 1
      %s726 = smul.addr %s725, 2
      %s727 = smul.addr %s726, 4
      %s728 = scalar_lea.vmem %s22, %s727
      %p729 = pneg %p550
      %p730 = pneg %p547
      %p731 = scmp.lt.s32.totalorder %s36, 1
      %s732 = scalar_select %p731, %s36, 1
      %s733 = smul.addr %s732, 2
      %s734 = smul.addr %s733, 4
      %s735 = scalar_lea.vmem %s23, %s734
      %p736 = pneg %p576
      %p737 = pneg %p573
      %p738 = scmp.lt.s32.totalorder %s36, 1
      %s739 = scalar_select %p738, %s36, 1
      %s740 = scalar_lea.vmem %s24, %s739
      %p741 = scmp.lt.s32.totalorder %s36, 1
      %s742 = scalar_select %p741, %s36, 1
      %s743 = smul.addr %s742, 2
      %s744 = smul.addr %s743, 4
      %s745 = scalar_lea.vmem %s0, %s744
      %p746 = scmp.lt.s32.totalorder %s36, 1
      %s747 = scalar_select %p746, %s36, 1
      %s748 = smul.addr %s747, 2
      %s749 = smul.addr %s748, 4
      %s750 = scalar_lea.vmem %s22, %s749
      %p751 = scmp.lt.s32.totalorder %s36, 1
      %s752 = scalar_select %p751, %s36, 1
      %s753 = smul.addr %s752, 2
      %s754 = smul.addr %s753, 4
      %s755 = scalar_lea.vmem %s23, %s754
      %p756 = scmp.lt.s32.totalorder %s36, 1
      %s757 = scalar_select %p756, %s36, 1
      %s758 = scalar_lea.vmem %s24, %s757
      %v760 = vld [vmem:[%s1] sm:$0xff]
      %v761 = vld [vmem:[%s1 + $0x8] sm:$0xff]
      %v762 = vld [vmem:[%s1 + $0x10] sm:$0x1]
      %v763 = vld [vmem:[%s1 + $0x18] sm:$0x1]
      %v764 = vld [vmem:[%s745] sm:$0xff]
      %v766 = vcombine.high %v764, %v764
      %768 = vrot.lane.b32.xlu0 %v764, 17
      %v769 = vpop.permute.xlu0 %768
      %770 = vrot.lane.b32.xlu0 %v766, 17
      %v771 = vpop.permute.xlu0 %770
      %v772 = vlaneseq
      %v773 = vand.u32 %v772, 127
      %vm774 = vcmp.lt.s32.totalorder %v773, 17
      %v775 = vsel %vm774, %v769, %v771
      %v776 = vsel %vm774, %v771, %v769
      %v777 = vlaneseq
      %v778 = vshrl.u32 %v777, 7
      %v779 = vsub.s32 0, %v778
      %v780 = vrot.slane %v760, %v779
      %v781 = vlaneseq
      %v782 = vshrl.u32 %v781, 7
      %v783 = vsub.s32 0, %v782
      %v784 = vrot.slane %v761, %v783
      %v785 = vmul.f32 %v776, %v780
      %v786 = vmul.f32 %v775, %v784
      %v787 = vpack.c.bf16 %v785, %v785
      %v788 = vpack.c.bf16 %v786, %v786
      %789 = vst [vmem:[#allocation2] sm:$0x3] %v787
      %790 = vst [vmem:[#allocation2 + $0x8] sm:$0x3] %v788
      %791 = vrot.lane.b32.xlu0 %v764, 16
      %v792 = vpop.permute.xlu0 %791
      %793 = vrot.lane.b32.xlu0 %v766, 16
      %v794 = vpop.permute.xlu0 %793
      %vm795 = vcmp.lt.s32.totalorder %v773, 16
      %v796 = vsel %vm795, %v792, %v794
      %v797 = vsel %vm795, %v794, %v792
      %v798 = vlaneseq
      %v799 = vshrl.u32 %v798, 7
      %v800 = vsub.s32 1, %v799
      %v801 = vrot.slane %v760, %v800
      %v802 = vlaneseq
      %v803 = vshrl.u32 %v802, 7
      %v804 = vsub.s32 1, %v803
      %v805 = vrot.slane %v761, %v804
      %v806 = vmul.f32 %v797, %v801
      %v807 = vmul.f32 %v796, %v805
      %v808 = vpack.c.bf16 %v806, %v806
      %v809 = vpack.c.bf16 %v807, %v807
      %v812 = vrot.slane %v808, 6
      %v813 = vrot.slane %v809, 6
      %816 = vst [vmem:[#allocation2] sm:$0xc] %v812
      %817 = vst [vmem:[#allocation2 + $0x8] sm:$0xc] %v813
      %818 = vrot.lane.b32.xlu0 %v764, 15
      %v819 = vpop.permute.xlu0 %818
      %820 = vrot.lane.b32.xlu0 %v766, 15
      %v821 = vpop.permute.xlu0 %820
      %vm822 = vcmp.lt.s32.totalorder %v773, 15
      %v823 = vsel %vm822, %v819, %v821
      %v824 = vsel %vm822, %v821, %v819
      %v825 = vlaneseq
      %v826 = vshrl.u32 %v825, 7
      %v827 = vsub.s32 2, %v826
      %v828 = vrot.slane %v760, %v827
      %v829 = vlaneseq
      %v830 = vshrl.u32 %v829, 7
      %v831 = vsub.s32 2, %v830
      %v832 = vrot.slane %v761, %v831
      %v833 = vmul.f32 %v824, %v828
      %v834 = vmul.f32 %v823, %v832
      %v835 = vpack.c.bf16 %v833, %v833
      %v836 = vpack.c.bf16 %v834, %v834
      %v839 = vrot.slane %v835, 4
      %v840 = vrot.slane %v836, 4
      %843 = vst [vmem:[#allocation2] sm:$0x30] %v839
      %844 = vst [vmem:[#allocation2 + $0x8] sm:$0x30] %v840
      %845 = vrot.lane.b32.xlu0 %v764, 1
      %v846 = vpop.permute.xlu0 %845
      %847 = vrot.lane.b32.xlu0 %v766, 1
      %v848 = vpop.permute.xlu0 %847
      %vm849 = vcmp.lt.s32.totalorder %v773, 1
      %v850 = vsel %vm849, %v846, %v848
      %v851 = vsel %vm849, %v848, %v846
      %v852 = vlaneseq
      %v853 = vshrl.u32 %v852, 7
      %v854 = vsub.s32 3, %v853
      %v855 = vrot.slane %v760, %v854
      %v856 = vlaneseq
      %v857 = vshrl.u32 %v856, 7
      %v858 = vsub.s32 3, %v857
      %v859 = vrot.slane %v761, %v858
      %v860 = vmul.f32 %v851, %v855
      %v861 = vmul.f32 %v850, %v859
      %v862 = vpack.c.bf16 %v860, %v860
      %v863 = vpack.c.bf16 %v861, %v861
      %v866 = vrot.slane %v862, 2
      %v867 = vrot.slane %v863, 2
      %870 = vst [vmem:[#allocation2] sm:$0xc0] %v866
      %871 = vst [vmem:[#allocation2 + $0x8] sm:$0xc0] %v867
      %v872 = vpack.c.bf16 %v764, %v764
      %v873 = vpack.c.bf16 %v766, %v766
      %874 = vst [vmem:[#allocation2 + $0x10] sm:$0x3] %v872
      %875 = vst [vmem:[#allocation2 + $0x18] sm:$0x3] %v873
      %876 = vrot.lane.b32.xlu0 %v764, 127
      %v877 = vpop.permute.xlu0 %876
      %878 = vrot.lane.b32.xlu0 %v766, 127
      %v879 = vpop.permute.xlu0 %878
      %vm880 = vcmp.lt.s32.totalorder %v773, 127
      %v881 = vsel %vm880, %v877, %v879
      %v882 = vsel %vm880, %v879, %v877
      %v883 = vlaneseq
      %v884 = vshrl.u32 %v883, 7
      %v885 = vsub.s32 5, %v884
      %v886 = vrot.slane %v760, %v885
      %v887 = vlaneseq
      %v888 = vshrl.u32 %v887, 7
      %v889 = vsub.s32 5, %v888
      %v890 = vrot.slane %v761, %v889
      %v891 = vmul.f32 %v881, %v886
      %v892 = vmul.f32 %v882, %v890
      %v893 = vpack.c.bf16 %v891, %v891
      %v894 = vpack.c.bf16 %v892, %v892
      %v897 = vrot.slane %v893, 6
      %v898 = vrot.slane %v894, 6
      %901 = vst [vmem:[#allocation2 + $0x10] sm:$0xc] %v897
      %902 = vst [vmem:[#allocation2 + $0x18] sm:$0xc] %v898
      %903 = vrot.lane.b32.xlu0 %v764, 113
      %v904 = vpop.permute.xlu0 %903
      %905 = vrot.lane.b32.xlu0 %v766, 113
      %v906 = vpop.permute.xlu0 %905
      %vm907 = vcmp.lt.s32.totalorder %v773, 113
      %v908 = vsel %vm907, %v904, %v906
      %v909 = vsel %vm907, %v906, %v904
      %v910 = vlaneseq
      %v911 = vshrl.u32 %v910, 7
      %v912 = vsub.s32 6, %v911
      %v913 = vrot.slane %v760, %v912
      %v914 = vlaneseq
      %v915 = vshrl.u32 %v914, 7
      %v916 = vsub.s32 6, %v915
      %v917 = vrot.slane %v761, %v916
      %v918 = vmul.f32 %v908, %v913
      %v919 = vmul.f32 %v909, %v917
      %v920 = vpack.c.bf16 %v918, %v918
      %v921 = vpack.c.bf16 %v919, %v919
      %v924 = vrot.slane %v920, 4
      %v925 = vrot.slane %v921, 4
      %928 = vst [vmem:[#allocation2 + $0x10] sm:$0x30] %v924
      %929 = vst [vmem:[#allocation2 + $0x18] sm:$0x30] %v925
      %930 = vrot.lane.b32.xlu0 %v764, 112
      %v931 = vpop.permute.xlu0 %930
      %932 = vrot.lane.b32.xlu0 %v766, 112
      %v933 = vpop.permute.xlu0 %932
      %vm934 = vcmp.lt.s32.totalorder %v773, 112
      %v935 = vsel %vm934, %v931, %v933
      %v936 = vsel %vm934, %v933, %v931
      %v937 = vlaneseq
      %v938 = vshrl.u32 %v937, 7
      %v939 = vsub.s32 7, %v938
      %v940 = vrot.slane %v760, %v939
      %v941 = vlaneseq
      %v942 = vshrl.u32 %v941, 7
      %v943 = vsub.s32 7, %v942
      %v944 = vrot.slane %v761, %v943
      %v945 = vmul.f32 %v935, %v940
      %v946 = vmul.f32 %v936, %v944
      %v947 = vpack.c.bf16 %v945, %v945
      %v948 = vpack.c.bf16 %v946, %v946
      %v951 = vrot.slane %v947, 2
      %v952 = vrot.slane %v948, 2
      %955 = vst [vmem:[#allocation2 + $0x10] sm:$0xc0] %v951
      %956 = vst [vmem:[#allocation2 + $0x18] sm:$0xc0] %v952
      %957 = vrot.lane.b32.xlu0 %v764, 111
      %v958 = vpop.permute.xlu0 %957
      %959 = vrot.lane.b32.xlu0 %v766, 111
      %v960 = vpop.permute.xlu0 %959
      %vm961 = vcmp.lt.s32.totalorder %v773, 111
      %v962 = vsel %vm961, %v958, %v960
      %v963 = vsel %vm961, %v960, %v958
      %v964 = vlaneseq
      %v965 = vshrl.u32 %v964, 7
      %v966 = vsub.s32 0, %v965
      %v967 = vrot.slane %v762, %v966
      %v968 = vlaneseq
      %v969 = vshrl.u32 %v968, 7
      %v970 = vsub.s32 0, %v969
      %v971 = vrot.slane %v763, %v970
      %v972 = vmul.f32 %v962, %v967
      %v973 = vmul.f32 %v963, %v971
      %v974 = vpack.c.bf16 %v972, %v972
      %v975 = vpack.c.bf16 %v973, %v973
      %976 = vst [vmem:[#allocation2 + $0x20] sm:$0x3] %v974
      %977 = vst [vmem:[#allocation2 + $0x28] sm:$0x3] %v975
      %v978 = vld [vmem:[#allocation2] sm:$0xff]
      %v979 = vld [vmem:[#allocation2 + $0x8] sm:$0xff]
      %v980 = vld [vmem:[#allocation2 + $0x10] sm:$0xff]
      %v981 = vld [vmem:[#allocation2 + $0x18] sm:$0xff]
      %v982 = vld [vmem:[#allocation2 + $0x20] sm:$0x3]
      %v983 = vld [vmem:[#allocation2 + $0x28] sm:$0x3]
      %v984 = vld [vmem:[%s4] sm:$0xf]
      %v985 = vld [vmem:[%s4 + $0x4] sm:$0xf]
      %v986 = vld [vmem:[%s4 + $0x8] sm:$0xf]
      %v987 = vld [vmem:[%s4 + $0xc] sm:$0xf]
      %v988 = vld [vmem:[%s5] sm:$0xff]
      %v989 = vld [vmem:[%s5 + $0x8] sm:$0xff]
      %v990 = vld [vmem:[%s5 + $0x10] sm:$0xff]
      %v991 = vld [vmem:[%s5 + $0x18] sm:$0xff]
      %993 = vset.pattern.permute.xlu0 0
      %994 = vperm.xlu0 %993, %v988
      %v995 = vpop.permute.xlu0 %994
      %998 = vset.pattern.permute.xlu0 0
      %999 = vperm.xlu0 %998, %v989
      %v1000 = vpop.permute.xlu0 %999
      %1003 = vset.pattern.permute.xlu0 0
      %1004 = vperm.xlu0 %1003, %v990
      %v1005 = vpop.permute.xlu0 %1004
      %1008 = vset.pattern.permute.xlu0 0
      %1009 = vperm.xlu0 %1008, %v991
      %v1010 = vpop.permute.xlu0 %1009
      %v1016 = vunpack.c.l.b16 %v984
      %v1017 = vunpack.c.l.b16 %v985
      %v1018 = vunpack.c.l.b16 %v986
      %v1019 = vunpack.c.l.b16 %v987
      %v1020 = vpack.c.b16 %v1017, %v1016
      %v1021 = vpack.c.b16 %v1019, %v1018
      %vm1022 = vcmask 293888
      %v1024 = vsel %vm1022, %v1020, 0
      %v1027 = vsel %vm1022, %v1021, 0
      %vm1029 = vcmask 1041408
      %v1031 = vsel %vm1029, %v982, 0
      %v1034 = vsel %vm1029, %v983, 0
      %1036 = vmatprep.subr.bf16.mxu0 %v979
      %1037 = vmatpush1.bf16.msra.mxu0 %v978
      %1038 = vmatprep.subr.bf16.mxu0 %v981
      %1039 = vmatpush1.bf16.msra.mxu0 %v980
      %1040 = vmatprep.subr.bf16.mxu0 %v1034
      %1041 = vmatpush1.bf16.msra.mxu0 %v1031
      %1042 = vmatprep.subr.bf16.mxu0 0
      %1043 = vmatpush1.bf16.msra.mxu0 0
      %1044 = vmatprep.subr.bf16.mxu0 0
      %1045 = vmatpush1.bf16.msra.mxu0 0
      %1046 = vmatprep.subr.bf16.mxu0 0
      %1047 = vmatpush1.bf16.msra.mxu0 0
      %1048 = vmatprep.subr.bf16.mxu0 0
      %1049 = vmatpush1.bf16.msra.mxu0 0
      %1050 = vmatprep.subr.bf16.mxu0 0
      %1051 = vmatpush1.bf16.msra.mxu0 0
      %1052 = vmatprep.subr.bf16.mxu0 0
      %1053 = vmatpush1.bf16.msra.mxu0 0
      %1054 = vmatprep.subr.bf16.mxu0 0
      %1055 = vmatpush1.bf16.msra.mxu0 0
      %1056 = vmatprep.subr.bf16.mxu0 0
      %1057 = vmatpush1.bf16.msra.mxu0 0
      %1058 = vmatprep.subr.bf16.mxu0 0
      %1059 = vmatpush1.bf16.msra.mxu0 0
      %1060 = vmatprep.subr.bf16.mxu0 0
      %1061 = vmatpush1.bf16.msra.mxu0 0
      %1062 = vmatprep.subr.bf16.mxu0 0
      %1063 = vmatpush1.bf16.msra.mxu0 0
      %1064 = vmatprep.subr.bf16.mxu0 0
      %1065 = vmatpush1.bf16.msra.mxu0 0
      %1066 = vmatprep.subr.bf16.mxu0 0
      %1067 = vmatpush1.bf16.msra.mxu0 0
      %1068 = vmatprep.mubr.bf16.mxu0 0
      %1069 = vmatmul.mubr.bf16.gmra.mrb[0].mxu0 %v1024
      %v1070 = vpop.f32.mrb[0].mxu0
      %v1071 = vadd.f32 %v995, %v1070
      %v1072 = vpop.f32.mrb[0].mxu0
      %v1073 = vadd.f32 %v995, %v1072
      %v1074 = vpop.f32.mrb[0].mxu0
      %v1075 = vadd.f32 %v1000, %v1074
      %v1076 = vpop.f32.mrb[0].mxu0
      %v1077 = vadd.f32 %v1000, %v1076
      %1078 = vmatprep.mubr.bf16.mxu0 0
      %1079 = vmatmul.mubr.bf16.gmra.mrb[0].mxu0 %v1027
      %v1080 = vpop.f32.mrb[0].mxu0
      %v1081 = vadd.f32 %v1005, %v1080
      %v1082 = vpop.f32.mrb[0].mxu0
      %v1083 = vadd.f32 %v1005, %v1082
      %v1084 = vpop.f32.mrb[0].mxu0
      %v1085 = vadd.f32 %v1010, %v1084
      %v1086 = vpop.f32.mrb[0].mxu0
      %v1087 = vadd.f32 %v1010, %v1086
      %1088 = vdwg.mxu0
      %v1089 = vld [vmem:[%s2] sm:$0xff]
      %v1090 = vld [vmem:[%s2 + $0x8] sm:$0xff]
      %v1091 = vld [vmem:[%s2 + $0x10] sm:$0xff]
      %v1092 = vld [vmem:[%s2 + $0x18] sm:$0xff]
      %v1093 = vadd.f32 %v1071, %v1073
      %1094 = vadd.xlane.f32.xlu0 %v1093
      %v1095 = vpop.xlane.xlu0 %1094
      %v1096 = vadd.f32 %v1075, %v1077
      %1097 = vadd.xlane.f32.xlu0 %v1096
      %v1098 = vpop.xlane.xlu0 %1097
      %v1099 = vadd.f32 %v1081, %v1083
      %1100 = vadd.xlane.f32.xlu0 %v1099
      %v1101 = vpop.xlane.xlu0 %1100
      %v1102 = vadd.f32 %v1085, %v1087
      %1103 = vadd.xlane.f32.xlu0 %v1102
      %v1104 = vpop.xlane.xlu0 %1103
      %vm1105 = vcmask 261120
      %v1107 = vsel %vm1105, %v1089, 0
      %v1110 = vsel %vm1105, %v1090, 0
      %v1113 = vsel %vm1105, %v1091, 0
      %v1116 = vsel %vm1105, %v1092, 0
      %1118 = vmatprep.subr.mxu0 0.0
      %1119 = vmatpush1.msra.mxu0 %v1095
      %1120 = vmatprep.subr.mxu0 0.0
      %1121 = vmatpush1.msra.mxu0 %v1098
      %1122 = vmatprep.subr.mxu0 0.0
      %1123 = vmatpush1.msra.mxu0 %v1101
      %1124 = vmatprep.subr.mxu0 0.0
      %1125 = vmatpush1.msra.mxu0 %v1104
      %1126 = vmatprep.subr.mxu0 0.0
      %1127 = vmatpush1.msra.mxu0 0.0
      %1128 = vmatprep.subr.mxu0 0.0
      %1129 = vmatpush1.msra.mxu0 0.0
      %1130 = vmatprep.subr.mxu0 0.0
      %1131 = vmatpush1.msra.mxu0 0.0
      %1132 = vmatprep.subr.mxu0 0.0
      %1133 = vmatpush1.msra.mxu0 0.0
      %1134 = vmatprep.subr.mxu0 0.0
      %1135 = vmatpush1.msra.mxu0 0.0
      %1136 = vmatprep.subr.mxu0 0.0
      %1137 = vmatpush1.msra.mxu0 0.0
      %1138 = vmatprep.subr.mxu0 0.0
      %1139 = vmatpush1.msra.mxu0 0.0
      %1140 = vmatprep.subr.mxu0 0.0
      %1141 = vmatpush1.msra.mxu0 0.0
      %1142 = vmatprep.subr.mxu0 0.0
      %1143 = vmatpush1.msra.mxu0 0.0
      %1144 = vmatprep.subr.mxu0 0.0
      %1145 = vmatpush1.msra.mxu0 0.0
      %1146 = vmatprep.subr.mxu0 0.0
      %1147 = vmatpush1.msra.mxu0 0.0
      %1148 = vmatprep.subr.mxu0 0.0
      %1149 = vmatpush1.msra.mxu0 0.0
      %1150 = vmatprep.subr.mxu0 0.0
      %1151 = vmatpush1.msra.mxu0 0.0
      %1152 = vmatprep.subr.mxu0 0.0
      %1153 = vmatpush1.msra.mxu0 0.0
      %1154 = vmatprep.subr.mxu0 0.0
      %1155 = vmatpush1.msra.mxu0 0.0
      %1156 = vmatprep.subr.mxu0 0.0
      %1157 = vmatpush1.msra.mxu0 0.0
      %1158 = vmatprep.subr.mxu0 0.0
      %1159 = vmatpush1.msra.mxu0 0.0
      %1160 = vmatprep.subr.mxu0 0.0
      %1161 = vmatpush1.msra.mxu0 0.0
      %1162 = vmatprep.subr.mxu0 0.0
      %1163 = vmatpush1.msra.mxu0 0.0
      %1164 = vmatprep.subr.mxu0 0.0
      %1165 = vmatpush1.msra.mxu0 0.0
      %1166 = vmatprep.subr.mxu0 0.0
      %1167 = vmatpush1.msra.mxu0 0.0
      %1168 = vmatprep.subr.mxu0 0.0
      %1169 = vmatpush1.msra.mxu0 0.0
      %1170 = vmatprep.subr.mxu0 0.0
      %1171 = vmatpush1.msra.mxu0 0.0
      %1172 = vmatprep.subr.mxu0 0.0
      %1173 = vmatpush1.msra.mxu0 0.0
      %1174 = vmatprep.subr.mxu0 0.0
      %1175 = vmatpush1.msra.mxu0 0.0
      %1176 = vmatprep.subr.mxu0 0.0
      %1177 = vmatpush1.msra.mxu0 0.0
      %1178 = vmatprep.subr.mxu0 0.0
      %1179 = vmatpush1.msra.mxu0 0.0
      %1180 = vmatprep.subr.mxu0 0.0
      %1181 = vmatpush1.msra.mxu0 0.0
      %1182 = vmatprep.mubr.f32.mxu0 0.0
      %1183 = vmatmul.mubr.f32.gmra.mrb[0].mxu0 %v1107
      %v1184 = vpop.f32.mrb[0].mxu0
      %v1185 = vadd.f32 0.0, %v1184
      %v1186 = vpop.f32.mrb[0].mxu0
      %1187 = vmatprep.mubr.f32.mxu0 0.0
      %1188 = vmatmul.mubr.f32.gmra.mrb[0].mxu0 %v1110
      %v1189 = vpop.f32.mrb[0].mxu0
      %v1190 = vadd.f32 0.0, %v1189
      %v1191 = vpop.f32.mrb[0].mxu0
      %1192 = vmatprep.mubr.f32.mxu0 0.0
      %1193 = vmatmul.mubr.f32.gmra.mrb[0].mxu0 %v1113
      %v1194 = vpop.f32.mrb[0].mxu0
      %v1195 = vadd.f32 0.0, %v1194
      %v1196 = vpop.f32.mrb[0].mxu0
      %1197 = vmatprep.mubr.f32.mxu0 0.0
      %1198 = vmatmul.mubr.f32.gmra.mrb[0].mxu0 %v1116
      %v1199 = vpop.f32.mrb[0].mxu0
      %v1200 = vadd.f32 0.0, %v1199
      %v1201 = vpop.f32.mrb[0].mxu0
      %1202 = vdwg.mxu0
      %v1203 = vrcp.pop 1024.0
      %v1204 = vmul.f32 %v1185, %v1203
      %v1205 = vmul.f32 %v1190, %v1203
      %v1206 = vmul.f32 %v1195, %v1203
      %v1207 = vmul.f32 %v1200, %v1203
      %1209 = vset.pattern.permute.xlu0 0
      %1210 = vperm.xlu0 %1209, %v1204
      %v1211 = vpop.permute.xlu0 %1210
      %1214 = vset.pattern.permute.xlu0 0
      %1215 = vperm.xlu0 %1214, %v1205
      %v1216 = vpop.permute.xlu0 %1215
      %1219 = vset.pattern.permute.xlu0 0
      %1220 = vperm.xlu0 %1219, %v1206
      %v1221 = vpop.permute.xlu0 %1220
      %1224 = vset.pattern.permute.xlu0 0
      %1225 = vperm.xlu0 %1224, %v1207
      %v1226 = vpop.permute.xlu0 %1225
      %v1228 = vsub.f32 %v1071, %v1211
      %v1229 = vsub.f32 %v1073, %v1211
      %v1230 = vsub.f32 %v1075, %v1216
      %v1231 = vsub.f32 %v1077, %v1216
      %v1232 = vsub.f32 %v1081, %v1221
      %v1233 = vsub.f32 %v1083, %v1221
      %v1234 = vsub.f32 %v1085, %v1226
      %v1235 = vsub.f32 %v1087, %v1226
      %v1236 = vmul.f32 %v1228, %v1228
      %v1237 = vmul.f32 %v1229, %v1229
      %v1238 = vmul.f32 %v1230, %v1230
      %v1239 = vmul.f32 %v1231, %v1231
      %v1240 = vmul.f32 %v1232, %v1232
      %v1241 = vmul.f32 %v1233, %v1233
      %v1242 = vmul.f32 %v1234, %v1234
      %v1243 = vmul.f32 %v1235, %v1235
      %v1244 = vadd.f32 %v1236, %v1237
      %1245 = vadd.xlane.f32.xlu0 %v1244
      %v1246 = vpop.xlane.xlu0 %1245
      %v1247 = vadd.f32 %v1238, %v1239
      %1248 = vadd.xlane.f32.xlu0 %v1247
      %v1249 = vpop.xlane.xlu0 %1248
      %v1250 = vadd.f32 %v1240, %v1241
      %1251 = vadd.xlane.f32.xlu0 %v1250
      %v1252 = vpop.xlane.xlu0 %1251
      %v1253 = vadd.f32 %v1242, %v1243
      %1254 = vadd.xlane.f32.xlu0 %v1253
      %v1255 = vpop.xlane.xlu0 %1254
      %1256 = vmatprep.subr.mxu0 0.0
      %1257 = vmatpush1.msra.mxu0 %v1246
      %1258 = vmatprep.subr.mxu0 0.0
      %1259 = vmatpush1.msra.mxu0 %v1249
      %1260 = vmatprep.subr.mxu0 0.0
      %1261 = vmatpush1.msra.mxu0 %v1252
      %1262 = vmatprep.subr.mxu0 0.0
      %1263 = vmatpush1.msra.mxu0 %v1255
      %1264 = vmatprep.subr.mxu0 0.0
      %1265 = vmatpush1.msra.mxu0 0.0
      %1266 = vmatprep.subr.mxu0 0.0
      %1267 = vmatpush1.msra.mxu0 0.0
      %1268 = vmatprep.subr.mxu0 0.0
      %1269 = vmatpush1.msra.mxu0 0.0
      %1270 = vmatprep.subr.mxu0 0.0
      %1271 = vmatpush1.msra.mxu0 0.0
      %1272 = vmatprep.subr.mxu0 0.0
      %1273 = vmatpush1.msra.mxu0 0.0
      %1274 = vmatprep.subr.mxu0 0.0
      %1275 = vmatpush1.msra.mxu0 0.0
      %1276 = vmatprep.subr.mxu0 0.0
      %1277 = vmatpush1.msra.mxu0 0.0
      %1278 = vmatprep.subr.mxu0 0.0
      %1279 = vmatpush1.msra.mxu0 0.0
      %1280 = vmatprep.subr.mxu0 0.0
      %1281 = vmatpush1.msra.mxu0 0.0
      %1282 = vmatprep.subr.mxu0 0.0
      %1283 = vmatpush1.msra.mxu0 0.0
      %1284 = vmatprep.subr.mxu0 0.0
      %1285 = vmatpush1.msra.mxu0 0.0
      %1286 = vmatprep.subr.mxu0 0.0
      %1287 = vmatpush1.msra.mxu0 0.0
      %1288 = vmatprep.subr.mxu0 0.0
      %1289 = vmatpush1.msra.mxu0 0.0
      %1290 = vmatprep.subr.mxu0 0.0
      %1291 = vmatpush1.msra.mxu0 0.0
      %1292 = vmatprep.subr.mxu0 0.0
      %1293 = vmatpush1.msra.mxu0 0.0
      %1294 = vmatprep.subr.mxu0 0.0
      %1295 = vmatpush1.msra.mxu0 0.0
      %1296 = vmatprep.subr.mxu0 0.0
      %1297 = vmatpush1.msra.mxu0 0.0
      %1298 = vmatprep.subr.mxu0 0.0
      %1299 = vmatpush1.msra.mxu0 0.0
      %1300 = vmatprep.subr.mxu0 0.0
      %1301 = vmatpush1.msra.mxu0 0.0
      %1302 = vmatprep.subr.mxu0 0.0
      %1303 = vmatpush1.msra.mxu0 0.0
      %1304 = vmatprep.subr.mxu0 0.0
      %1305 = vmatpush1.msra.mxu0 0.0
      %1306 = vmatprep.subr.mxu0 0.0
      %1307 = vmatpush1.msra.mxu0 0.0
      %1308 = vmatprep.subr.mxu0 0.0
      %1309 = vmatpush1.msra.mxu0 0.0
      %1310 = vmatprep.subr.mxu0 0.0
      %1311 = vmatpush1.msra.mxu0 0.0
      %1312 = vmatprep.subr.mxu0 0.0
      %1313 = vmatpush1.msra.mxu0 0.0
      %1314 = vmatprep.subr.mxu0 0.0
      %1315 = vmatpush1.msra.mxu0 0.0
      %1316 = vmatprep.subr.mxu0 0.0
      %1317 = vmatpush1.msra.mxu0 0.0
      %1318 = vmatprep.subr.mxu0 0.0
      %1319 = vmatpush1.msra.mxu0 0.0
      %1320 = vmatprep.mubr.f32.mxu0 0.0
      %1321 = vmatmul.mubr.f32.gmra.mrb[0].mxu0 %v1107
      %v1322 = vpop.f32.mrb[0].mxu0
      %v1323 = vadd.f32 0.0, %v1322
      %v1324 = vpop.f32.mrb[0].mxu0
      %1325 = vmatprep.mubr.f32.mxu0 0.0
      %1326 = vmatmul.mubr.f32.gmra.mrb[0].mxu0 %v1110
      %v1327 = vpop.f32.mrb[0].mxu0
      %v1328 = vadd.f32 0.0, %v1327
      %v1329 = vpop.f32.mrb[0].mxu0
      %1330 = vmatprep.mubr.f32.mxu0 0.0
      %1331 = vmatmul.mubr.f32.gmra.mrb[0].mxu0 %v1113
      %v1332 = vpop.f32.mrb[0].mxu0
      %v1333 = vadd.f32 0.0, %v1332
      %v1334 = vpop.f32.mrb[0].mxu0
      %1335 = vmatprep.mubr.f32.mxu0 0.0
      %1336 = vmatmul.mubr.f32.gmra.mrb[0].mxu0 %v1116
      %v1337 = vpop.f32.mrb[0].mxu0
      %v1338 = vadd.f32 0.0, %v1337
      %v1339 = vpop.f32.mrb[0].mxu0
      %1340 = vdwg.mxu0
      %v1341 = vmul.f32 %v1323, %v1203
      %v1342 = vmul.f32 %v1328, %v1203
      %v1343 = vmul.f32 %v1333, %v1203
      %v1344 = vmul.f32 %v1338, %v1203
      %v1345 = vadd.f32 %v1341, 1e-05
      %v1346 = vadd.f32 %v1342, 1e-05
      %v1347 = vadd.f32 %v1343, 1e-05
      %v1348 = vadd.f32 %v1344, 1e-05
      %v1349 = vrsqrt.pop %v1345
      %v1350 = vrsqrt.pop %v1346
      %v1351 = vrsqrt.pop %v1347
      %v1352 = vrsqrt.pop %v1348
      %1354 = vset.pattern.permute.xlu0 0
      %1355 = vperm.xlu0 %1354, %v1349
      %v1356 = vpop.permute.xlu0 %1355
      %1359 = vset.pattern.permute.xlu0 0
      %1360 = vperm.xlu0 %1359, %v1350
      %v1361 = vpop.permute.xlu0 %1360
      %1364 = vset.pattern.permute.xlu0 0
      %1365 = vperm.xlu0 %1364, %v1351
      %v1366 = vpop.permute.xlu0 %1365
      %1369 = vset.pattern.permute.xlu0 0
      %1370 = vperm.xlu0 %1369, %v1352
      %v1371 = vpop.permute.xlu0 %1370
      %v1373 = vmul.f32 %v1228, %v1356
      %v1374 = vmul.f32 %v1229, %v1356
      %v1375 = vmul.f32 %v1230, %v1361
      %v1376 = vmul.f32 %v1231, %v1361
      %v1377 = vmul.f32 %v1232, %v1366
      %v1378 = vmul.f32 %v1233, %v1366
      %v1379 = vmul.f32 %v1234, %v1371
      %v1380 = vmul.f32 %v1235, %v1371
      %v1381 = vld [vmem:[%s6] sm:$0xff]
      %v1382 = vld [vmem:[%s6 + $0x8] sm:$0xff]
      %v1383 = vld [vmem:[%s6 + $0x10] sm:$0xff]
      %v1384 = vld [vmem:[%s6 + $0x18] sm:$0xff]
      %1386 = vset.pattern.permute.xlu0 0
      %1387 = vperm.xlu0 %1386, %v1381
      %v1388 = vpop.permute.xlu0 %1387
      %1391 = vset.pattern.permute.xlu0 0
      %1392 = vperm.xlu0 %1391, %v1382
      %v1393 = vpop.permute.xlu0 %1392
      %1396 = vset.pattern.permute.xlu0 0
      %1397 = vperm.xlu0 %1396, %v1383
      %v1398 = vpop.permute.xlu0 %1397
      %1401 = vset.pattern.permute.xlu0 0
      %1402 = vperm.xlu0 %1401, %v1384
      %v1403 = vpop.permute.xlu0 %1402
      %v1405 = vmul.f32 %v1373, %v1388
      %v1406 = vmul.f32 %v1374, %v1388
      %v1407 = vmul.f32 %v1375, %v1393
      %v1408 = vmul.f32 %v1376, %v1393
      %v1409 = vmul.f32 %v1377, %v1398
      %v1410 = vmul.f32 %v1378, %v1398
      %v1411 = vmul.f32 %v1379, %v1403
      %v1412 = vmul.f32 %v1380, %v1403
      %v1413 = vld [vmem:[%s7] sm:$0xff]
      %v1414 = vld [vmem:[%s7 + $0x8] sm:$0xff]
      %v1415 = vld [vmem:[%s7 + $0x10] sm:$0xff]
      %v1416 = vld [vmem:[%s7 + $0x18] sm:$0xff]
      %1418 = vset.pattern.permute.xlu0 0
      %1419 = vperm.xlu0 %1418, %v1413
      %v1420 = vpop.permute.xlu0 %1419
      %1423 = vset.pattern.permute.xlu0 0
      %1424 = vperm.xlu0 %1423, %v1414
      %v1425 = vpop.permute.xlu0 %1424
      %1428 = vset.pattern.permute.xlu0 0
      %1429 = vperm.xlu0 %1428, %v1415
      %v1430 = vpop.permute.xlu0 %1429
      %1433 = vset.pattern.permute.xlu0 0
      %1434 = vperm.xlu0 %1433, %v1416
      %v1435 = vpop.permute.xlu0 %1434
      %v1437 = vadd.f32 %v1405, %v1420
      %v1438 = vadd.f32 %v1406, %v1420
      %v1439 = vadd.f32 %v1407, %v1425
      %v1440 = vadd.f32 %v1408, %v1425
      %v1441 = vadd.f32 %v1409, %v1430
      %v1442 = vadd.f32 %v1410, %v1430
      %v1443 = vadd.f32 %v1411, %v1435
      %v1444 = vadd.f32 %v1412, %v1435
      %v1445 = vmin.f32 %v1437, 0.0
      %v1446 = vmin.f32 %v1438, 0.0
      %v1447 = vmin.f32 %v1439, 0.0
      %v1448 = vmin.f32 %v1440, 0.0
      %v1449 = vmin.f32 %v1441, 0.0
      %v1450 = vmin.f32 %v1442, 0.0
      %v1451 = vmin.f32 %v1443, 0.0
      %v1452 = vmin.f32 %v1444, 0.0
      %vm1453 = vcmp.gt.f32.partialorder %v1437, 0.0
      %vm1454 = vcmp.gt.f32.partialorder %v1438, 0.0
      %vm1455 = vcmp.gt.f32.partialorder %v1439, 0.0
      %vm1456 = vcmp.gt.f32.partialorder %v1440, 0.0
      %vm1457 = vcmp.gt.f32.partialorder %v1441, 0.0
      %vm1458 = vcmp.gt.f32.partialorder %v1442, 0.0
      %vm1459 = vcmp.gt.f32.partialorder %v1443, 0.0
      %vm1460 = vcmp.gt.f32.partialorder %v1444, 0.0
      %v1461 = vmul.f32 %v1445, 1.442695
      %v1462 = vpow.pop %v1461
      %v1463 = vmul.f32 %v1446, 1.442695
      %v1464 = vpow.pop %v1463
      %v1465 = vmul.f32 %v1447, 1.442695
      %v1466 = vpow.pop %v1465
      %v1467 = vmul.f32 %v1448, 1.442695
      %v1468 = vpow.pop %v1467
      %v1469 = vmul.f32 %v1449, 1.442695
      %v1470 = vpow.pop %v1469
      %v1471 = vmul.f32 %v1450, 1.442695
      %v1472 = vpow.pop %v1471
      %v1473 = vmul.f32 %v1451, 1.442695
      %v1474 = vpow.pop %v1473
      %v1475 = vmul.f32 %v1452, 1.442695
      %v1476 = vpow.pop %v1475
      %v1477 = vsub.f32 %v1462, 1.0
      %v1478 = vsub.f32 %v1464, 1.0
      %v1479 = vsub.f32 %v1466, 1.0
      %v1480 = vsub.f32 %v1468, 1.0
      %v1481 = vsub.f32 %v1470, 1.0
      %v1482 = vsub.f32 %v1472, 1.0
      %v1483 = vsub.f32 %v1474, 1.0
      %v1484 = vsub.f32 %v1476, 1.0
      %v1485 = vmul.f32 %v1477, 1.6732632
      %v1486 = vmul.f32 %v1478, 1.6732632
      %v1487 = vmul.f32 %v1479, 1.6732632
      %v1488 = vmul.f32 %v1480, 1.6732632
      %v1489 = vmul.f32 %v1481, 1.6732632
      %v1490 = vmul.f32 %v1482, 1.6732632
      %v1491 = vmul.f32 %v1483, 1.6732632
      %v1492 = vmul.f32 %v1484, 1.6732632
      %v1493 = vsel %vm1453, %v1437, %v1485
      %v1494 = vsel %vm1454, %v1438, %v1486
      %v1495 = vsel %vm1455, %v1439, %v1487
      %v1496 = vsel %vm1456, %v1440, %v1488
      %v1497 = vsel %vm1457, %v1441, %v1489
      %v1498 = vsel %vm1458, %v1442, %v1490
      %v1499 = vsel %vm1459, %v1443, %v1491
      %v1500 = vsel %vm1460, %v1444, %v1492
      %v1501 = vmul.f32 %v1493, 1.050701
      %v1502 = vmul.f32 %v1494, 1.050701
      %v1503 = vmul.f32 %v1495, 1.050701
      %v1504 = vmul.f32 %v1496, 1.050701
      %v1505 = vmul.f32 %v1497, 1.050701
      %v1506 = vmul.f32 %v1498, 1.050701
      %v1507 = vmul.f32 %v1499, 1.050701
      %v1508 = vmul.f32 %v1500, 1.050701
      %1509 = vrot.lane.b32.xlu0 %v1501, 17
      %v1510 = vpop.permute.xlu0 %1509
      %1511 = vrot.lane.b32.xlu0 %v1503, 17
      %v1512 = vpop.permute.xlu0 %1511
      %1513 = vrot.lane.b32.xlu0 %v1505, 17
      %v1514 = vpop.permute.xlu0 %1513
      %1515 = vrot.lane.b32.xlu0 %v1507, 17
      %v1516 = vpop.permute.xlu0 %1515
      %1517 = vrot.lane.b32.xlu0 %v1502, 17
      %v1518 = vpop.permute.xlu0 %1517
      %1519 = vrot.lane.b32.xlu0 %v1504, 17
      %v1520 = vpop.permute.xlu0 %1519
      %1521 = vrot.lane.b32.xlu0 %v1506, 17
      %v1522 = vpop.permute.xlu0 %1521
      %1523 = vrot.lane.b32.xlu0 %v1508, 17
      %v1524 = vpop.permute.xlu0 %1523
      %v1525 = vsel %vm774, %v1510, %v1518
      %v1526 = vsel %vm774, %v1512, %v1520
      %v1527 = vsel %vm774, %v1514, %v1522
      %v1528 = vsel %vm774, %v1516, %v1524
      %v1529 = vsel %vm774, %v1518, %v1510
      %v1530 = vsel %vm774, %v1520, %v1512
      %v1531 = vsel %vm774, %v1522, %v1514
      %v1532 = vsel %vm774, %v1524, %v1516
      %v1533 = vmul.f32 %v1529, %v780
      %v1534 = vmul.f32 %v1525, %v784
      %v1535 = vmul.f32 %v1530, %v780
      %v1536 = vmul.f32 %v1526, %v784
      %v1537 = vmul.f32 %v1531, %v780
      %v1538 = vmul.f32 %v1527, %v784
      %v1539 = vmul.f32 %v1532, %v780
      %v1540 = vmul.f32 %v1528, %v784
      %v1541 = vpack.c.bf16 %v1535, %v1533
      %v1542 = vpack.c.bf16 %v1536, %v1534
      %v1543 = vpack.c.bf16 %v1539, %v1537
      %v1544 = vpack.c.bf16 %v1540, %v1538
      %1545 = vst [vmem:[#allocation2] sm:$0xff] %v1541
      %1546 = vst [vmem:[#allocation2 + $0x8] sm:$0xff] %v1542
      %1547 = vst [vmem:[#allocation2 + $0x10] sm:$0xff] %v1543
      %1548 = vst [vmem:[#allocation2 + $0x18] sm:$0xff] %v1544
      %1549 = vrot.lane.b32.xlu0 %v1501, 16
      %v1550 = vpop.permute.xlu0 %1549
      %1551 = vrot.lane.b32.xlu0 %v1503, 16
      %v1552 = vpop.permute.xlu0 %1551
      %1553 = vrot.lane.b32.xlu0 %v1505, 16
      %v1554 = vpop.permute.xlu0 %1553
      %1555 = vrot.lane.b32.xlu0 %v1507, 16
      %v1556 = vpop.permute.xlu0 %1555
      %1557 = vrot.lane.b32.xlu0 %v1502, 16
      %v1558 = vpop.permute.xlu0 %1557
      %1559 = vrot.lane.b32.xlu0 %v1504, 16
      %v1560 = vpop.permute.xlu0 %1559
      %1561 = vrot.lane.b32.xlu0 %v1506, 16
      %v1562 = vpop.permute.xlu0 %1561
      %1563 = vrot.lane.b32.xlu0 %v1508, 16
      %v1564 = vpop.permute.xlu0 %1563
      %v1565 = vsel %vm795, %v1550, %v1558
      %v1566 = vsel %vm795, %v1552, %v1560
      %v1567 = vsel %vm795, %v1554, %v1562
      %v1568 = vsel %vm795, %v1556, %v1564
      %v1569 = vsel %vm795, %v1558, %v1550
      %v1570 = vsel %vm795, %v1560, %v1552
      %v1571 = vsel %vm795, %v1562, %v1554
      %v1572 = vsel %vm795, %v1564, %v1556
      %v1573 = vmul.f32 %v1569, %v801
      %v1574 = vmul.f32 %v1565, %v805
      %v1575 = vmul.f32 %v1570, %v801
      %v1576 = vmul.f32 %v1566, %v805
      %v1577 = vmul.f32 %v1571, %v801
      %v1578 = vmul.f32 %v1567, %v805
      %v1579 = vmul.f32 %v1572, %v801
      %v1580 = vmul.f32 %v1568, %v805
      %v1581 = vpack.c.bf16 %v1575, %v1573
      %v1582 = vpack.c.bf16 %v1576, %v1574
      %v1583 = vpack.c.bf16 %v1579, %v1577
      %v1584 = vpack.c.bf16 %v1580, %v1578
      %1585 = vst [vmem:[#allocation2 + $0x20] sm:$0xff] %v1581
      %1586 = vst [vmem:[#allocation2 + $0x28] sm:$0xff] %v1582
      %1587 = vst [vmem:[#allocation2 + $0x30] sm:$0xff] %v1583
      %1588 = vst [vmem:[#allocation2 + $0x38] sm:$0xff] %v1584
      %1589 = vrot.lane.b32.xlu0 %v1501, 15
      %v1590 = vpop.permute.xlu0 %1589
      %1591 = vrot.lane.b32.xlu0 %v1503, 15
      %v1592 = vpop.permute.xlu0 %1591
      %1593 = vrot.lane.b32.xlu0 %v1505, 15
      %v1594 = vpop.permute.xlu0 %1593
      %1595 = vrot.lane.b32.xlu0 %v1507, 15
      %v1596 = vpop.permute.xlu0 %1595
      %1597 = vrot.lane.b32.xlu0 %v1502, 15
      %v1598 = vpop.permute.xlu0 %1597
      %1599 = vrot.lane.b32.xlu0 %v1504, 15
      %v1600 = vpop.permute.xlu0 %1599
      %1601 = vrot.lane.b32.xlu0 %v1506, 15
      %v1602 = vpop.permute.xlu0 %1601
      %1603 = vrot.lane.b32.xlu0 %v1508, 15
      %v1604 = vpop.permute.xlu0 %1603
      %v1605 = vsel %vm822, %v1590, %v1598
      %v1606 = vsel %vm822, %v1592, %v1600
      %v1607 = vsel %vm822, %v1594, %v1602
      %v1608 = vsel %vm822, %v1596, %v1604
      %v1609 = vsel %vm822, %v1598, %v1590
      %v1610 = vsel %vm822, %v1600, %v1592
      %v1611 = vsel %vm822, %v1602, %v1594
      %v1612 = vsel %vm822, %v1604, %v1596
      %v1613 = vmul.f32 %v1609, %v828
      %v1614 = vmul.f32 %v1605, %v832
      %v1615 = vmul.f32 %v1610, %v828
      %v1616 = vmul.f32 %v1606, %v832
      %v1617 = vmul.f32 %v1611, %v828
      %v1618 = vmul.f32 %v1607, %v832
      %v1619 = vmul.f32 %v1612, %v828
      %v1620 = vmul.f32 %v1608, %v832
      %v1621 = vpack.c.bf16 %v1615, %v1613
      %v1622 = vpack.c.bf16 %v1616, %v1614
      %v1623 = vpack.c.bf16 %v1619, %v1617
      %v1624 = vpack.c.bf16 %v1620, %v1618
      %1625 = vst [vmem:[#allocation2 + $0x40] sm:$0xff] %v1621
      %1626 = vst [vmem:[#allocation2 + $0x48] sm:$0xff] %v1622
      %1627 = vst [vmem:[#allocation2 + $0x50] sm:$0xff] %v1623
      %1628 = vst [vmem:[#allocation2 + $0x58] sm:$0xff] %v1624
      %1629 = vrot.lane.b32.xlu0 %v1501, 1
      %v1630 = vpop.permute.xlu0 %1629
      %1631 = vrot.lane.b32.xlu0 %v1503, 1
      %v1632 = vpop.permute.xlu0 %1631
      %1633 = vrot.lane.b32.xlu0 %v1505, 1
      %v1634 = vpop.permute.xlu0 %1633
      %1635 = vrot.lane.b32.xlu0 %v1507, 1
      %v1636 = vpop.permute.xlu0 %1635
      %1637 = vrot.lane.b32.xlu0 %v1502, 1
      %v1638 = vpop.permute.xlu0 %1637
      %1639 = vrot.lane.b32.xlu0 %v1504, 1
      %v1640 = vpop.permute.xlu0 %1639
      %1641 = vrot.lane.b32.xlu0 %v1506, 1
      %v1642 = vpop.permute.xlu0 %1641
      %1643 = vrot.lane.b32.xlu0 %v1508, 1
      %v1644 = vpop.permute.xlu0 %1643
      %v1645 = vsel %vm849, %v1630, %v1638
      %v1646 = vsel %vm849, %v1632, %v1640
      %v1647 = vsel %vm849, %v1634, %v1642
      %v1648 = vsel %vm849, %v1636, %v1644
      %v1649 = vsel %vm849, %v1638, %v1630
      %v1650 = vsel %vm849, %v1640, %v1632
      %v1651 = vsel %vm849, %v1642, %v1634
      %v1652 = vsel %vm849, %v1644, %v1636
      %v1653 = vmul.f32 %v1649, %v855
      %v1654 = vmul.f32 %v1645, %v859
      %v1655 = vmul.f32 %v1650, %v855
      %v1656 = vmul.f32 %v1646, %v859
      %v1657 = vmul.f32 %v1651, %v855
      %v1658 = vmul.f32 %v1647, %v859
      %v1659 = vmul.f32 %v1652, %v855
      %v1660 = vmul.f32 %v1648, %v859
      %v1661 = vpack.c.bf16 %v1655, %v1653
      %v1662 = vpack.c.bf16 %v1656, %v1654
      %v1663 = vpack.c.bf16 %v1659, %v1657
      %v1664 = vpack.c.bf16 %v1660, %v1658
      %1665 = vst [vmem:[#allocation2 + $0x60] sm:$0xff] %v1661
      %1666 = vst [vmem:[#allocation2 + $0x68] sm:$0xff] %v1662
      %1667 = vst [vmem:[#allocation2 + $0x70] sm:$0xff] %v1663
      %1668 = vst [vmem:[#allocation2 + $0x78] sm:$0xff] %v1664
      %v1669 = vpack.c.bf16 %v1503, %v1501
      %v1670 = vpack.c.bf16 %v1504, %v1502
      %v1671 = vpack.c.bf16 %v1507, %v1505
      %v1672 = vpack.c.bf16 %v1508, %v1506
      %1673 = vst [vmem:[#allocation2 + $0x80] sm:$0xff] %v1669
      %1674 = vst [vmem:[#allocation2 + $0x88] sm:$0xff] %v1670
      %1675 = vst [vmem:[#allocation2 + $0x90] sm:$0xff] %v1671
      %1676 = vst [vmem:[#allocation2 + $0x98] sm:$0xff] %v1672
      %1677 = vrot.lane.b32.xlu0 %v1501, 127
      %v1678 = vpop.permute.xlu0 %1677
      %1679 = vrot.lane.b32.xlu0 %v1503, 127
      %v1680 = vpop.permute.xlu0 %1679
      %1681 = vrot.lane.b32.xlu0 %v1505, 127
      %v1682 = vpop.permute.xlu0 %1681
      %1683 = vrot.lane.b32.xlu0 %v1507, 127
      %v1684 = vpop.permute.xlu0 %1683
      %1685 = vrot.lane.b32.xlu0 %v1502, 127
      %v1686 = vpop.permute.xlu0 %1685
      %1687 = vrot.lane.b32.xlu0 %v1504, 127
      %v1688 = vpop.permute.xlu0 %1687
      %1689 = vrot.lane.b32.xlu0 %v1506, 127
      %v1690 = vpop.permute.xlu0 %1689
      %1691 = vrot.lane.b32.xlu0 %v1508, 127
      %v1692 = vpop.permute.xlu0 %1691
      %v1693 = vsel %vm880, %v1678, %v1686
      %v1694 = vsel %vm880, %v1680, %v1688
      %v1695 = vsel %vm880, %v1682, %v1690
      %v1696 = vsel %vm880, %v1684, %v1692
      %v1697 = vsel %vm880, %v1686, %v1678
      %v1698 = vsel %vm880, %v1688, %v1680
      %v1699 = vsel %vm880, %v1690, %v1682
      %v1700 = vsel %vm880, %v1692, %v1684
      %v1701 = vmul.f32 %v1693, %v886
      %v1702 = vmul.f32 %v1697, %v890
      %v1703 = vmul.f32 %v1694, %v886
      %v1704 = vmul.f32 %v1698, %v890
      %v1705 = vmul.f32 %v1695, %v886
      %v1706 = vmul.f32 %v1699, %v890
      %v1707 = vmul.f32 %v1696, %v886
      %v1708 = vmul.f32 %v1700, %v890
      %v1709 = vpack.c.bf16 %v1703, %v1701
      %v1710 = vpack.c.bf16 %v1704, %v1702
      %v1711 = vpack.c.bf16 %v1707, %v1705
      %v1712 = vpack.c.bf16 %v1708, %v1706
      %1713 = vst [vmem:[#allocation2 + $0xa0] sm:$0xff] %v1709
      %1714 = vst [vmem:[#allocation2 + $0xa8] sm:$0xff] %v1710
      %1715 = vst [vmem:[#allocation2 + $0xb0] sm:$0xff] %v1711
      %1716 = vst [vmem:[#allocation2 + $0xb8] sm:$0xff] %v1712
      %1717 = vrot.lane.b32.xlu0 %v1501, 113
      %v1718 = vpop.permute.xlu0 %1717
      %1719 = vrot.lane.b32.xlu0 %v1503, 113
      %v1720 = vpop.permute.xlu0 %1719
      %1721 = vrot.lane.b32.xlu0 %v1505, 113
      %v1722 = vpop.permute.xlu0 %1721
      %1723 = vrot.lane.b32.xlu0 %v1507, 113
      %v1724 = vpop.permute.xlu0 %1723
      %1725 = vrot.lane.b32.xlu0 %v1502, 113
      %v1726 = vpop.permute.xlu0 %1725
      %1727 = vrot.lane.b32.xlu0 %v1504, 113
      %v1728 = vpop.permute.xlu0 %1727
      %1729 = vrot.lane.b32.xlu0 %v1506, 113
      %v1730 = vpop.permute.xlu0 %1729
      %1731 = vrot.lane.b32.xlu0 %v1508, 113
      %v1732 = vpop.permute.xlu0 %1731
      %v1733 = vsel %vm907, %v1718, %v1726
      %v1734 = vsel %vm907, %v1720, %v1728
      %v1735 = vsel %vm907, %v1722, %v1730
      %v1736 = vsel %vm907, %v1724, %v1732
      %v1737 = vsel %vm907, %v1726, %v1718
      %v1738 = vsel %vm907, %v1728, %v1720
      %v1739 = vsel %vm907, %v1730, %v1722
      %v1740 = vsel %vm907, %v1732, %v1724
      %v1741 = vmul.f32 %v1733, %v913
      %v1742 = vmul.f32 %v1737, %v917
      %v1743 = vmul.f32 %v1734, %v913
      %v1744 = vmul.f32 %v1738, %v917
      %v1745 = vmul.f32 %v1735, %v913
      %v1746 = vmul.f32 %v1739, %v917
      %v1747 = vmul.f32 %v1736, %v913
      %v1748 = vmul.f32 %v1740, %v917
      %v1749 = vpack.c.bf16 %v1743, %v1741
      %v1750 = vpack.c.bf16 %v1744, %v1742
      %v1751 = vpack.c.bf16 %v1747, %v1745
      %v1752 = vpack.c.bf16 %v1748, %v1746
      %1753 = vst [vmem:[#allocation2 + $0xc0] sm:$0xff] %v1749
      %1754 = vst [vmem:[#allocation2 + $0xc8] sm:$0xff] %v1750
      %1755 = vst [vmem:[#allocation2 + $0xd0] sm:$0xff] %v1751
      %1756 = vst [vmem:[#allocation2 + $0xd8] sm:$0xff] %v1752
      %1757 = vrot.lane.b32.xlu0 %v1501, 112
      %v1758 = vpop.permute.xlu0 %1757
      %1759 = vrot.lane.b32.xlu0 %v1503, 112
      %v1760 = vpop.permute.xlu0 %1759
      %1761 = vrot.lane.b32.xlu0 %v1505, 112
      %v1762 = vpop.permute.xlu0 %1761
      %1763 = vrot.lane.b32.xlu0 %v1507, 112
      %v1764 = vpop.permute.xlu0 %1763
      %1765 = vrot.lane.b32.xlu0 %v1502, 112
      %v1766 = vpop.permute.xlu0 %1765
      %1767 = vrot.lane.b32.xlu0 %v1504, 112
      %v1768 = vpop.permute.xlu0 %1767
      %1769 = vrot.lane.b32.xlu0 %v1506, 112
      %v1770 = vpop.permute.xlu0 %1769
      %1771 = vrot.lane.b32.xlu0 %v1508, 112
      %v1772 = vpop.permute.xlu0 %1771
      %v1773 = vsel %vm934, %v1758, %v1766
      %v1774 = vsel %vm934, %v1760, %v1768
      %v1775 = vsel %vm934, %v1762, %v1770
      %v1776 = vsel %vm934, %v1764, %v1772
      %v1777 = vsel %vm934, %v1766, %v1758
      %v1778 = vsel %vm934, %v1768, %v1760
      %v1779 = vsel %vm934, %v1770, %v1762
      %v1780 = vsel %vm934, %v1772, %v1764
      %v1781 = vmul.f32 %v1773, %v940
      %v1782 = vmul.f32 %v1777, %v944
      %v1783 = vmul.f32 %v1774, %v940
      %v1784 = vmul.f32 %v1778, %v944
      %v1785 = vmul.f32 %v1775, %v940
      %v1786 = vmul.f32 %v1779, %v944
      %v1787 = vmul.f32 %v1776, %v940
      %v1788 = vmul.f32 %v1780, %v944
      %v1789 = vpack.c.bf16 %v1783, %v1781
      %v1790 = vpack.c.bf16 %v1784, %v1782
      %v1791 = vpack.c.bf16 %v1787, %v1785
      %v1792 = vpack.c.bf16 %v1788, %v1786
      %1793 = vst [vmem:[#allocation2 + $0xe0] sm:$0xff] %v1789
      %1794 = vst [vmem:[#allocation2 + $0xe8] sm:$0xff] %v1790
      %1795 = vst [vmem:[#allocation2 + $0xf0] sm:$0xff] %v1791
      %1796 = vst [vmem:[#allocation2 + $0xf8] sm:$0xff] %v1792
      %1797 = vrot.lane.b32.xlu0 %v1501, 111
      %v1798 = vpop.permute.xlu0 %1797
      %1799 = vrot.lane.b32.xlu0 %v1503, 111
      %v1800 = vpop.permute.xlu0 %1799
      %1801 = vrot.lane.b32.xlu0 %v1505, 111
      %v1802 = vpop.permute.xlu0 %1801
      %1803 = vrot.lane.b32.xlu0 %v1507, 111
      %v1804 = vpop.permute.xlu0 %1803
      %1805 = vrot.lane.b32.xlu0 %v1502, 111
      %v1806 = vpop.permute.xlu0 %1805
      %1807 = vrot.lane.b32.xlu0 %v1504, 111
      %v1808 = vpop.permute.xlu0 %1807
      %1809 = vrot.lane.b32.xlu0 %v1506, 111
      %v1810 = vpop.permute.xlu0 %1809
      %1811 = vrot.lane.b32.xlu0 %v1508, 111
      %v1812 = vpop.permute.xlu0 %1811
      %v1813 = vsel %vm961, %v1798, %v1806
      %v1814 = vsel %vm961, %v1800, %v1808
      %v1815 = vsel %vm961, %v1802, %v1810
      %v1816 = vsel %vm961, %v1804, %v1812
      %v1817 = vsel %vm961, %v1806, %v1798
      %v1818 = vsel %vm961, %v1808, %v1800
      %v1819 = vsel %vm961, %v1810, %v1802
      %v1820 = vsel %vm961, %v1812, %v1804
      %v1821 = vmul.f32 %v1813, %v967
      %v1822 = vmul.f32 %v1817, %v971
      %v1823 = vmul.f32 %v1814, %v967
      %v1824 = vmul.f32 %v1818, %v971
      %v1825 = vmul.f32 %v1815, %v967
      %v1826 = vmul.f32 %v1819, %v971
      %v1827 = vmul.f32 %v1816, %v967
      %v1828 = vmul.f32 %v1820, %v971
      %v1829 = vpack.c.bf16 %v1823, %v1821
      %v1830 = vpack.c.bf16 %v1824, %v1822
      %v1831 = vpack.c.bf16 %v1827, %v1825
      %v1832 = vpack.c.bf16 %v1828, %v1826
      %1833 = vst [vmem:[#allocation2 + $0x100] sm:$0xff] %v1829
      %1834 = vst [vmem:[#allocation2 + $0x108] sm:$0xff] %v1830
      %1835 = vst [vmem:[#allocation2 + $0x110] sm:$0xff] %v1831
      %1836 = vst [vmem:[#allocation2 + $0x118] sm:$0xff] %v1832
      %v1837 = vld [vmem:[#allocation2] sm:$0xff]
      %v1838 = vld [vmem:[#allocation2 + $0x8] sm:$0xff]
      %v1839 = vld [vmem:[#allocation2 + $0x10] sm:$0xff]
      %v1840 = vld [vmem:[#allocation2 + $0x18] sm:$0xff]
      %v1841 = vld [vmem:[#allocation2 + $0x20] sm:$0xff]
      %v1842 = vld [vmem:[#allocation2 + $0x28] sm:$0xff]
      %v1843 = vld [vmem:[#allocation2 + $0x30] sm:$0xff]
      %v1844 = vld [vmem:[#allocation2 + $0x38] sm:$0xff]
      %v1845 = vld [vmem:[#allocation2 + $0x40] sm:$0xff]
      %v1846 = vld [vmem:[#allocation2 + $0x48] sm:$0xff]
      %v1847 = vld [vmem:[#allocation2 + $0x50] sm:$0xff]
      %v1848 = vld [vmem:[#allocation2 + $0x58] sm:$0xff]
      %v1849 = vld [vmem:[#allocation2 + $0x60] sm:$0xff]
      %v1850 = vld [vmem:[#allocation2 + $0x68] sm:$0xff]
      %v1851 = vld [vmem:[#allocation2 + $0x70] sm:$0xff]
      %v1852 = vld [vmem:[#allocation2 + $0x78] sm:$0xff]
      %v1853 = vld [vmem:[#allocation2 + $0x80] sm:$0xff]
      %v1854 = vld [vmem:[#allocation2 + $0x88] sm:$0xff]
      %v1855 = vld [vmem:[#allocation2 + $0x90] sm:$0xff]
      %v1856 = vld [vmem:[#allocation2 + $0x98] sm:$0xff]
      %v1857 = vld [vmem:[#allocation2 + $0xa0] sm:$0xff]
      %v1858 = vld [vmem:[#allocation2 + $0xa8] sm:$0xff]
      %v1859 = vld [vmem:[#allocation2 + $0xb0] sm:$0xff]
      %v1860 = vld [vmem:[#allocation2 + $0xb8] sm:$0xff]
      %v1861 = vld [vmem:[#allocation2 + $0xc0] sm:$0xff]
      %v1862 = vld [vmem:[#allocation2 + $0xc8] sm:$0xff]
      %v1863 = vld [vmem:[#allocation2 + $0xd0] sm:$0xff]
      %v1864 = vld [vmem:[#allocation2 + $0xd8] sm:$0xff]
      %v1865 = vld [vmem:[#allocation2 + $0xe0] sm:$0xff]
      %v1866 = vld [vmem:[#allocation2 + $0xe8] sm:$0xff]
      %v1867 = vld [vmem:[#allocation2 + $0xf0] sm:$0xff]
      %v1868 = vld [vmem:[#allocation2 + $0xf8] sm:$0xff]
      %v1869 = vld [vmem:[#allocation2 + $0x100] sm:$0xff]
      %v1870 = vld [vmem:[#allocation2 + $0x108] sm:$0xff]
      %v1871 = vld [vmem:[#allocation2 + $0x110] sm:$0xff]
      %v1872 = vld [vmem:[#allocation2 + $0x118] sm:$0xff]
      %v1873 = vld [vmem:[%s8] sm:$0x3f]
      %v1874 = vld [vmem:[%s9] sm:$0xf]
      %1876 = vset.pattern.permute.xlu0 0
      %1877 = vperm.xlu0 %1876, %v1874
      %v1878 = vpop.permute.xlu0 %1877
      %v1881 = vcombine.high %v1873, %v1873
      %v1883 = vunpack.c.l.s4 1983009808
      %v1884 = vunpack.c.0.s8 %v1883
      %v1885 = vlaneseq
      %v1886 = vshrl.u32 %v1885, 7
      %v1887 = vsub.s32 %v1884, %v1886
      %v1888 = vrot.slane %v1873, %v1887
      %v1890 = vunpack.c.l.s4 1983009808
      %v1891 = vunpack.c.0.s8 %v1890
      %v1892 = vlaneseq
      %v1893 = vshrl.u32 %v1892, 7
      %v1894 = vsub.s32 %v1891, %v1893
      %v1895 = vrot.slane %v1881, %v1894
      %v1896 = vcombine.high %v1888, %v1888
      %v1900 = vsel %vm1105, %v1895, 0
      %1902 = vmatprep.subr.bf16.mxu0 %v1838
      %1903 = vmatpush1.bf16.msra.mxu0 %v1837
      %1904 = vmatprep.subr.bf16.mxu0 %v1840
      %1905 = vmatpush1.bf16.msra.mxu0 %v1839
      %1906 = vmatprep.subr.bf16.mxu0 %v1842
      %1907 = vmatpush1.bf16.msra.mxu0 %v1841
      %1908 = vmatprep.subr.bf16.mxu0 %v1844
      %1909 = vmatpush1.bf16.msra.mxu0 %v1843
      %1910 = vmatprep.subr.bf16.mxu0 %v1846
      %1911 = vmatpush1.bf16.msra.mxu0 %v1845
      %1912 = vmatprep.subr.bf16.mxu0 %v1848
      %1913 = vmatpush1.bf16.msra.mxu0 %v1847
      %1914 = vmatprep.subr.bf16.mxu0 %v1850
      %1915 = vmatpush1.bf16.msra.mxu0 %v1849
      %1916 = vmatprep.subr.bf16.mxu0 %v1852
      %1917 = vmatpush1.bf16.msra.mxu0 %v1851
      %1918 = vmatprep.subr.bf16.mxu0 %v1854
      %1919 = vmatpush1.bf16.msra.mxu0 %v1853
      %1920 = vmatprep.subr.bf16.mxu0 %v1856
      %1921 = vmatpush1.bf16.msra.mxu0 %v1855
      %1922 = vmatprep.subr.bf16.mxu0 %v1858
      %1923 = vmatpush1.bf16.msra.mxu0 %v1857
      %1924 = vmatprep.subr.bf16.mxu0 %v1860
      %1925 = vmatpush1.bf16.msra.mxu0 %v1859
      %1926 = vmatprep.subr.bf16.mxu0 %v1862
      %1927 = vmatpush1.bf16.msra.mxu0 %v1861
      %1928 = vmatprep.subr.bf16.mxu0 %v1864
      %1929 = vmatpush1.bf16.msra.mxu0 %v1863
      %1930 = vmatprep.subr.bf16.mxu0 %v1866
      %1931 = vmatpush1.bf16.msra.mxu0 %v1865
      %1932 = vmatprep.subr.bf16.mxu0 %v1868
      %1933 = vmatpush1.bf16.msra.mxu0 %v1867
      %1934 = vmatprep.mubr.bf16.mxu0 %v1896
      %1935 = vmatmul.mubr.bf16.gmra.mrb[0].mxu0 %v1888
      %v1936 = vpop.f32.mrb[0].mxu0
      %v1937 = vadd.f32 %v1878, %v1936
      %v1938 = vpop.f32.mrb[0].mxu0
      %v1939 = vadd.f32 %v1878, %v1938
      %v1940 = vpop.f32.mrb[0].mxu0
      %v1941 = vpop.f32.mrb[0].mxu0
      %1942 = vdwg.mxu0
      %1943 = vmatprep.subr.bf16.mxu0 %v1870
      %1944 = vmatpush1.bf16.msra.mxu0 %v1869
      %1945 = vmatprep.subr.bf16.mxu0 %v1872
      %1946 = vmatpush1.bf16.msra.mxu0 %v1871
      %1947 = vmatprep.subr.bf16.mxu0 0
      %1948 = vmatpush1.bf16.msra.mxu0 0
      %1949 = vmatprep.subr.bf16.mxu0 0
      %1950 = vmatpush1.bf16.msra.mxu0 0
      %1951 = vmatprep.subr.bf16.mxu0 0
      %1952 = vmatpush1.bf16.msra.mxu0 0
      %1953 = vmatprep.subr.bf16.mxu0 0
      %1954 = vmatpush1.bf16.msra.mxu0 0
      %1955 = vmatprep.subr.bf16.mxu0 0
      %1956 = vmatpush1.bf16.msra.mxu0 0
      %1957 = vmatprep.subr.bf16.mxu0 0
      %1958 = vmatpush1.bf16.msra.mxu0 0
      %1959 = vmatprep.subr.bf16.mxu0 0
      %1960 = vmatpush1.bf16.msra.mxu0 0
      %1961 = vmatprep.subr.bf16.mxu0 0
      %1962 = vmatpush1.bf16.msra.mxu0 0
      %1963 = vmatprep.subr.bf16.mxu0 0
      %1964 = vmatpush1.bf16.msra.mxu0 0
      %1965 = vmatprep.subr.bf16.mxu0 0
      %1966 = vmatpush1.bf16.msra.mxu0 0
      %1967 = vmatprep.subr.bf16.mxu0 0
      %1968 = vmatpush1.bf16.msra.mxu0 0
      %1969 = vmatprep.subr.bf16.mxu0 0
      %1970 = vmatpush1.bf16.msra.mxu0 0
      %1971 = vmatprep.subr.bf16.mxu0 0
      %1972 = vmatpush1.bf16.msra.mxu0 0
      %1973 = vmatprep.subr.bf16.mxu0 0
      %1974 = vmatpush1.bf16.msra.mxu0 0
      %1975 = vmatprep.mubr.bf16.mxu0 0
      %1976 = vmatmul.mubr.bf16.gmra.mrb[0].mxu0 %v1900
      %v1977 = vpop.f32.mrb[0].mxu0
      %v1978 = vadd.f32 %v1937, %v1977
      %v1979 = vpop.f32.mrb[0].mxu0
      %v1980 = vadd.f32 %v1939, %v1979
      %v1981 = vpop.f32.mrb[0].mxu0
      %v1982 = vpop.f32.mrb[0].mxu0
      %1983 = vdwg.mxu0
      %v1984 = vld [vmem:[%s10] sm:$0xf]
      %v1985 = vld [vmem:[%s11] sm:$0xf]
      %1987 = vset.pattern.permute.xlu0 0
      %1988 = vperm.xlu0 %1987, %v1985
      %v1989 = vpop.permute.xlu0 %1988
      %vm1991 = vcmask 31744
      %v1993 = vsel %vm1991, %v1984, 0
      %vm1995 = vcmask 1043456
      %v1997 = vsel %vm1995, %v1978, 0
      %v2000 = vsel %vm1995, %v1980, 0
      %2002 = vmatprep.subr.mxu0 %v2000
      %2003 = vmatpush1.msra.mxu0 %v1997
      %2004 = vmatprep.subr.mxu0 0.0
      %2005 = vmatpush1.msra.mxu0 0.0
      %2006 = vmatprep.subr.mxu0 0.0
      %2007 = vmatpush1.msra.mxu0 0.0
      %2008 = vmatprep.subr.mxu0 0.0
      %2009 = vmatpush1.msra.mxu0 0.0
      %2010 = vmatprep.subr.mxu0 0.0
      %2011 = vmatpush1.msra.mxu0 0.0
      %2012 = vmatprep.subr.mxu0 0.0
      %2013 = vmatpush1.msra.mxu0 0.0
      %2014 = vmatprep.subr.mxu0 0.0
      %2015 = vmatpush1.msra.mxu0 0.0
      %2016 = vmatprep.subr.mxu0 0.0
      %2017 = vmatpush1.msra.mxu0 0.0
      %2018 = vmatprep.subr.mxu0 0.0
      %2019 = vmatpush1.msra.mxu0 0.0
      %2020 = vmatprep.subr.mxu0 0.0
      %2021 = vmatpush1.msra.mxu0 0.0
      %2022 = vmatprep.subr.mxu0 0.0
      %2023 = vmatpush1.msra.mxu0 0.0
      %2024 = vmatprep.subr.mxu0 0.0
      %2025 = vmatpush1.msra.mxu0 0.0
      %2026 = vmatprep.subr.mxu0 0.0
      %2027 = vmatpush1.msra.mxu0 0.0
      %2028 = vmatprep.subr.mxu0 0.0
      %2029 = vmatpush1.msra.mxu0 0.0
      %2030 = vmatprep.subr.mxu0 0.0
      %2031 = vmatpush1.msra.mxu0 0.0
      %2032 = vmatprep.subr.mxu0 0.0
      %2033 = vmatpush1.msra.mxu0 0.0
      %2034 = vmatprep.subr.mxu0 0.0
      %2035 = vmatpush1.msra.mxu0 0.0
      %2036 = vmatprep.subr.mxu0 0.0
      %2037 = vmatpush1.msra.mxu0 0.0
      %2038 = vmatprep.subr.mxu0 0.0
      %2039 = vmatpush1.msra.mxu0 0.0
      %2040 = vmatprep.subr.mxu0 0.0
      %2041 = vmatpush1.msra.mxu0 0.0
      %2042 = vmatprep.subr.mxu0 0.0
      %2043 = vmatpush1.msra.mxu0 0.0
      %2044 = vmatprep.subr.mxu0 0.0
      %2045 = vmatpush1.msra.mxu0 0.0
      %2046 = vmatprep.subr.mxu0 0.0
      %2047 = vmatpush1.msra.mxu0 0.0
      %2048 = vmatprep.subr.mxu0 0.0
      %2049 = vmatpush1.msra.mxu0 0.0
      %2050 = vmatprep.subr.mxu0 0.0
      %2051 = vmatpush1.msra.mxu0 0.0
      %2052 = vmatprep.subr.mxu0 0.0
      %2053 = vmatpush1.msra.mxu0 0.0
      %2054 = vmatprep.subr.mxu0 0.0
      %2055 = vmatpush1.msra.mxu0 0.0
      %2056 = vmatprep.subr.mxu0 0.0
      %2057 = vmatpush1.msra.mxu0 0.0
      %2058 = vmatprep.subr.mxu0 0.0
      %2059 = vmatpush1.msra.mxu0 0.0
      %2060 = vmatprep.subr.mxu0 0.0
      %2061 = vmatpush1.msra.mxu0 0.0
      %2062 = vmatprep.subr.mxu0 0.0
      %2063 = vmatpush1.msra.mxu0 0.0
      %2064 = vmatprep.subr.mxu0 0.0
      %2065 = vmatpush1.msra.mxu0 0.0
      %2066 = vmatprep.mubr.f32.mxu0 0.0
      %2067 = vmatmul.mubr.f32.gmra.mrb[0].mxu0 %v1993
      %v2068 = vpop.f32.mrb[0].mxu0
      %v2069 = vadd.f32 %v1989, %v2068
      %v2070 = vpop.f32.mrb[0].mxu0
      %v2071 = vadd.f32 %v1989, %v2070
      %2072 = vdwg.mxu0
      %v2073 = vld [vmem:[%s12] sm:$0xff]
      %v2074 = vld [vmem:[%s12 + $0x8] sm:$0xff]
      %v2076 = vsel %vm1991, %v2073, 0
      %v2079 = vsel %vm1991, %v2074, 0
      %v2082 = vsel %vm1995, %v2069, 0
      %v2085 = vsel %vm1995, %v2071, 0
      %2087 = vmatprep.subr.mxu0 %v2085
      %2088 = vmatpush1.msra.mxu0 %v2082
      %2089 = vmatprep.subr.mxu0 0.0
      %2090 = vmatpush1.msra.mxu0 0.0
      %2091 = vmatprep.subr.mxu0 0.0
      %2092 = vmatpush1.msra.mxu0 0.0
      %2093 = vmatprep.subr.mxu0 0.0
      %2094 = vmatpush1.msra.mxu0 0.0
      %2095 = vmatprep.subr.mxu0 0.0
      %2096 = vmatpush1.msra.mxu0 0.0
      %2097 = vmatprep.subr.mxu0 0.0
      %2098 = vmatpush1.msra.mxu0 0.0
      %2099 = vmatprep.subr.mxu0 0.0
      %2100 = vmatpush1.msra.mxu0 0.0
      %2101 = vmatprep.subr.mxu0 0.0
      %2102 = vmatpush1.msra.mxu0 0.0
      %2103 = vmatprep.subr.mxu0 0.0
      %2104 = vmatpush1.msra.mxu0 0.0
      %2105 = vmatprep.subr.mxu0 0.0
      %2106 = vmatpush1.msra.mxu0 0.0
      %2107 = vmatprep.subr.mxu0 0.0
      %2108 = vmatpush1.msra.mxu0 0.0
      %2109 = vmatprep.subr.mxu0 0.0
      %2110 = vmatpush1.msra.mxu0 0.0
      %2111 = vmatprep.subr.mxu0 0.0
      %2112 = vmatpush1.msra.mxu0 0.0
      %2113 = vmatprep.subr.mxu0 0.0
      %2114 = vmatpush1.msra.mxu0 0.0
      %2115 = vmatprep.subr.mxu0 0.0
      %2116 = vmatpush1.msra.mxu0 0.0
      %2117 = vmatprep.subr.mxu0 0.0
      %2118 = vmatpush1.msra.mxu0 0.0
      %2119 = vmatprep.subr.mxu0 0.0
      %2120 = vmatpush1.msra.mxu0 0.0
      %2121 = vmatprep.subr.mxu0 0.0
      %2122 = vmatpush1.msra.mxu0 0.0
      %2123 = vmatprep.subr.mxu0 0.0
      %2124 = vmatpush1.msra.mxu0 0.0
      %2125 = vmatprep.subr.mxu0 0.0
      %2126 = vmatpush1.msra.mxu0 0.0
      %2127 = vmatprep.subr.mxu0 0.0
      %2128 = vmatpush1.msra.mxu0 0.0
      %2129 = vmatprep.subr.mxu0 0.0
      %2130 = vmatpush1.msra.mxu0 0.0
      %2131 = vmatprep.subr.mxu0 0.0
      %2132 = vmatpush1.msra.mxu0 0.0
      %2133 = vmatprep.subr.mxu0 0.0
      %2134 = vmatpush1.msra.mxu0 0.0
      %2135 = vmatprep.subr.mxu0 0.0
      %2136 = vmatpush1.msra.mxu0 0.0
      %2137 = vmatprep.subr.mxu0 0.0
      %2138 = vmatpush1.msra.mxu0 0.0
      %2139 = vmatprep.subr.mxu0 0.0
      %2140 = vmatpush1.msra.mxu0 0.0
      %2141 = vmatprep.subr.mxu0 0.0
      %2142 = vmatpush1.msra.mxu0 0.0
      %2143 = vmatprep.subr.mxu0 0.0
      %2144 = vmatpush1.msra.mxu0 0.0
      %2145 = vmatprep.subr.mxu0 0.0
      %2146 = vmatpush1.msra.mxu0 0.0
      %2147 = vmatprep.subr.mxu0 0.0
      %2148 = vmatpush1.msra.mxu0 0.0
      %2149 = vmatprep.subr.mxu0 0.0
      %2150 = vmatpush1.msra.mxu0 0.0
      %2151 = vmatprep.mubr.f32.mxu0 0.0
      %2152 = vmatmul.mubr.f32.gmra.mrb[0].mxu0 %v2076
      %v2153 = vpop.f32.mrb[0].mxu0
      %v2154 = vadd.f32 0.0, %v2153
      %v2155 = vpop.f32.mrb[0].mxu0
      %v2156 = vadd.f32 0.0, %v2155
      %2157 = vmatprep.mubr.f32.mxu0 0.0
      %2158 = vmatmul.mubr.f32.gmra.mrb[0].mxu0 %v2079
      %v2159 = vpop.f32.mrb[0].mxu0
      %v2160 = vadd.f32 0.0, %v2159
      %v2161 = vpop.f32.mrb[0].mxu0
      %v2162 = vadd.f32 0.0, %v2161
      %2163 = vdwg.mxu0
      %v2164 = vmul.f32 %v2073, %v2073
      %v2165 = vmul.f32 %v2074, %v2074
      %v2166 = vsel %vm1991, %v2164, 0.0
      %2167 = vadd.xlane.f32.xlu0 %v2166
      %v2168 = vpop.xlane.xlu0 %2167
      %v2169 = vsel %vm1991, %v2165, 0.0
      %2170 = vadd.xlane.f32.xlu0 %v2169
      %v2171 = vpop.xlane.xlu0 %2170
      %v2172 = vmul.f32 %v2154, 2.0
      %v2173 = vmul.f32 %v2156, 2.0
      %v2174 = vmul.f32 %v2160, 2.0
      %v2175 = vmul.f32 %v2162, 2.0
      %v2176 = vsub.f32 %v2168, %v2172
      %v2177 = vsub.f32 %v2168, %v2173
      %v2178 = vsub.f32 %v2171, %v2174
      %v2179 = vsub.f32 %v2171, %v2175
      %v2180 = vlaneseq
      %v2181 = vshrl.u32 %v2180, 7
      %v2182 = vadd.s32 %v2181, 8
      %v2183 = vmin.f32 %v2176, %v2178
      %v2184 = vrot.slane %v2183, 4
      %v2185 = vmin.f32 %v2183, %v2184
      %v2186 = vrot.slane %v2185, 2
      %v2187 = vmin.f32 %v2185, %v2186
      %v2188 = vrot.slane %v2187, 1
      %v2189 = vmin.f32 %v2187, %v2188
      %v2190 = vmin.f32 %v2177, %v2179
      %v2191 = vrot.slane %v2190, 4
      %v2192 = vmin.f32 %v2190, %v2191
      %v2193 = vrot.slane %v2192, 2
      %v2194 = vmin.f32 %v2192, %v2193
      %v2195 = vrot.slane %v2194, 1
      %v2196 = vmin.f32 %v2194, %v2195
      %vm2197 = vcmp.le.f32.partialorder %v2176, %v2189
      %vm2198 = vcmp.le.f32.partialorder %v2177, %v2196
      %vm2199 = vcmp.le.f32.partialorder %v2178, %v2189
      %vm2200 = vcmp.le.f32.partialorder %v2179, %v2196
      %v2201 = vsel %vm2197, %v2181, 16
      %v2202 = vsel %vm2198, %v2181, 16
      %v2203 = vsel %vm2199, %v2182, 16
      %v2204 = vsel %vm2200, %v2182, 16
      %vm2205 = vcmp.lt.s32.totalorder %v2201, %v2203
      %v2206 = vsel %vm2205, %v2201, %v2203
      %v2207 = vrot.slane %v2206, 4
      %vm2208 = vcmp.lt.s32.totalorder %v2206, %v2207
      %v2209 = vsel %vm2208, %v2206, %v2207
      %v2210 = vrot.slane %v2209, 2
      %vm2211 = vcmp.lt.s32.totalorder %v2209, %v2210
      %v2212 = vsel %vm2211, %v2209, %v2210
      %v2213 = vrot.slane %v2212, 1
      %vm2214 = vcmp.lt.s32.totalorder %v2212, %v2213
      %v2215 = vsel %vm2214, %v2212, %v2213
      %vm2216 = vcmp.lt.s32.totalorder %v2202, %v2204
      %v2217 = vsel %vm2216, %v2202, %v2204
      %v2218 = vrot.slane %v2217, 4
      %vm2219 = vcmp.lt.s32.totalorder %v2217, %v2218
      %v2220 = vsel %vm2219, %v2217, %v2218
      %v2221 = vrot.slane %v2220, 2
      %vm2222 = vcmp.lt.s32.totalorder %v2220, %v2221
      %v2223 = vsel %vm2222, %v2220, %v2221
      %v2224 = vrot.slane %v2223, 1
      %vm2225 = vcmp.lt.s32.totalorder %v2223, %v2224
      %v2226 = vsel %vm2225, %v2223, %v2224
      %vm2227 = vcmp.eq.s32.totalorder %v2181, %v2215
      %vm2228 = vcmp.eq.s32.totalorder %v2181, %v2226
      %vm2229 = vcmp.eq.s32.totalorder %v2182, %v2215
      %vm2230 = vcmp.eq.s32.totalorder %v2182, %v2226
      %v2231 = vsel %vm2227, 1, 0
      %v2232 = vsel %vm2228, 1, 0
      %v2233 = vsel %vm2229, 1, 0
      %v2234 = vsel %vm2230, 1, 0
      %v2235 = vcvt.s32.f32 %v2231
      %v2236 = vcvt.s32.f32 %v2232
      %v2237 = vcvt.s32.f32 %v2233
      %v2238 = vcvt.s32.f32 %v2234
      %v2239 = vld [vmem:[%s13] sm:$0xf]
      %vm2240 = vcmask 130048
      %v2242 = vsel %vm2240, %v2239, 0
      %2244 = vmatprep.subr.mxu0 %v2236
      %2245 = vmatpush1.msra.mxu0 %v2235
      %2246 = vmatprep.subr.mxu0 %v2238
      %2247 = vmatpush1.msra.mxu0 %v2237
      %2248 = vmatprep.subr.mxu0 0.0
      %2249 = vmatpush1.msra.mxu0 0.0
      %2250 = vmatprep.subr.mxu0 0.0
      %2251 = vmatpush1.msra.mxu0 0.0
      %2252 = vmatprep.subr.mxu0 0.0
      %2253 = vmatpush1.msra.mxu0 0.0
      %2254 = vmatprep.subr.mxu0 0.0
      %2255 = vmatpush1.msra.mxu0 0.0
      %2256 = vmatprep.subr.mxu0 0.0
      %2257 = vmatpush1.msra.mxu0 0.0
      %2258 = vmatprep.subr.mxu0 0.0
      %2259 = vmatpush1.msra.mxu0 0.0
      %2260 = vmatprep.subr.mxu0 0.0
      %2261 = vmatpush1.msra.mxu0 0.0
      %2262 = vmatprep.subr.mxu0 0.0
      %2263 = vmatpush1.msra.mxu0 0.0
      %2264 = vmatprep.subr.mxu0 0.0
      %2265 = vmatpush1.msra.mxu0 0.0
      %2266 = vmatprep.subr.mxu0 0.0
      %2267 = vmatpush1.msra.mxu0 0.0
      %2268 = vmatprep.subr.mxu0 0.0
      %2269 = vmatpush1.msra.mxu0 0.0
      %2270 = vmatprep.subr.mxu0 0.0
      %2271 = vmatpush1.msra.mxu0 0.0
      %2272 = vmatprep.subr.mxu0 0.0
      %2273 = vmatpush1.msra.mxu0 0.0
      %2274 = vmatprep.subr.mxu0 0.0
      %2275 = vmatpush1.msra.mxu0 0.0
      %2276 = vmatprep.subr.mxu0 0.0
      %2277 = vmatpush1.msra.mxu0 0.0
      %2278 = vmatprep.subr.mxu0 0.0
      %2279 = vmatpush1.msra.mxu0 0.0
      %2280 = vmatprep.subr.mxu0 0.0
      %2281 = vmatpush1.msra.mxu0 0.0
      %2282 = vmatprep.subr.mxu0 0.0
      %2283 = vmatpush1.msra.mxu0 0.0
      %2284 = vmatprep.subr.mxu0 0.0
      %2285 = vmatpush1.msra.mxu0 0.0
      %2286 = vmatprep.subr.mxu0 0.0
      %2287 = vmatpush1.msra.mxu0 0.0
      %2288 = vmatprep.subr.mxu0 0.0
      %2289 = vmatpush1.msra.mxu0 0.0
      %2290 = vmatprep.subr.mxu0 0.0
      %2291 = vmatpush1.msra.mxu0 0.0
      %2292 = vmatprep.subr.mxu0 0.0
      %2293 = vmatpush1.msra.mxu0 0.0
      %2294 = vmatprep.subr.mxu0 0.0
      %2295 = vmatpush1.msra.mxu0 0.0
      %2296 = vmatprep.subr.mxu0 0.0
      %2297 = vmatpush1.msra.mxu0 0.0
      %2298 = vmatprep.subr.mxu0 0.0
      %2299 = vmatpush1.msra.mxu0 0.0
      %2300 = vmatprep.subr.mxu0 0.0
      %2301 = vmatpush1.msra.mxu0 0.0
      %2302 = vmatprep.subr.mxu0 0.0
      %2303 = vmatpush1.msra.mxu0 0.0
      %2304 = vmatprep.subr.mxu0 0.0
      %2305 = vmatpush1.msra.mxu0 0.0
      %2306 = vmatprep.subr.mxu0 0.0
      %2307 = vmatpush1.msra.mxu0 0.0
      %2308 = vmatprep.mubr.f32.mxu0 0.0
      %2309 = vmatmul.mubr.f32.gmra.mrb[0].mxu0 %v2242
      %v2310 = vpop.f32.mrb[0].mxu0
      %v2311 = vadd.f32 0.0, %v2310
      %v2312 = vpop.f32.mrb[0].mxu0
      %v2313 = vadd.f32 0.0, %v2312
      %2314 = vdwg.mxu0
      %v2315 = vsub.f32 %v2311, %v2069
      %v2316 = vsub.f32 %v2313, %v2071
      %v2317 = vmul.f32 %v2315, %v2315
      %v2318 = vmul.f32 %v2316, %v2316
      %v2319 = vsel %vm1995, %v2317, 0.0
      %v2320 = vsel %vm1995, %v2318, 0.0
      %v2321 = vadd.f32 %v2319, %v2320
      %2322 = vadd.xlane.f32.xlu0 %v2321
      %v2323 = vpop.xlane.xlu0 %2322
      %v2324 = vrot.slane %v2323, 4
      %v2325 = vadd.f32 %v2323, %v2324
      %v2326 = vrot.slane %v2325, 2
      %v2327 = vadd.f32 %v2325, %v2326
      %v2328 = vrot.slane %v2327, 1
      %v2329 = vadd.f32 %v2327, %v2328
      %s2330 = vtos %v2329
      %v2331 = vrcp.pop 1024.0
      %s2332 = vtos %v2331
      %s2333 = smul.f32 %s2330, %s2332
      %v2334 = vstv %s2333
      %vm2335 = vcmask 0
      %2336 = vst.msk [vmem:[%s758] sm:$0x1] %vm2335, %v2334
      %v2339 = vcombine.low %v2311, %v2313
      %2341 = vst [vmem:[%s755] sm:$0xff] %v2339
      %v2342 = vld [vmem:[%s14] sm:$0xf]
      %v2343 = vld [vmem:[%s15] sm:$0xf]
      %2345 = vset.pattern.permute.xlu0 0
      %2346 = vperm.xlu0 %2345, %v2343
      %v2347 = vpop.permute.xlu0 %2346
      %v2350 = vsel %vm1991, %v2342, 0
      %v2352 = vsel %vm1995, %v2311, 0
      %v2354 = vsel %vm1995, %v2313, 0
      %2356 = vmatprep.subr.mxu0 %v2354
      %2357 = vmatpush1.msra.mxu0 %v2352
      %2358 = vmatprep.subr.mxu0 0.0
      %2359 = vmatpush1.msra.mxu0 0.0
      %2360 = vmatprep.subr.mxu0 0.0
      %2361 = vmatpush1.msra.mxu0 0.0
      %2362 = vmatprep.subr.mxu0 0.0
      %2363 = vmatpush1.msra.mxu0 0.0
      %2364 = vmatprep.subr.mxu0 0.0
      %2365 = vmatpush1.msra.mxu0 0.0
      %2366 = vmatprep.subr.mxu0 0.0
      %2367 = vmatpush1.msra.mxu0 0.0
      %2368 = vmatprep.subr.mxu0 0.0
      %2369 = vmatpush1.msra.mxu0 0.0
      %2370 = vmatprep.subr.mxu0 0.0
      %2371 = vmatpush1.msra.mxu0 0.0
      %2372 = vmatprep.subr.mxu0 0.0
      %2373 = vmatpush1.msra.mxu0 0.0
      %2374 = vmatprep.subr.mxu0 0.0
      %2375 = vmatpush1.msra.mxu0 0.0
      %2376 = vmatprep.subr.mxu0 0.0
      %2377 = vmatpush1.msra.mxu0 0.0
      %2378 = vmatprep.subr.mxu0 0.0
      %2379 = vmatpush1.msra.mxu0 0.0
      %2380 = vmatprep.subr.mxu0 0.0
      %2381 = vmatpush1.msra.mxu0 0.0
      %2382 = vmatprep.subr.mxu0 0.0
      %2383 = vmatpush1.msra.mxu0 0.0
      %2384 = vmatprep.subr.mxu0 0.0
      %2385 = vmatpush1.msra.mxu0 0.0
      %2386 = vmatprep.subr.mxu0 0.0
      %2387 = vmatpush1.msra.mxu0 0.0
      %2388 = vmatprep.subr.mxu0 0.0
      %2389 = vmatpush1.msra.mxu0 0.0
      %2390 = vmatprep.subr.mxu0 0.0
      %2391 = vmatpush1.msra.mxu0 0.0
      %2392 = vmatprep.subr.mxu0 0.0
      %2393 = vmatpush1.msra.mxu0 0.0
      %2394 = vmatprep.subr.mxu0 0.0
      %2395 = vmatpush1.msra.mxu0 0.0
      %2396 = vmatprep.subr.mxu0 0.0
      %2397 = vmatpush1.msra.mxu0 0.0
      %2398 = vmatprep.subr.mxu0 0.0
      %2399 = vmatpush1.msra.mxu0 0.0
      %2400 = vmatprep.subr.mxu0 0.0
      %2401 = vmatpush1.msra.mxu0 0.0
      %2402 = vmatprep.subr.mxu0 0.0
      %2403 = vmatpush1.msra.mxu0 0.0
      %2404 = vmatprep.subr.mxu0 0.0
      %2405 = vmatpush1.msra.mxu0 0.0
      %2406 = vmatprep.subr.mxu0 0.0
      %2407 = vmatpush1.msra.mxu0 0.0
      %2408 = vmatprep.subr.mxu0 0.0
      %2409 = vmatpush1.msra.mxu0 0.0
      %2410 = vmatprep.subr.mxu0 0.0
      %2411 = vmatpush1.msra.mxu0 0.0
      %2412 = vmatprep.subr.mxu0 0.0
      %2413 = vmatpush1.msra.mxu0 0.0
      %2414 = vmatprep.subr.mxu0 0.0
      %2415 = vmatpush1.msra.mxu0 0.0
      %2416 = vmatprep.subr.mxu0 0.0
      %2417 = vmatpush1.msra.mxu0 0.0
      %2418 = vmatprep.subr.mxu0 0.0
      %2419 = vmatpush1.msra.mxu0 0.0
      %2420 = vmatprep.mubr.f32.mxu0 0.0
      %2421 = vmatmul.mubr.f32.gmra.mrb[0].mxu0 %v2350
      %v2422 = vpop.f32.mrb[0].mxu0
      %v2423 = vadd.f32 %v2347, %v2422
      %v2424 = vpop.f32.mrb[0].mxu0
      %v2425 = vadd.f32 %v2347, %v2424
      %2426 = vdwg.mxu0
      %2427 = vrot.lane.b32.xlu0 %v2423, 17
      %v2428 = vpop.permute.xlu0 %2427
      %2429 = vrot.lane.b32.xlu0 %v2425, 17
      %v2430 = vpop.permute.xlu0 %2429
      %v2431 = vsel %vm774, %v2428, %v2430
      %v2432 = vsel %vm774, %v2430, %v2428
      %v2433 = vmul.f32 %v2432, %v780
      %v2434 = vmul.f32 %v2431, %v784
      %v2435 = vpack.c.bf16 %v2433, %v2433
      %v2436 = vpack.c.bf16 %v2434, %v2434
      %2437 = vst [vmem:[#allocation2] sm:$0x3] %v2435
      %2438 = vst [vmem:[#allocation2 + $0x8] sm:$0x3] %v2436
      %2439 = vrot.lane.b32.xlu0 %v2423, 16
      %v2440 = vpop.permute.xlu0 %2439
      %2441 = vrot.lane.b32.xlu0 %v2425, 16
      %v2442 = vpop.permute.xlu0 %2441
      %v2443 = vsel %vm795, %v2440, %v2442
      %v2444 = vsel %vm795, %v2442, %v2440
      %v2445 = vmul.f32 %v2444, %v801
      %v2446 = vmul.f32 %v2443, %v805
      %v2447 = vpack.c.bf16 %v2445, %v2445
      %v2448 = vpack.c.bf16 %v2446, %v2446
      %v2451 = vrot.slane %v2447, 6
      %v2452 = vrot.slane %v2448, 6
      %2455 = vst [vmem:[#allocation2] sm:$0xc] %v2451
      %2456 = vst [vmem:[#allocation2 + $0x8] sm:$0xc] %v2452
      %2457 = vrot.lane.b32.xlu0 %v2423, 15
      %v2458 = vpop.permute.xlu0 %2457
      %2459 = vrot.lane.b32.xlu0 %v2425, 15
      %v2460 = vpop.permute.xlu0 %2459
      %v2461 = vsel %vm822, %v2458, %v2460
      %v2462 = vsel %vm822, %v2460, %v2458
      %v2463 = vmul.f32 %v2462, %v828
      %v2464 = vmul.f32 %v2461, %v832
      %v2465 = vpack.c.bf16 %v2463, %v2463
      %v2466 = vpack.c.bf16 %v2464, %v2464
      %v2469 = vrot.slane %v2465, 4
      %v2470 = vrot.slane %v2466, 4
      %2473 = vst [vmem:[#allocation2] sm:$0x30] %v2469
      %2474 = vst [vmem:[#allocation2 + $0x8] sm:$0x30] %v2470
      %2475 = vrot.lane.b32.xlu0 %v2423, 1
      %v2476 = vpop.permute.xlu0 %2475
      %2477 = vrot.lane.b32.xlu0 %v2425, 1
      %v2478 = vpop.permute.xlu0 %2477
      %v2479 = vsel %vm849, %v2476, %v2478
      %v2480 = vsel %vm849, %v2478, %v2476
      %v2481 = vmul.f32 %v2480, %v855
      %v2482 = vmul.f32 %v2479, %v859
      %v2483 = vpack.c.bf16 %v2481, %v2481
      %v2484 = vpack.c.bf16 %v2482, %v2482
      %v2487 = vrot.slane %v2483, 2
      %v2488 = vrot.slane %v2484, 2
      %2491 = vst [vmem:[#allocation2] sm:$0xc0] %v2487
      %2492 = vst [vmem:[#allocation2 + $0x8] sm:$0xc0] %v2488
      %v2493 = vpack.c.bf16 %v2423, %v2423
      %v2494 = vpack.c.bf16 %v2425, %v2425
      %2495 = vst [vmem:[#allocation2 + $0x10] sm:$0x3] %v2493
      %2496 = vst [vmem:[#allocation2 + $0x18] sm:$0x3] %v2494
      %2497 = vrot.lane.b32.xlu0 %v2423, 127
      %v2498 = vpop.permute.xlu0 %2497
      %2499 = vrot.lane.b32.xlu0 %v2425, 127
      %v2500 = vpop.permute.xlu0 %2499
      %v2501 = vsel %vm880, %v2498, %v2500
      %v2502 = vsel %vm880, %v2500, %v2498
      %v2503 = vmul.f32 %v2501, %v886
      %v2504 = vmul.f32 %v2502, %v890
      %v2505 = vpack.c.bf16 %v2503, %v2503
      %v2506 = vpack.c.bf16 %v2504, %v2504
      %v2509 = vrot.slane %v2505, 6
      %v2510 = vrot.slane %v2506, 6
      %2513 = vst [vmem:[#allocation2 + $0x10] sm:$0xc] %v2509
      %2514 = vst [vmem:[#allocation2 + $0x18] sm:$0xc] %v2510
      %2515 = vrot.lane.b32.xlu0 %v2423, 113
      %v2516 = vpop.permute.xlu0 %2515
      %2517 = vrot.lane.b32.xlu0 %v2425, 113
      %v2518 = vpop.permute.xlu0 %2517
      %v2519 = vsel %vm907, %v2516, %v2518
      %v2520 = vsel %vm907, %v2518, %v2516
      %v2521 = vmul.f32 %v2519, %v913
      %v2522 = vmul.f32 %v2520, %v917
      %v2523 = vpack.c.bf16 %v2521, %v2521
      %v2524 = vpack.c.bf16 %v2522, %v2522
      %v2527 = vrot.slane %v2523, 4
      %v2528 = vrot.slane %v2524, 4
      %2531 = vst [vmem:[#allocation2 + $0x10] sm:$0x30] %v2527
      %2532 = vst [vmem:[#allocation2 + $0x18] sm:$0x30] %v2528
      %2533 = vrot.lane.b32.xlu0 %v2423, 112
      %v2534 = vpop.permute.xlu0 %2533
      %2535 = vrot.lane.b32.xlu0 %v2425, 112
      %v2536 = vpop.permute.xlu0 %2535
      %v2537 = vsel %vm934, %v2534, %v2536
      %v2538 = vsel %vm934, %v2536, %v2534
      %v2539 = vmul.f32 %v2537, %v940
      %v2540 = vmul.f32 %v2538, %v944
      %v2541 = vpack.c.bf16 %v2539, %v2539
      %v2542 = vpack.c.bf16 %v2540, %v2540
      %v2545 = vrot.slane %v2541, 2
      %v2546 = vrot.slane %v2542, 2
      %2549 = vst [vmem:[#allocation2 + $0x10] sm:$0xc0] %v2545
      %2550 = vst [vmem:[#allocation2 + $0x18] sm:$0xc0] %v2546
      %2551 = vrot.lane.b32.xlu0 %v2423, 111
      %v2552 = vpop.permute.xlu0 %2551
      %2553 = vrot.lane.b32.xlu0 %v2425, 111
      %v2554 = vpop.permute.xlu0 %2553
      %v2555 = vsel %vm961, %v2552, %v2554
      %v2556 = vsel %vm961, %v2554, %v2552
      %v2557 = vmul.f32 %v2555, %v967
      %v2558 = vmul.f32 %v2556, %v971
      %v2559 = vpack.c.bf16 %v2557, %v2557
      %v2560 = vpack.c.bf16 %v2558, %v2558
      %2561 = vst [vmem:[#allocation2 + $0x20] sm:$0x3] %v2559
      %2562 = vst [vmem:[#allocation2 + $0x28] sm:$0x3] %v2560
      %v2563 = vld [vmem:[#allocation2] sm:$0xff]
      %v2564 = vld [vmem:[#allocation2 + $0x8] sm:$0xff]
      %v2565 = vld [vmem:[#allocation2 + $0x10] sm:$0xff]
      %v2566 = vld [vmem:[#allocation2 + $0x18] sm:$0xff]
      %v2567 = vld [vmem:[#allocation2 + $0x20] sm:$0x3]
      %v2568 = vld [vmem:[#allocation2 + $0x28] sm:$0x3]
      %v2569 = vld [vmem:[%s16] sm:$0xf]
      %v2570 = vld [vmem:[%s16 + $0x4] sm:$0xf]
      %v2571 = vld [vmem:[%s16 + $0x8] sm:$0xf]
      %v2572 = vld [vmem:[%s16 + $0xc] sm:$0xf]
      %v2573 = vld [vmem:[%s17] sm:$0xff]
      %v2574 = vld [vmem:[%s17 + $0x8] sm:$0xff]
      %v2575 = vld [vmem:[%s17 + $0x10] sm:$0xff]
      %v2576 = vld [vmem:[%s17 + $0x18] sm:$0xff]
      %2578 = vset.pattern.permute.xlu0 0
      %2579 = vperm.xlu0 %2578, %v2573
      %v2580 = vpop.permute.xlu0 %2579
      %2583 = vset.pattern.permute.xlu0 0
      %2584 = vperm.xlu0 %2583, %v2574
      %v2585 = vpop.permute.xlu0 %2584
      %2588 = vset.pattern.permute.xlu0 0
      %2589 = vperm.xlu0 %2588, %v2575
      %v2590 = vpop.permute.xlu0 %2589
      %2593 = vset.pattern.permute.xlu0 0
      %2594 = vperm.xlu0 %2593, %v2576
      %v2595 = vpop.permute.xlu0 %2594
      %v2601 = vunpack.c.l.b16 %v2569
      %v2602 = vunpack.c.l.b16 %v2570
      %v2603 = vunpack.c.l.b16 %v2571
      %v2604 = vunpack.c.l.b16 %v2572
      %v2605 = vpack.c.b16 %v2602, %v2601
      %v2606 = vpack.c.b16 %v2604, %v2603
      %v2608 = vsel %vm1022, %v2605, 0
      %v2611 = vsel %vm1022, %v2606, 0
      %v2614 = vsel %vm1029, %v2567, 0
      %v2617 = vsel %vm1029, %v2568, 0
      %2619 = vmatprep.subr.bf16.mxu0 %v2564
      %2620 = vmatpush1.bf16.msra.mxu0 %v2563
      %2621 = vmatprep.subr.bf16.mxu0 %v2566
      %2622 = vmatpush1.bf16.msra.mxu0 %v2565
      %2623 = vmatprep.subr.bf16.mxu0 %v2617
      %2624 = vmatpush1.bf16.msra.mxu0 %v2614
      %2625 = vmatprep.subr.bf16.mxu0 0
      %2626 = vmatpush1.bf16.msra.mxu0 0
      %2627 = vmatprep.subr.bf16.mxu0 0
      %2628 = vmatpush1.bf16.msra.mxu0 0
      %2629 = vmatprep.subr.bf16.mxu0 0
      %2630 = vmatpush1.bf16.msra.mxu0 0
      %2631 = vmatprep.subr.bf16.mxu0 0
      %2632 = vmatpush1.bf16.msra.mxu0 0
      %2633 = vmatprep.subr.bf16.mxu0 0
      %2634 = vmatpush1.bf16.msra.mxu0 0
      %2635 = vmatprep.subr.bf16.mxu0 0
      %2636 = vmatpush1.bf16.msra.mxu0 0
      %2637 = vmatprep.subr.bf16.mxu0 0
      %2638 = vmatpush1.bf16.msra.mxu0 0
      %2639 = vmatprep.subr.bf16.mxu0 0
      %2640 = vmatpush1.bf16.msra.mxu0 0
      %2641 = vmatprep.subr.bf16.mxu0 0
      %2642 = vmatpush1.bf16.msra.mxu0 0
      %2643 = vmatprep.subr.bf16.mxu0 0
      %2644 = vmatpush1.bf16.msra.mxu0 0
      %2645 = vmatprep.subr.bf16.mxu0 0
      %2646 = vmatpush1.bf16.msra.mxu0 0
      %2647 = vmatprep.subr.bf16.mxu0 0
      %2648 = vmatpush1.bf16.msra.mxu0 0
      %2649 = vmatprep.subr.bf16.mxu0 0
      %2650 = vmatpush1.bf16.msra.mxu0 0
      %2651 = vmatprep.mubr.bf16.mxu0 0
      %2652 = vmatmul.mubr.bf16.gmra.mrb[0].mxu0 %v2608
      %v2653 = vpop.f32.mrb[0].mxu0
      %v2654 = vadd.f32 %v2580, %v2653
      %v2655 = vpop.f32.mrb[0].mxu0
      %v2656 = vadd.f32 %v2580, %v2655
      %v2657 = vpop.f32.mrb[0].mxu0
      %v2658 = vadd.f32 %v2585, %v2657
      %v2659 = vpop.f32.mrb[0].mxu0
      %v2660 = vadd.f32 %v2585, %v2659
      %2661 = vmatprep.mubr.bf16.mxu0 0
      %2662 = vmatmul.mubr.bf16.gmra.mrb[0].mxu0 %v2611
      %v2663 = vpop.f32.mrb[0].mxu0
      %v2664 = vadd.f32 %v2590, %v2663
      %v2665 = vpop.f32.mrb[0].mxu0
      %v2666 = vadd.f32 %v2590, %v2665
      %v2667 = vpop.f32.mrb[0].mxu0
      %v2668 = vadd.f32 %v2595, %v2667
      %v2669 = vpop.f32.mrb[0].mxu0
      %v2670 = vadd.f32 %v2595, %v2669
      %2671 = vdwg.mxu0
      %v2672 = vld [vmem:[%s3] sm:$0xff]
      %v2673 = vld [vmem:[%s3 + $0x8] sm:$0xff]
      %v2674 = vld [vmem:[%s3 + $0x10] sm:$0xff]
      %v2675 = vld [vmem:[%s3 + $0x18] sm:$0xff]
      %v2676 = vadd.f32 %v2654, %v2656
      %2677 = vadd.xlane.f32.xlu0 %v2676
      %v2678 = vpop.xlane.xlu0 %2677
      %v2679 = vadd.f32 %v2658, %v2660
      %2680 = vadd.xlane.f32.xlu0 %v2679
      %v2681 = vpop.xlane.xlu0 %2680
      %v2682 = vadd.f32 %v2664, %v2666
      %2683 = vadd.xlane.f32.xlu0 %v2682
      %v2684 = vpop.xlane.xlu0 %2683
      %v2685 = vadd.f32 %v2668, %v2670
      %2686 = vadd.xlane.f32.xlu0 %v2685
      %v2687 = vpop.xlane.xlu0 %2686
      %v2689 = vsel %vm1105, %v2672, 0
      %v2692 = vsel %vm1105, %v2673, 0
      %v2695 = vsel %vm1105, %v2674, 0
      %v2698 = vsel %vm1105, %v2675, 0
      %2700 = vmatprep.subr.mxu0 0.0
      %2701 = vmatpush1.msra.mxu0 %v2678
      %2702 = vmatprep.subr.mxu0 0.0
      %2703 = vmatpush1.msra.mxu0 %v2681
      %2704 = vmatprep.subr.mxu0 0.0
      %2705 = vmatpush1.msra.mxu0 %v2684
      %2706 = vmatprep.subr.mxu0 0.0
      %2707 = vmatpush1.msra.mxu0 %v2687
      %2708 = vmatprep.subr.mxu0 0.0
      %2709 = vmatpush1.msra.mxu0 0.0
      %2710 = vmatprep.subr.mxu0 0.0
      %2711 = vmatpush1.msra.mxu0 0.0
      %2712 = vmatprep.subr.mxu0 0.0
      %2713 = vmatpush1.msra.mxu0 0.0
      %2714 = vmatprep.subr.mxu0 0.0
      %2715 = vmatpush1.msra.mxu0 0.0
      %2716 = vmatprep.subr.mxu0 0.0
      %2717 = vmatpush1.msra.mxu0 0.0
      %2718 = vmatprep.subr.mxu0 0.0
      %2719 = vmatpush1.msra.mxu0 0.0
      %2720 = vmatprep.subr.mxu0 0.0
      %2721 = vmatpush1.msra.mxu0 0.0
      %2722 = vmatprep.subr.mxu0 0.0
      %2723 = vmatpush1.msra.mxu0 0.0
      %2724 = vmatprep.subr.mxu0 0.0
      %2725 = vmatpush1.msra.mxu0 0.0
      %2726 = vmatprep.subr.mxu0 0.0
      %2727 = vmatpush1.msra.mxu0 0.0
      %2728 = vmatprep.subr.mxu0 0.0
      %2729 = vmatpush1.msra.mxu0 0.0
      %2730 = vmatprep.subr.mxu0 0.0
      %2731 = vmatpush1.msra.mxu0 0.0
      %2732 = vmatprep.subr.mxu0 0.0
      %2733 = vmatpush1.msra.mxu0 0.0
      %2734 = vmatprep.subr.mxu0 0.0
      %2735 = vmatpush1.msra.mxu0 0.0
      %2736 = vmatprep.subr.mxu0 0.0
      %2737 = vmatpush1.msra.mxu0 0.0
      %2738 = vmatprep.subr.mxu0 0.0
      %2739 = vmatpush1.msra.mxu0 0.0
      %2740 = vmatprep.subr.mxu0 0.0
      %2741 = vmatpush1.msra.mxu0 0.0
      %2742 = vmatprep.subr.mxu0 0.0
      %2743 = vmatpush1.msra.mxu0 0.0
      %2744 = vmatprep.subr.mxu0 0.0
      %2745 = vmatpush1.msra.mxu0 0.0
      %2746 = vmatprep.subr.mxu0 0.0
      %2747 = vmatpush1.msra.mxu0 0.0
      %2748 = vmatprep.subr.mxu0 0.0
      %2749 = vmatpush1.msra.mxu0 0.0
      %2750 = vmatprep.subr.mxu0 0.0
      %2751 = vmatpush1.msra.mxu0 0.0
      %2752 = vmatprep.subr.mxu0 0.0
      %2753 = vmatpush1.msra.mxu0 0.0
      %2754 = vmatprep.subr.mxu0 0.0
      %2755 = vmatpush1.msra.mxu0 0.0
      %2756 = vmatprep.subr.mxu0 0.0
      %2757 = vmatpush1.msra.mxu0 0.0
      %2758 = vmatprep.subr.mxu0 0.0
      %2759 = vmatpush1.msra.mxu0 0.0
      %2760 = vmatprep.subr.mxu0 0.0
      %2761 = vmatpush1.msra.mxu0 0.0
      %2762 = vmatprep.subr.mxu0 0.0
      %2763 = vmatpush1.msra.mxu0 0.0
      %2764 = vmatprep.mubr.f32.mxu0 0.0
      %2765 = vmatmul.mubr.f32.gmra.mrb[0].mxu0 %v2689
      %v2766 = vpop.f32.mrb[0].mxu0
      %v2767 = vadd.f32 0.0, %v2766
      %v2768 = vpop.f32.mrb[0].mxu0
      %2769 = vmatprep.mubr.f32.mxu0 0.0
      %2770 = vmatmul.mubr.f32.gmra.mrb[0].mxu0 %v2692
      %v2771 = vpop.f32.mrb[0].mxu0
      %v2772 = vadd.f32 0.0, %v2771
      %v2773 = vpop.f32.mrb[0].mxu0
      %2774 = vmatprep.mubr.f32.mxu0 0.0
      %2775 = vmatmul.mubr.f32.gmra.mrb[0].mxu0 %v2695
      %v2776 = vpop.f32.mrb[0].mxu0
      %v2777 = vadd.f32 0.0, %v2776
      %v2778 = vpop.f32.mrb[0].mxu0
      %2779 = vmatprep.mubr.f32.mxu0 0.0
      %2780 = vmatmul.mubr.f32.gmra.mrb[0].mxu0 %v2698
      %v2781 = vpop.f32.mrb[0].mxu0
      %v2782 = vadd.f32 0.0, %v2781
      %v2783 = vpop.f32.mrb[0].mxu0
      %2784 = vdwg.mxu0
      %v2785 = vmul.f32 %v2767, %v1203
      %v2786 = vmul.f32 %v2772, %v1203
      %v2787 = vmul.f32 %v2777, %v1203
      %v2788 = vmul.f32 %v2782, %v1203
      %2790 = vset.pattern.permute.xlu0 0
      %2791 = vperm.xlu0 %2790, %v2785
      %v2792 = vpop.permute.xlu0 %2791
      %2795 = vset.pattern.permute.xlu0 0
      %2796 = vperm.xlu0 %2795, %v2786
      %v2797 = vpop.permute.xlu0 %2796
      %2800 = vset.pattern.permute.xlu0 0
      %2801 = vperm.xlu0 %2800, %v2787
      %v2802 = vpop.permute.xlu0 %2801
      %2805 = vset.pattern.permute.xlu0 0
      %2806 = vperm.xlu0 %2805, %v2788
      %v2807 = vpop.permute.xlu0 %2806
      %v2809 = vsub.f32 %v2654, %v2792
      %v2810 = vsub.f32 %v2656, %v2792
      %v2811 = vsub.f32 %v2658, %v2797
      %v2812 = vsub.f32 %v2660, %v2797
      %v2813 = vsub.f32 %v2664, %v2802
      %v2814 = vsub.f32 %v2666, %v2802
      %v2815 = vsub.f32 %v2668, %v2807
      %v2816 = vsub.f32 %v2670, %v2807
      %v2817 = vmul.f32 %v2809, %v2809
      %v2818 = vmul.f32 %v2810, %v2810
      %v2819 = vmul.f32 %v2811, %v2811
      %v2820 = vmul.f32 %v2812, %v2812
      %v2821 = vmul.f32 %v2813, %v2813
      %v2822 = vmul.f32 %v2814, %v2814
      %v2823 = vmul.f32 %v2815, %v2815
      %v2824 = vmul.f32 %v2816, %v2816
      %v2825 = vadd.f32 %v2817, %v2818
      %2826 = vadd.xlane.f32.xlu0 %v2825
      %v2827 = vpop.xlane.xlu0 %2826
      %v2828 = vadd.f32 %v2819, %v2820
      %2829 = vadd.xlane.f32.xlu0 %v2828
      %v2830 = vpop.xlane.xlu0 %2829
      %v2831 = vadd.f32 %v2821, %v2822
      %2832 = vadd.xlane.f32.xlu0 %v2831
      %v2833 = vpop.xlane.xlu0 %2832
      %v2834 = vadd.f32 %v2823, %v2824
      %2835 = vadd.xlane.f32.xlu0 %v2834
      %v2836 = vpop.xlane.xlu0 %2835
      %2837 = vmatprep.subr.mxu0 0.0
      %2838 = vmatpush1.msra.mxu0 %v2827
      %2839 = vmatprep.subr.mxu0 0.0
      %2840 = vmatpush1.msra.mxu0 %v2830
      %2841 = vmatprep.subr.mxu0 0.0
      %2842 = vmatpush1.msra.mxu0 %v2833
      %2843 = vmatprep.subr.mxu0 0.0
      %2844 = vmatpush1.msra.mxu0 %v2836
      %2845 = vmatprep.subr.mxu0 0.0
      %2846 = vmatpush1.msra.mxu0 0.0
      %2847 = vmatprep.subr.mxu0 0.0
      %2848 = vmatpush1.msra.mxu0 0.0
      %2849 = vmatprep.subr.mxu0 0.0
      %2850 = vmatpush1.msra.mxu0 0.0
      %2851 = vmatprep.subr.mxu0 0.0
      %2852 = vmatpush1.msra.mxu0 0.0
      %2853 = vmatprep.subr.mxu0 0.0
      %2854 = vmatpush1.msra.mxu0 0.0
      %2855 = vmatprep.subr.mxu0 0.0
      %2856 = vmatpush1.msra.mxu0 0.0
      %2857 = vmatprep.subr.mxu0 0.0
      %2858 = vmatpush1.msra.mxu0 0.0
      %2859 = vmatprep.subr.mxu0 0.0
      %2860 = vmatpush1.msra.mxu0 0.0
      %2861 = vmatprep.subr.mxu0 0.0
      %2862 = vmatpush1.msra.mxu0 0.0
      %2863 = vmatprep.subr.mxu0 0.0
      %2864 = vmatpush1.msra.mxu0 0.0
      %2865 = vmatprep.subr.mxu0 0.0
      %2866 = vmatpush1.msra.mxu0 0.0
      %2867 = vmatprep.subr.mxu0 0.0
      %2868 = vmatpush1.msra.mxu0 0.0
      %2869 = vmatprep.subr.mxu0 0.0
      %2870 = vmatpush1.msra.mxu0 0.0
      %2871 = vmatprep.subr.mxu0 0.0
      %2872 = vmatpush1.msra.mxu0 0.0
      %2873 = vmatprep.subr.mxu0 0.0
      %2874 = vmatpush1.msra.mxu0 0.0
      %2875 = vmatprep.subr.mxu0 0.0
      %2876 = vmatpush1.msra.mxu0 0.0
      %2877 = vmatprep.subr.mxu0 0.0
      %2878 = vmatpush1.msra.mxu0 0.0
      %2879 = vmatprep.subr.mxu0 0.0
      %2880 = vmatpush1.msra.mxu0 0.0
      %2881 = vmatprep.subr.mxu0 0.0
      %2882 = vmatpush1.msra.mxu0 0.0
      %2883 = vmatprep.subr.mxu0 0.0
      %2884 = vmatpush1.msra.mxu0 0.0
      %2885 = vmatprep.subr.mxu0 0.0
      %2886 = vmatpush1.msra.mxu0 0.0
      %2887 = vmatprep.subr.mxu0 0.0
      %2888 = vmatpush1.msra.mxu0 0.0
      %2889 = vmatprep.subr.mxu0 0.0
      %2890 = vmatpush1.msra.mxu0 0.0
      %2891 = vmatprep.subr.mxu0 0.0
      %2892 = vmatpush1.msra.mxu0 0.0
      %2893 = vmatprep.subr.mxu0 0.0
      %2894 = vmatpush1.msra.mxu0 0.0
      %2895 = vmatprep.subr.mxu0 0.0
      %2896 = vmatpush1.msra.mxu0 0.0
      %2897 = vmatprep.subr.mxu0 0.0
      %2898 = vmatpush1.msra.mxu0 0.0
      %2899 = vmatprep.subr.mxu0 0.0
      %2900 = vmatpush1.msra.mxu0 0.0
      %2901 = vmatprep.mubr.f32.mxu0 0.0
      %2902 = vmatmul.mubr.f32.gmra.mrb[0].mxu0 %v2689
      %v2903 = vpop.f32.mrb[0].mxu0
      %v2904 = vadd.f32 0.0, %v2903
      %v2905 = vpop.f32.mrb[0].mxu0
      %2906 = vmatprep.mubr.f32.mxu0 0.0
      %2907 = vmatmul.mubr.f32.gmra.mrb[0].mxu0 %v2692
      %v2908 = vpop.f32.mrb[0].mxu0
      %v2909 = vadd.f32 0.0, %v2908
      %v2910 = vpop.f32.mrb[0].mxu0
      %2911 = vmatprep.mubr.f32.mxu0 0.0
      %2912 = vmatmul.mubr.f32.gmra.mrb[0].mxu0 %v2695
      %v2913 = vpop.f32.mrb[0].mxu0
      %v2914 = vadd.f32 0.0, %v2913
      %v2915 = vpop.f32.mrb[0].mxu0
      %2916 = vmatprep.mubr.f32.mxu0 0.0
      %2917 = vmatmul.mubr.f32.gmra.mrb[0].mxu0 %v2698
      %v2918 = vpop.f32.mrb[0].mxu0
      %v2919 = vadd.f32 0.0, %v2918
      %v2920 = vpop.f32.mrb[0].mxu0
      %2921 = vdwg.mxu0
      %v2922 = vmul.f32 %v2904, %v1203
      %v2923 = vmul.f32 %v2909, %v1203
      %v2924 = vmul.f32 %v2914, %v1203
      %v2925 = vmul.f32 %v2919, %v1203
      %v2926 = vadd.f32 %v2922, 1e-05
      %v2927 = vadd.f32 %v2923, 1e-05
      %v2928 = vadd.f32 %v2924, 1e-05
      %v2929 = vadd.f32 %v2925, 1e-05
      %v2930 = vrsqrt.pop %v2926
      %v2931 = vrsqrt.pop %v2927
      %v2932 = vrsqrt.pop %v2928
      %v2933 = vrsqrt.pop %v2929
      %2935 = vset.pattern.permute.xlu0 0
      %2936 = vperm.xlu0 %2935, %v2930
      %v2937 = vpop.permute.xlu0 %2936
      %2940 = vset.pattern.permute.xlu0 0
      %2941 = vperm.xlu0 %2940, %v2931
      %v2942 = vpop.permute.xlu0 %2941
      %2945 = vset.pattern.permute.xlu0 0
      %2946 = vperm.xlu0 %2945, %v2932
      %v2947 = vpop.permute.xlu0 %2946
      %2950 = vset.pattern.permute.xlu0 0
      %2951 = vperm.xlu0 %2950, %v2933
      %v2952 = vpop.permute.xlu0 %2951
      %v2954 = vmul.f32 %v2809, %v2937
      %v2955 = vmul.f32 %v2810, %v2937
      %v2956 = vmul.f32 %v2811, %v2942
      %v2957 = vmul.f32 %v2812, %v2942
      %v2958 = vmul.f32 %v2813, %v2947
      %v2959 = vmul.f32 %v2814, %v2947
      %v2960 = vmul.f32 %v2815, %v2952
      %v2961 = vmul.f32 %v2816, %v2952
      %v2962 = vld [vmem:[%s18] sm:$0xff]
      %v2963 = vld [vmem:[%s18 + $0x8] sm:$0xff]
      %v2964 = vld [vmem:[%s18 + $0x10] sm:$0xff]
      %v2965 = vld [vmem:[%s18 + $0x18] sm:$0xff]
      %2967 = vset.pattern.permute.xlu0 0
      %2968 = vperm.xlu0 %2967, %v2962
      %v2969 = vpop.permute.xlu0 %2968
      %2972 = vset.pattern.permute.xlu0 0
      %2973 = vperm.xlu0 %2972, %v2963
      %v2974 = vpop.permute.xlu0 %2973
      %2977 = vset.pattern.permute.xlu0 0
      %2978 = vperm.xlu0 %2977, %v2964
      %v2979 = vpop.permute.xlu0 %2978
      %2982 = vset.pattern.permute.xlu0 0
      %2983 = vperm.xlu0 %2982, %v2965
      %v2984 = vpop.permute.xlu0 %2983
      %v2986 = vmul.f32 %v2954, %v2969
      %v2987 = vmul.f32 %v2955, %v2969
      %v2988 = vmul.f32 %v2956, %v2974
      %v2989 = vmul.f32 %v2957, %v2974
      %v2990 = vmul.f32 %v2958, %v2979
      %v2991 = vmul.f32 %v2959, %v2979
      %v2992 = vmul.f32 %v2960, %v2984
      %v2993 = vmul.f32 %v2961, %v2984
      %v2994 = vld [vmem:[%s19] sm:$0xff]
      %v2995 = vld [vmem:[%s19 + $0x8] sm:$0xff]
      %v2996 = vld [vmem:[%s19 + $0x10] sm:$0xff]
      %v2997 = vld [vmem:[%s19 + $0x18] sm:$0xff]
      %2999 = vset.pattern.permute.xlu0 0
      %3000 = vperm.xlu0 %2999, %v2994
      %v3001 = vpop.permute.xlu0 %3000
      %3004 = vset.pattern.permute.xlu0 0
      %3005 = vperm.xlu0 %3004, %v2995
      %v3006 = vpop.permute.xlu0 %3005
      %3009 = vset.pattern.permute.xlu0 0
      %3010 = vperm.xlu0 %3009, %v2996
      %v3011 = vpop.permute.xlu0 %3010
      %3014 = vset.pattern.permute.xlu0 0
      %3015 = vperm.xlu0 %3014, %v2997
      %v3016 = vpop.permute.xlu0 %3015
      %v3018 = vadd.f32 %v2986, %v3001
      %v3019 = vadd.f32 %v2987, %v3001
      %v3020 = vadd.f32 %v2988, %v3006
      %v3021 = vadd.f32 %v2989, %v3006
      %v3022 = vadd.f32 %v2990, %v3011
      %v3023 = vadd.f32 %v2991, %v3011
      %v3024 = vadd.f32 %v2992, %v3016
      %v3025 = vadd.f32 %v2993, %v3016
      %3026 = vrot.lane.b32.xlu0 %v3018, 17
      %v3027 = vpop.permute.xlu0 %3026
      %3028 = vrot.lane.b32.xlu0 %v3020, 17
      %v3029 = vpop.permute.xlu0 %3028
      %3030 = vrot.lane.b32.xlu0 %v3022, 17
      %v3031 = vpop.permute.xlu0 %3030
      %3032 = vrot.lane.b32.xlu0 %v3024, 17
      %v3033 = vpop.permute.xlu0 %3032
      %3034 = vrot.lane.b32.xlu0 %v3019, 17
      %v3035 = vpop.permute.xlu0 %3034
      %3036 = vrot.lane.b32.xlu0 %v3021, 17
      %v3037 = vpop.permute.xlu0 %3036
      %3038 = vrot.lane.b32.xlu0 %v3023, 17
      %v3039 = vpop.permute.xlu0 %3038
      %3040 = vrot.lane.b32.xlu0 %v3025, 17
      %v3041 = vpop.permute.xlu0 %3040
      %v3042 = vsel %vm774, %v3027, %v3035
      %v3043 = vsel %vm774, %v3029, %v3037
      %v3044 = vsel %vm774, %v3031, %v3039
      %v3045 = vsel %vm774, %v3033, %v3041
      %v3046 = vsel %vm774, %v3035, %v3027
      %v3047 = vsel %vm774, %v3037, %v3029
      %v3048 = vsel %vm774, %v3039, %v3031
      %v3049 = vsel %vm774, %v3041, %v3033
      %v3050 = vmul.f32 %v3046, %v780
      %v3051 = vmul.f32 %v3042, %v784
      %v3052 = vmul.f32 %v3047, %v780
      %v3053 = vmul.f32 %v3043, %v784
      %v3054 = vmul.f32 %v3048, %v780
      %v3055 = vmul.f32 %v3044, %v784
      %v3056 = vmul.f32 %v3049, %v780
      %v3057 = vmul.f32 %v3045, %v784
      %v3058 = vpack.c.bf16 %v3052, %v3050
      %v3059 = vpack.c.bf16 %v3053, %v3051
      %v3060 = vpack.c.bf16 %v3056, %v3054
      %v3061 = vpack.c.bf16 %v3057, %v3055
      %3062 = vst [vmem:[#allocation2] sm:$0xff] %v3058
      %3063 = vst [vmem:[#allocation2 + $0x8] sm:$0xff] %v3059
      %3064 = vst [vmem:[#allocation2 + $0x10] sm:$0xff] %v3060
      %3065 = vst [vmem:[#allocation2 + $0x18] sm:$0xff] %v3061
      %3066 = vrot.lane.b32.xlu0 %v3018, 16
      %v3067 = vpop.permute.xlu0 %3066
      %3068 = vrot.lane.b32.xlu0 %v3020, 16
      %v3069 = vpop.permute.xlu0 %3068
      %3070 = vrot.lane.b32.xlu0 %v3022, 16
      %v3071 = vpop.permute.xlu0 %3070
      %3072 = vrot.lane.b32.xlu0 %v3024, 16
      %v3073 = vpop.permute.xlu0 %3072
      %3074 = vrot.lane.b32.xlu0 %v3019, 16
      %v3075 = vpop.permute.xlu0 %3074
      %3076 = vrot.lane.b32.xlu0 %v3021, 16
      %v3077 = vpop.permute.xlu0 %3076
      %3078 = vrot.lane.b32.xlu0 %v3023, 16
      %v3079 = vpop.permute.xlu0 %3078
      %3080 = vrot.lane.b32.xlu0 %v3025, 16
      %v3081 = vpop.permute.xlu0 %3080
      %v3082 = vsel %vm795, %v3067, %v3075
      %v3083 = vsel %vm795, %v3069, %v3077
      %v3084 = vsel %vm795, %v3071, %v3079
      %v3085 = vsel %vm795, %v3073, %v3081
      %v3086 = vsel %vm795, %v3075, %v3067
      %v3087 = vsel %vm795, %v3077, %v3069
      %v3088 = vsel %vm795, %v3079, %v3071
      %v3089 = vsel %vm795, %v3081, %v3073
      %v3090 = vmul.f32 %v3086, %v801
      %v3091 = vmul.f32 %v3082, %v805
      %v3092 = vmul.f32 %v3087, %v801
      %v3093 = vmul.f32 %v3083, %v805
      %v3094 = vmul.f32 %v3088, %v801
      %v3095 = vmul.f32 %v3084, %v805
      %v3096 = vmul.f32 %v3089, %v801
      %v3097 = vmul.f32 %v3085, %v805
      %v3098 = vpack.c.bf16 %v3092, %v3090
      %v3099 = vpack.c.bf16 %v3093, %v3091
      %v3100 = vpack.c.bf16 %v3096, %v3094
      %v3101 = vpack.c.bf16 %v3097, %v3095
      %3102 = vst [vmem:[#allocation2 + $0x20] sm:$0xff] %v3098
      %3103 = vst [vmem:[#allocation2 + $0x28] sm:$0xff] %v3099
      %3104 = vst [vmem:[#allocation2 + $0x30] sm:$0xff] %v3100
      %3105 = vst [vmem:[#allocation2 + $0x38] sm:$0xff] %v3101
      %3106 = vrot.lane.b32.xlu0 %v3018, 15
      %v3107 = vpop.permute.xlu0 %3106
      %3108 = vrot.lane.b32.xlu0 %v3020, 15
      %v3109 = vpop.permute.xlu0 %3108
      %3110 = vrot.lane.b32.xlu0 %v3022, 15
      %v3111 = vpop.permute.xlu0 %3110
      %3112 = vrot.lane.b32.xlu0 %v3024, 15
      %v3113 = vpop.permute.xlu0 %3112
      %3114 = vrot.lane.b32.xlu0 %v3019, 15
      %v3115 = vpop.permute.xlu0 %3114
      %3116 = vrot.lane.b32.xlu0 %v3021, 15
      %v3117 = vpop.permute.xlu0 %3116
      %3118 = vrot.lane.b32.xlu0 %v3023, 15
      %v3119 = vpop.permute.xlu0 %3118
      %3120 = vrot.lane.b32.xlu0 %v3025, 15
      %v3121 = vpop.permute.xlu0 %3120
      %v3122 = vsel %vm822, %v3107, %v3115
      %v3123 = vsel %vm822, %v3109, %v3117
      %v3124 = vsel %vm822, %v3111, %v3119
      %v3125 = vsel %vm822, %v3113, %v3121
      %v3126 = vsel %vm822, %v3115, %v3107
      %v3127 = vsel %vm822, %v3117, %v3109
      %v3128 = vsel %vm822, %v3119, %v3111
      %v3129 = vsel %vm822, %v3121, %v3113
      %v3130 = vmul.f32 %v3126, %v828
      %v3131 = vmul.f32 %v3122, %v832
      %v3132 = vmul.f32 %v3127, %v828
      %v3133 = vmul.f32 %v3123, %v832
      %v3134 = vmul.f32 %v3128, %v828
      %v3135 = vmul.f32 %v3124, %v832
      %v3136 = vmul.f32 %v3129, %v828
      %v3137 = vmul.f32 %v3125, %v832
      %v3138 = vpack.c.bf16 %v3132, %v3130
      %v3139 = vpack.c.bf16 %v3133, %v3131
      %v3140 = vpack.c.bf16 %v3136, %v3134
      %v3141 = vpack.c.bf16 %v3137, %v3135
      %3142 = vst [vmem:[#allocation2 + $0x40] sm:$0xff] %v3138
      %3143 = vst [vmem:[#allocation2 + $0x48] sm:$0xff] %v3139
      %3144 = vst [vmem:[#allocation2 + $0x50] sm:$0xff] %v3140
      %3145 = vst [vmem:[#allocation2 + $0x58] sm:$0xff] %v3141
      %3146 = vrot.lane.b32.xlu0 %v3018, 1
      %v3147 = vpop.permute.xlu0 %3146
      %3148 = vrot.lane.b32.xlu0 %v3020, 1
      %v3149 = vpop.permute.xlu0 %3148
      %3150 = vrot.lane.b32.xlu0 %v3022, 1
      %v3151 = vpop.permute.xlu0 %3150
      %3152 = vrot.lane.b32.xlu0 %v3024, 1
      %v3153 = vpop.permute.xlu0 %3152
      %3154 = vrot.lane.b32.xlu0 %v3019, 1
      %v3155 = vpop.permute.xlu0 %3154
      %3156 = vrot.lane.b32.xlu0 %v3021, 1
      %v3157 = vpop.permute.xlu0 %3156
      %3158 = vrot.lane.b32.xlu0 %v3023, 1
      %v3159 = vpop.permute.xlu0 %3158
      %3160 = vrot.lane.b32.xlu0 %v3025, 1
      %v3161 = vpop.permute.xlu0 %3160
      %v3162 = vsel %vm849, %v3147, %v3155
      %v3163 = vsel %vm849, %v3149, %v3157
      %v3164 = vsel %vm849, %v3151, %v3159
      %v3165 = vsel %vm849, %v3153, %v3161
      %v3166 = vsel %vm849, %v3155, %v3147
      %v3167 = vsel %vm849, %v3157, %v3149
      %v3168 = vsel %vm849, %v3159, %v3151
      %v3169 = vsel %vm849, %v3161, %v3153
      %v3170 = vmul.f32 %v3166, %v855
      %v3171 = vmul.f32 %v3162, %v859
      %v3172 = vmul.f32 %v3167, %v855
      %v3173 = vmul.f32 %v3163, %v859
      %v3174 = vmul.f32 %v3168, %v855
      %v3175 = vmul.f32 %v3164, %v859
      %v3176 = vmul.f32 %v3169, %v855
      %v3177 = vmul.f32 %v3165, %v859
      %v3178 = vpack.c.bf16 %v3172, %v3170
      %v3179 = vpack.c.bf16 %v3173, %v3171
      %v3180 = vpack.c.bf16 %v3176, %v3174
      %v3181 = vpack.c.bf16 %v3177, %v3175
      %3182 = vst [vmem:[#allocation2 + $0x60] sm:$0xff] %v3178
      %3183 = vst [vmem:[#allocation2 + $0x68] sm:$0xff] %v3179
      %3184 = vst [vmem:[#allocation2 + $0x70] sm:$0xff] %v3180
      %3185 = vst [vmem:[#allocation2 + $0x78] sm:$0xff] %v3181
      %v3186 = vpack.c.bf16 %v3020, %v3018
      %v3187 = vpack.c.bf16 %v3021, %v3019
      %v3188 = vpack.c.bf16 %v3024, %v3022
      %v3189 = vpack.c.bf16 %v3025, %v3023
      %3190 = vst [vmem:[#allocation2 + $0x80] sm:$0xff] %v3186
      %3191 = vst [vmem:[#allocation2 + $0x88] sm:$0xff] %v3187
      %3192 = vst [vmem:[#allocation2 + $0x90] sm:$0xff] %v3188
      %3193 = vst [vmem:[#allocation2 + $0x98] sm:$0xff] %v3189
      %3194 = vrot.lane.b32.xlu0 %v3018, 127
      %v3195 = vpop.permute.xlu0 %3194
      %3196 = vrot.lane.b32.xlu0 %v3020, 127
      %v3197 = vpop.permute.xlu0 %3196
      %3198 = vrot.lane.b32.xlu0 %v3022, 127
      %v3199 = vpop.permute.xlu0 %3198
      %3200 = vrot.lane.b32.xlu0 %v3024, 127
      %v3201 = vpop.permute.xlu0 %3200
      %3202 = vrot.lane.b32.xlu0 %v3019, 127
      %v3203 = vpop.permute.xlu0 %3202
      %3204 = vrot.lane.b32.xlu0 %v3021, 127
      %v3205 = vpop.permute.xlu0 %3204
      %3206 = vrot.lane.b32.xlu0 %v3023, 127
      %v3207 = vpop.permute.xlu0 %3206
      %3208 = vrot.lane.b32.xlu0 %v3025, 127
      %v3209 = vpop.permute.xlu0 %3208
      %v3210 = vsel %vm880, %v3195, %v3203
      %v3211 = vsel %vm880, %v3197, %v3205
      %v3212 = vsel %vm880, %v3199, %v3207
      %v3213 = vsel %vm880, %v3201, %v3209
      %v3214 = vsel %vm880, %v3203, %v3195
      %v3215 = vsel %vm880, %v3205, %v3197
      %v3216 = vsel %vm880, %v3207, %v3199
      %v3217 = vsel %vm880, %v3209, %v3201
      %v3218 = vmul.f32 %v3210, %v886
      %v3219 = vmul.f32 %v3214, %v890
      %v3220 = vmul.f32 %v3211, %v886
      %v3221 = vmul.f32 %v3215, %v890
      %v3222 = vmul.f32 %v3212, %v886
      %v3223 = vmul.f32 %v3216, %v890
      %v3224 = vmul.f32 %v3213, %v886
      %v3225 = vmul.f32 %v3217, %v890
      %v3226 = vpack.c.bf16 %v3220, %v3218
      %v3227 = vpack.c.bf16 %v3221, %v3219
      %v3228 = vpack.c.bf16 %v3224, %v3222
      %v3229 = vpack.c.bf16 %v3225, %v3223
      %3230 = vst [vmem:[#allocation2 + $0xa0] sm:$0xff] %v3226
      %3231 = vst [vmem:[#allocation2 + $0xa8] sm:$0xff] %v3227
      %3232 = vst [vmem:[#allocation2 + $0xb0] sm:$0xff] %v3228
      %3233 = vst [vmem:[#allocation2 + $0xb8] sm:$0xff] %v3229
      %3234 = vrot.lane.b32.xlu0 %v3018, 113
      %v3235 = vpop.permute.xlu0 %3234
      %3236 = vrot.lane.b32.xlu0 %v3020, 113
      %v3237 = vpop.permute.xlu0 %3236
      %3238 = vrot.lane.b32.xlu0 %v3022, 113
      %v3239 = vpop.permute.xlu0 %3238
      %3240 = vrot.lane.b32.xlu0 %v3024, 113
      %v3241 = vpop.permute.xlu0 %3240
      %3242 = vrot.lane.b32.xlu0 %v3019, 113
      %v3243 = vpop.permute.xlu0 %3242
      %3244 = vrot.lane.b32.xlu0 %v3021, 113
      %v3245 = vpop.permute.xlu0 %3244
      %3246 = vrot.lane.b32.xlu0 %v3023, 113
      %v3247 = vpop.permute.xlu0 %3246
      %3248 = vrot.lane.b32.xlu0 %v3025, 113
      %v3249 = vpop.permute.xlu0 %3248
      %v3250 = vsel %vm907, %v3235, %v3243
      %v3251 = vsel %vm907, %v3237, %v3245
      %v3252 = vsel %vm907, %v3239, %v3247
      %v3253 = vsel %vm907, %v3241, %v3249
      %v3254 = vsel %vm907, %v3243, %v3235
      %v3255 = vsel %vm907, %v3245, %v3237
      %v3256 = vsel %vm907, %v3247, %v3239
      %v3257 = vsel %vm907, %v3249, %v3241
      %v3258 = vmul.f32 %v3250, %v913
      %v3259 = vmul.f32 %v3254, %v917
      %v3260 = vmul.f32 %v3251, %v913
      %v3261 = vmul.f32 %v3255, %v917
      %v3262 = vmul.f32 %v3252, %v913
      %v3263 = vmul.f32 %v3256, %v917
      %v3264 = vmul.f32 %v3253, %v913
      %v3265 = vmul.f32 %v3257, %v917
      %v3266 = vpack.c.bf16 %v3260, %v3258
      %v3267 = vpack.c.bf16 %v3261, %v3259
      %v3268 = vpack.c.bf16 %v3264, %v3262
      %v3269 = vpack.c.bf16 %v3265, %v3263
      %3270 = vst [vmem:[#allocation2 + $0xc0] sm:$0xff] %v3266
      %3271 = vst [vmem:[#allocation2 + $0xc8] sm:$0xff] %v3267
      %3272 = vst [vmem:[#allocation2 + $0xd0] sm:$0xff] %v3268
      %3273 = vst [vmem:[#allocation2 + $0xd8] sm:$0xff] %v3269
      %3274 = vrot.lane.b32.xlu0 %v3018, 112
      %v3275 = vpop.permute.xlu0 %3274
      %3276 = vrot.lane.b32.xlu0 %v3020, 112
      %v3277 = vpop.permute.xlu0 %3276
      %3278 = vrot.lane.b32.xlu0 %v3022, 112
      %v3279 = vpop.permute.xlu0 %3278
      %3280 = vrot.lane.b32.xlu0 %v3024, 112
      %v3281 = vpop.permute.xlu0 %3280
      %3282 = vrot.lane.b32.xlu0 %v3019, 112
      %v3283 = vpop.permute.xlu0 %3282
      %3284 = vrot.lane.b32.xlu0 %v3021, 112
      %v3285 = vpop.permute.xlu0 %3284
      %3286 = vrot.lane.b32.xlu0 %v3023, 112
      %v3287 = vpop.permute.xlu0 %3286
      %3288 = vrot.lane.b32.xlu0 %v3025, 112
      %v3289 = vpop.permute.xlu0 %3288
      %v3290 = vsel %vm934, %v3275, %v3283
      %v3291 = vsel %vm934, %v3277, %v3285
      %v3292 = vsel %vm934, %v3279, %v3287
      %v3293 = vsel %vm934, %v3281, %v3289
      %v3294 = vsel %vm934, %v3283, %v3275
      %v3295 = vsel %vm934, %v3285, %v3277
      %v3296 = vsel %vm934, %v3287, %v3279
      %v3297 = vsel %vm934, %v3289, %v3281
      %v3298 = vmul.f32 %v3290, %v940
      %v3299 = vmul.f32 %v3294, %v944
      %v3300 = vmul.f32 %v3291, %v940
      %v3301 = vmul.f32 %v3295, %v944
      %v3302 = vmul.f32 %v3292, %v940
      %v3303 = vmul.f32 %v3296, %v944
      %v3304 = vmul.f32 %v3293, %v940
      %v3305 = vmul.f32 %v3297, %v944
      %v3306 = vpack.c.bf16 %v3300, %v3298
      %v3307 = vpack.c.bf16 %v3301, %v3299
      %v3308 = vpack.c.bf16 %v3304, %v3302
      %v3309 = vpack.c.bf16 %v3305, %v3303
      %3310 = vst [vmem:[#allocation2 + $0xe0] sm:$0xff] %v3306
      %3311 = vst [vmem:[#allocation2 + $0xe8] sm:$0xff] %v3307
      %3312 = vst [vmem:[#allocation2 + $0xf0] sm:$0xff] %v3308
      %3313 = vst [vmem:[#allocation2 + $0xf8] sm:$0xff] %v3309
      %3314 = vrot.lane.b32.xlu0 %v3018, 111
      %v3315 = vpop.permute.xlu0 %3314
      %3316 = vrot.lane.b32.xlu0 %v3020, 111
      %v3317 = vpop.permute.xlu0 %3316
      %3318 = vrot.lane.b32.xlu0 %v3022, 111
      %v3319 = vpop.permute.xlu0 %3318
      %3320 = vrot.lane.b32.xlu0 %v3024, 111
      %v3321 = vpop.permute.xlu0 %3320
      %3322 = vrot.lane.b32.xlu0 %v3019, 111
      %v3323 = vpop.permute.xlu0 %3322
      %3324 = vrot.lane.b32.xlu0 %v3021, 111
      %v3325 = vpop.permute.xlu0 %3324
      %3326 = vrot.lane.b32.xlu0 %v3023, 111
      %v3327 = vpop.permute.xlu0 %3326
      %3328 = vrot.lane.b32.xlu0 %v3025, 111
      %v3329 = vpop.permute.xlu0 %3328
      %v3330 = vsel %vm961, %v3315, %v3323
      %v3331 = vsel %vm961, %v3317, %v3325
      %v3332 = vsel %vm961, %v3319, %v3327
      %v3333 = vsel %vm961, %v3321, %v3329
      %v3334 = vsel %vm961, %v3323, %v3315
      %v3335 = vsel %vm961, %v3325, %v3317
      %v3336 = vsel %vm961, %v3327, %v3319
      %v3337 = vsel %vm961, %v3329, %v3321
      %v3338 = vmul.f32 %v3330, %v967
      %v3339 = vmul.f32 %v3334, %v971
      %v3340 = vmul.f32 %v3331, %v967
      %v3341 = vmul.f32 %v3335, %v971
      %v3342 = vmul.f32 %v3332, %v967
      %v3343 = vmul.f32 %v3336, %v971
      %v3344 = vmul.f32 %v3333, %v967
      %v3345 = vmul.f32 %v3337, %v971
      %v3346 = vpack.c.bf16 %v3340, %v3338
      %v3347 = vpack.c.bf16 %v3341, %v3339
      %v3348 = vpack.c.bf16 %v3344, %v3342
      %v3349 = vpack.c.bf16 %v3345, %v3343
      %3350 = vst [vmem:[#allocation2 + $0x100] sm:$0xff] %v3346
      %3351 = vst [vmem:[#allocation2 + $0x108] sm:$0xff] %v3347
      %3352 = vst [vmem:[#allocation2 + $0x110] sm:$0xff] %v3348
      %3353 = vst [vmem:[#allocation2 + $0x118] sm:$0xff] %v3349
      %v3354 = vld [vmem:[#allocation2] sm:$0xff]
      %v3355 = vld [vmem:[#allocation2 + $0x8] sm:$0xff]
      %v3356 = vld [vmem:[#allocation2 + $0x10] sm:$0xff]
      %v3357 = vld [vmem:[#allocation2 + $0x18] sm:$0xff]
      %v3358 = vld [vmem:[#allocation2 + $0x20] sm:$0xff]
      %v3359 = vld [vmem:[#allocation2 + $0x28] sm:$0xff]
      %v3360 = vld [vmem:[#allocation2 + $0x30] sm:$0xff]
      %v3361 = vld [vmem:[#allocation2 + $0x38] sm:$0xff]
      %v3362 = vld [vmem:[#allocation2 + $0x40] sm:$0xff]
      %v3363 = vld [vmem:[#allocation2 + $0x48] sm:$0xff]
      %v3364 = vld [vmem:[#allocation2 + $0x50] sm:$0xff]
      %v3365 = vld [vmem:[#allocation2 + $0x58] sm:$0xff]
      %v3366 = vld [vmem:[#allocation2 + $0x60] sm:$0xff]
      %v3367 = vld [vmem:[#allocation2 + $0x68] sm:$0xff]
      %v3368 = vld [vmem:[#allocation2 + $0x70] sm:$0xff]
      %v3369 = vld [vmem:[#allocation2 + $0x78] sm:$0xff]
      %v3370 = vld [vmem:[#allocation2 + $0x80] sm:$0xff]
      %v3371 = vld [vmem:[#allocation2 + $0x88] sm:$0xff]
      %v3372 = vld [vmem:[#allocation2 + $0x90] sm:$0xff]
      %v3373 = vld [vmem:[#allocation2 + $0x98] sm:$0xff]
      %v3374 = vld [vmem:[#allocation2 + $0xa0] sm:$0xff]
      %v3375 = vld [vmem:[#allocation2 + $0xa8] sm:$0xff]
      %v3376 = vld [vmem:[#allocation2 + $0xb0] sm:$0xff]
      %v3377 = vld [vmem:[#allocation2 + $0xb8] sm:$0xff]
      %v3378 = vld [vmem:[#allocation2 + $0xc0] sm:$0xff]
      %v3379 = vld [vmem:[#allocation2 + $0xc8] sm:$0xff]
      %v3380 = vld [vmem:[#allocation2 + $0xd0] sm:$0xff]
      %v3381 = vld [vmem:[#allocation2 + $0xd8] sm:$0xff]
      %v3382 = vld [vmem:[#allocation2 + $0xe0] sm:$0xff]
      %v3383 = vld [vmem:[#allocation2 + $0xe8] sm:$0xff]
      %v3384 = vld [vmem:[#allocation2 + $0xf0] sm:$0xff]
      %v3385 = vld [vmem:[#allocation2 + $0xf8] sm:$0xff]
      %v3386 = vld [vmem:[#allocation2 + $0x100] sm:$0xff]
      %v3387 = vld [vmem:[#allocation2 + $0x108] sm:$0xff]
      %v3388 = vld [vmem:[#allocation2 + $0x110] sm:$0xff]
      %v3389 = vld [vmem:[#allocation2 + $0x118] sm:$0xff]
      %v3390 = vld [vmem:[%s20] sm:$0x3f]
      %v3391 = vld [vmem:[%s21] sm:$0xf]
      %3393 = vset.pattern.permute.xlu0 0
      %3394 = vperm.xlu0 %3393, %v3391
      %v3395 = vpop.permute.xlu0 %3394
      %v3398 = vcombine.high %v3390, %v3390
      %v3400 = vunpack.c.l.s4 1983009808
      %v3401 = vunpack.c.0.s8 %v3400
      %v3402 = vlaneseq
      %v3403 = vshrl.u32 %v3402, 7
      %v3404 = vsub.s32 %v3401, %v3403
      %v3405 = vrot.slane %v3390, %v3404
      %v3407 = vunpack.c.l.s4 1983009808
      %v3408 = vunpack.c.0.s8 %v3407
      %v3409 = vlaneseq
      %v3410 = vshrl.u32 %v3409, 7
      %v3411 = vsub.s32 %v3408, %v3410
      %v3412 = vrot.slane %v3398, %v3411
      %v3413 = vcombine.high %v3405, %v3405
      %v3417 = vsel %vm1105, %v3412, 0
      %3419 = vmatprep.subr.bf16.mxu0 %v3355
      %3420 = vmatpush1.bf16.msra.mxu0 %v3354
      %3421 = vmatprep.subr.bf16.mxu0 %v3357
      %3422 = vmatpush1.bf16.msra.mxu0 %v3356
      %3423 = vmatprep.subr.bf16.mxu0 %v3359
      %3424 = vmatpush1.bf16.msra.mxu0 %v3358
      %3425 = vmatprep.subr.bf16.mxu0 %v3361
      %3426 = vmatpush1.bf16.msra.mxu0 %v3360
      %3427 = vmatprep.subr.bf16.mxu0 %v3363
      %3428 = vmatpush1.bf16.msra.mxu0 %v3362
      %3429 = vmatprep.subr.bf16.mxu0 %v3365
      %3430 = vmatpush1.bf16.msra.mxu0 %v3364
      %3431 = vmatprep.subr.bf16.mxu0 %v3367
      %3432 = vmatpush1.bf16.msra.mxu0 %v3366
      %3433 = vmatprep.subr.bf16.mxu0 %v3369
      %3434 = vmatpush1.bf16.msra.mxu0 %v3368
      %3435 = vmatprep.subr.bf16.mxu0 %v3371
      %3436 = vmatpush1.bf16.msra.mxu0 %v3370
      %3437 = vmatprep.subr.bf16.mxu0 %v3373
      %3438 = vmatpush1.bf16.msra.mxu0 %v3372
      %3439 = vmatprep.subr.bf16.mxu0 %v3375
      %3440 = vmatpush1.bf16.msra.mxu0 %v3374
      %3441 = vmatprep.subr.bf16.mxu0 %v3377
      %3442 = vmatpush1.bf16.msra.mxu0 %v3376
      %3443 = vmatprep.subr.bf16.mxu0 %v3379
      %3444 = vmatpush1.bf16.msra.mxu0 %v3378
      %3445 = vmatprep.subr.bf16.mxu0 %v3381
      %3446 = vmatpush1.bf16.msra.mxu0 %v3380
      %3447 = vmatprep.subr.bf16.mxu0 %v3383
      %3448 = vmatpush1.bf16.msra.mxu0 %v3382
      %3449 = vmatprep.subr.bf16.mxu0 %v3385
      %3450 = vmatpush1.bf16.msra.mxu0 %v3384
      %3451 = vmatprep.mubr.bf16.mxu0 %v3413
      %3452 = vmatmul.mubr.bf16.gmra.mrb[0].mxu0 %v3405
      %v3453 = vpop.f32.mrb[0].mxu0
      %v3454 = vadd.f32 %v3395, %v3453
      %v3455 = vpop.f32.mrb[0].mxu0
      %v3456 = vadd.f32 %v3395, %v3455
      %v3457 = vpop.f32.mrb[0].mxu0
      %v3458 = vpop.f32.mrb[0].mxu0
      %3459 = vdwg.mxu0
      %3460 = vmatprep.subr.bf16.mxu0 %v3387
      %3461 = vmatpush1.bf16.msra.mxu0 %v3386
      %3462 = vmatprep.subr.bf16.mxu0 %v3389
      %3463 = vmatpush1.bf16.msra.mxu0 %v3388
      %3464 = vmatprep.subr.bf16.mxu0 0
      %3465 = vmatpush1.bf16.msra.mxu0 0
      %3466 = vmatprep.subr.bf16.mxu0 0
      %3467 = vmatpush1.bf16.msra.mxu0 0
      %3468 = vmatprep.subr.bf16.mxu0 0
      %3469 = vmatpush1.bf16.msra.mxu0 0
      %3470 = vmatprep.subr.bf16.mxu0 0
      %3471 = vmatpush1.bf16.msra.mxu0 0
      %3472 = vmatprep.subr.bf16.mxu0 0
      %3473 = vmatpush1.bf16.msra.mxu0 0
      %3474 = vmatprep.subr.bf16.mxu0 0
      %3475 = vmatpush1.bf16.msra.mxu0 0
      %3476 = vmatprep.subr.bf16.mxu0 0
      %3477 = vmatpush1.bf16.msra.mxu0 0
      %3478 = vmatprep.subr.bf16.mxu0 0
      %3479 = vmatpush1.bf16.msra.mxu0 0
      %3480 = vmatprep.subr.bf16.mxu0 0
      %3481 = vmatpush1.bf16.msra.mxu0 0
      %3482 = vmatprep.subr.bf16.mxu0 0
      %3483 = vmatpush1.bf16.msra.mxu0 0
      %3484 = vmatprep.subr.bf16.mxu0 0
      %3485 = vmatpush1.bf16.msra.mxu0 0
      %3486 = vmatprep.subr.bf16.mxu0 0
      %3487 = vmatpush1.bf16.msra.mxu0 0
      %3488 = vmatprep.subr.bf16.mxu0 0
      %3489 = vmatpush1.bf16.msra.mxu0 0
      %3490 = vmatprep.subr.bf16.mxu0 0
      %3491 = vmatpush1.bf16.msra.mxu0 0
      %3492 = vmatprep.mubr.bf16.mxu0 0
      %3493 = vmatmul.mubr.bf16.gmra.mrb[0].mxu0 %v3417
      %v3494 = vpop.f32.mrb[0].mxu0
      %v3495 = vadd.f32 %v3454, %v3494
      %v3496 = vpop.f32.mrb[0].mxu0
      %v3497 = vadd.f32 %v3456, %v3496
      %v3498 = vpop.f32.mrb[0].mxu0
      %v3499 = vpop.f32.mrb[0].mxu0
      %3500 = vdwg.mxu0
      %v3503 = vcombine.low %v3495, %v3497
      %3505 = vst [vmem:[%s750] sm:$0xff] %v3503
      %p3506 = scmp.lt.s32.totalorder %s36, 1
      %s3507 = scalar_select %p3506, %s36, 1
      %s3508 = smul.addr %s3507, 2
      %s3509 = smul.addr %s3508, 4
      %s3510 = scalar_lea.vmem %s22, %s3509
      %p3511 = scmp.lt.s32.totalorder %s36, 1
      %s3512 = scalar_select %p3511, %s36, 1
      %s3513 = smul.addr %s3512, 2
      %s3514 = smul.addr %s3513, 4
      %s3515 = scalar_lea.vmem %s23, %s3514
      %p3516 = scmp.lt.s32.totalorder %s36, 1
      %s3517 = scalar_select %p3516, %s36, 1
      %s3518 = scalar_lea.vmem %s24, %s3517
      // Predicated region
      $region109: #{_lambda_.1} parent=107 // pred_check
        %p3519 = pneg %p521
      $region110: #{_lambda_.1} parent=107 // pred_check_branch
        %3521 = sbr.rel (%p3519) target = $region112
      $region111: #{_lambda_.1} parent=107 // pred_region
        _
      $region112: #{_lambda_.1} parent=107 // pred_fallthru
        _
      // Predicated region
      $region113: #{_lambda_.1} parent=107 // pred_check
        %p3522 = pneg %p547
      $region114: #{_lambda_.1} parent=107 // pred_check_branch
        %3524 = sbr.rel (%p3522) target = $region116
      $region115: #{_lambda_.1} parent=107 // pred_region
        _
      $region116: #{_lambda_.1} parent=107 // pred_fallthru
        _
      // Predicated region
      $region117: #{_lambda_.1} parent=107 // pred_check
        %p3525 = pneg %p573
      $region118: #{_lambda_.1} parent=107 // pred_check_branch
        %3527 = sbr.rel (%p3525) target = $region120
      $region119: #{_lambda_.1} parent=107 // pred_region
        _
      $region120: #{_lambda_.1} parent=107 // pred_fallthru
        _
    $region108: #{_lambda_.1} parent=5 // pred_fallthru
      _
    %p3528 = scmp.le.s32.totalorder 2, %s31
    // Predicated region
    $region121: #{_lambda_.1} parent=5 // pred_check
      %p3529 = pneg %p3528
    $region122: #{_lambda_.1} parent=5 // pred_check_branch
      %3531 = sbr.rel (%p3529) target = $region124
    $region123: #{_lambda_.1} parent=5 // pred_region
      %s3532 = ssub.s32 %s31, 2
      // Predicated region
      $region125: #{_lambda_.1} parent=123 // pred_check
        %p3533 = pneg %p527
      $region126: #{_lambda_.1} parent=123 // pred_check_branch
        %3535 = sbr.rel (%p3533) target = $region128
      $region127: #{_lambda_.1} parent=123 // pred_region
        %p3536 = scmp.lt.s32.totalorder %s37, 1
        %s3537 = scalar_select %p3536, %s37, 1
        %s3538 = smul.addr %s3537, 2
        %s3539 = smul.addr %s3538, 4
        %s3540 = scalar_lea.vmem %s22, %s3539
      $region128: #{_lambda_.1} parent=123 // pred_fallthru
        _
      // Predicated region
      $region129: #{_lambda_.1} parent=123 // pred_check
        %p3541 = pneg %p553
      $region130: #{_lambda_.1} parent=123 // pred_check_branch
        %3543 = sbr.rel (%p3541) target = $region132
      $region131: #{_lambda_.1} parent=123 // pred_region
        %p3544 = scmp.lt.s32.totalorder %s37, 1
        %s3545 = scalar_select %p3544, %s37, 1
        %s3546 = smul.addr %s3545, 2
        %s3547 = smul.addr %s3546, 4
        %s3548 = scalar_lea.vmem %s23, %s3547
      $region132: #{_lambda_.1} parent=123 // pred_fallthru
        _
      // Predicated region
      $region133: #{_lambda_.1} parent=123 // pred_check
        %p3549 = pneg %p579
      $region134: #{_lambda_.1} parent=123 // pred_check_branch
        %3551 = sbr.rel (%p3549) target = $region136
      $region135: #{_lambda_.1} parent=123 // pred_region
        %p3552 = scmp.lt.s32.totalorder %s37, 1
        %s3553 = scalar_select %p3552, %s37, 1
        %s3554 = scalar_lea.vmem %s24, %s3553
      $region136: #{_lambda_.1} parent=123 // pred_fallthru
        _
    $region124: #{_lambda_.1} parent=5 // pred_fallthru
      _
  $region6: #{_lambda_.1} parent=0 // loop_footer
    %s35 = sadd.s32 1, %s31
  $region7: #{_lambda_.1} parent=0 // loop_footer_branch
    %30 = sbr.rel target = $region3
  $region8: #{_lambda_.1} parent=0 // loop_exit
    _

</llo_original>
